<compile_context>
chip_gen: v7x
topology: tpu7x:2x2x1
jax: 0.10.0
libtpu: 0.0.40
codegen_flags: <defaults>
</compile_context>

<pallas_src>
import math
import functools

import jax
import jax.numpy as jnp
from jax.experimental import pallas as pl
from jax.experimental.pallas import tpu as pltpu


# ----------------------------------------------------------------------------
# Kernel (one batch element per grid step)
# ----------------------------------------------------------------------------
def _decoder_layer_kernel(
    tgt_ref,        # (1, T, D)   f32
    enc_ref,        # (1, S, D)   f32
    tpad_ref,       # (1, 1, T)   f32, 1.0 = valid key
    epad_ref,       # (1, 1, S)   f32
    sa_wqkv_ref,    # (D, 3D)     bf16  fused Q|K|V (Q cols pre-scaled 1/sqrt(dh))
    sa_bqkv_ref,    # (1, 3D)     f32   (Q slice pre-scaled)
    sa_wo_ref,      # (D, D)      bf16
    sa_bo_ref,      # (1, D)      f32
    ca_wq_ref,      # (D, D)      bf16  (pre-scaled)
    ca_bq_ref,      # (1, D)      f32   (pre-scaled)
    ca_wkv_ref,     # (D, 2D)     bf16  fused K|V
    ca_bkv_ref,     # (1, 2D)     f32
    ca_wo_ref,      # (D, D)      bf16
    ca_bo_ref,      # (1, D)      f32
    norm_w_ref,     # (3, 2, D)   f32   [sattn/cattn/ffw][gamma, beta]
    w1_ref,         # (D, F) bf16
    b1_ref,         # (1, F) f32
    w2_ref,         # (F, D) bf16
    b2_ref,         # (1, D) f32
    out_ref,        # (1, T, D)
    *,
    num_heads: int,
    head_dim: int,
    norm_eps: float,
    tgt_is_causal: bool,
):
    H, dh = num_heads, head_dim
    T = tgt_ref.shape[1]
    S = enc_ref.shape[1]
    D = tgt_ref.shape[2]
    bf16 = jnp.bfloat16
    f32 = jnp.float32

    def layer_norm(v, idx):                       # v: (N, D) f32
        gamma = norm_w_ref[idx, 0]                # (D,)
        beta = norm_w_ref[idx, 1]                 # (D,)
        mu = jnp.mean(v, axis=-1, keepdims=True)
        var = jnp.mean((v - mu) ** 2, axis=-1, keepdims=True)
        return (v - mu) * jax.lax.rsqrt(var + norm_eps) * gamma[None, :] + beta[None, :]

    def split_heads(y2d):
        # (N, D) bf16 -> (H, N, dh): lane slices + stack along a new major axis
        # (avoids a (N,H,dh)->(H,N,dh) transpose).
        return jnp.stack([y2d[:, h * dh:(h + 1) * dh] for h in range(H)], axis=0)

    def merge_heads(ctx):
        # (H, N, dh) f32 -> (N, H*dh) = (N, D): lane concat of per-head contexts.
        return jnp.concatenate([ctx[h] for h in range(H)], axis=-1)

    def attention(q, k, v, bias):
        # q: (H, Tq, dh) bf16, k/v: (H, Tk, dh) bf16, bias: (Tq, Tk) additive f32
        s = jnp.einsum("hqc,hkc->hqk", q, k,
                       preferred_element_type=f32)                  # (H, Tq, Tk)
        s = s + bias[None]
        # fp32 softmax (max-subtraction + approx reciprocal on the EUP).
        # NOTE: fully-masked rows give a uniform distribution over keys
        # (additive -1e9 masking), not NaN as torch float('-inf') would.
        m = jnp.max(s, axis=-1, keepdims=True)
        e = jnp.exp(s - m)
        p = e * pl.reciprocal(jnp.sum(e, axis=-1, keepdims=True), approx=True)
        return jnp.einsum("hqk,hkc->hqc", p.astype(bf16), v,
                          preferred_element_type=f32)               # (H, Tq, dh)

    x = tgt_ref[0].astype(f32)                    # (T, D)
    enc = enc_ref[0].astype(f32)                  # (S, D)

    # ---- masks rebuilt in-kernel (no dense [T,T]/[T,S] DMA); built once ----
    tkeep = jnp.broadcast_to(tpad_ref[0] > 0.0, (T, T))              # (T, T)
    if tgt_is_causal:
        q_idx = jax.lax.broadcasted_iota(jnp.int32, (T, T), 0)
        k_idx = jax.lax.broadcasted_iota(jnp.int32, (T, T), 1)
        tkeep = jnp.logical_and(tkeep, k_idx <= q_idx)
    sa_bias = jnp.where(tkeep, 0.0, -1e9).astype(f32)                # (T, T)

    ekeep = jnp.broadcast_to(epad_ref[0] > 0.0, (T, S))              # (T, S)
    ca_bias = jnp.where(ekeep, 0.0, -1e9).astype(f32)                # (T, S)

    # ---- self-attention block (pre-norm, dropout = identity) ---------------
    residual = x
    hn = layer_norm(x, 0)
    qkv = jnp.dot(hn.astype(bf16), sa_wqkv_ref[...],
                  preferred_element_type=f32)                         # (T, 3D)
    qkv = (qkv + sa_bqkv_ref[...]).astype(bf16)
    q = split_heads(qkv[:, :D])                   # 1/sqrt(dh) already folded in
    k = split_heads(qkv[:, D:2 * D])
    v = split_heads(qkv[:, 2 * D:])
    ctx2d = merge_heads(attention(q, k, v, sa_bias)).astype(bf16)     # (T, D)
    x = (jnp.dot(ctx2d, sa_wo_ref[...], preferred_element_type=f32)
         + sa_bo_ref[...] + residual)

    # ---- cross-attention block ----------------------------------------------
    residual = x
    hn = layer_norm(x, 1)
    q2 = jnp.dot(hn.astype(bf16), ca_wq_ref[...],
                 preferred_element_type=f32)                          # (T, D)
    q2 = (q2 + ca_bq_ref[...]).astype(bf16)
    kv = jnp.dot(enc.astype(bf16), ca_wkv_ref[...],
                 preferred_element_type=f32)                          # (S, 2D)
    kv = (kv + ca_bkv_ref[...]).astype(bf16)
    q = split_heads(q2)
    k = split_heads(kv[:, :D])
    v = split_heads(kv[:, D:])
    ctx2d = merge_heads(attention(q, k, v, ca_bias)).astype(bf16)     # (T, D)
    x = (jnp.dot(ctx2d, ca_wo_ref[...], preferred_element_type=f32)
         + ca_bo_ref[...] + residual)

    # ---- position-wise feed-forward block (relu) ----------------------------
    residual = x
    hn = layer_norm(x, 2)
    f = jnp.dot(hn.astype(bf16), w1_ref[...],
                preferred_element_type=f32) + b1_ref[...]
    f = jnp.maximum(f, 0.0)
    f = jnp.dot(f.astype(bf16), w2_ref[...],
                preferred_element_type=f32) + b2_ref[...]
    x = f + residual

    out_ref[0] = x.astype(out_ref.dtype)


# ----------------------------------------------------------------------------
# Parameter packing: (D_in, D_out) "x @ W" layout -> MXU-friendly kernel layout
# NOTE: real PyTorch Linear state_dicts store (D_out, D_in) and need a
#       transpose before calling pack_params; the synthetic init below already
#       uses the (D_in, D_out) convention.
# ----------------------------------------------------------------------------
def pack_params(params, num_heads):
    D, F = params["w1"].shape
    dh = D // num_heads
    scale = 1.0 / math.sqrt(dh)
    bf16 = jnp.bfloat16

    packed = {}
    for i, prefix in enumerate(("sa", "ca")):
        wq, wk, wv, wo = (params["attn_w"][i, j] for j in range(4))
        bq, bk, bv, bo = (params["attn_b"][i, j] for j in range(4))
        wq = wq * scale            # fold 1/sqrt(dh) into Q projection ...
        bq = bq * scale            # ... and its bias (score scaling equivalent)
        if prefix == "sa":
            packed["sa_wqkv"] = jnp.concatenate([wq, wk, wv], axis=-1).astype(bf16)
            packed["sa_bqkv"] = jnp.concatenate([bq, bk, bv], axis=-1)[None, :].astype(jnp.float32)
        else:
            packed["ca_wq"] = wq.astype(bf16)
            packed["ca_bq"] = bq[None, :].astype(jnp.float32)
            packed["ca_wkv"] = jnp.concatenate([wk, wv], axis=-1).astype(bf16)
            packed["ca_bkv"] = jnp.concatenate([bk, bv], axis=-1)[None, :].astype(jnp.float32)
        packed[prefix + "_wo"] = wo.astype(bf16)                      # (D, D)
        packed[prefix + "_bo"] = bo[None, :].astype(jnp.float32)      # (1, D)
    packed["norm_w"] = params["norm_w"].astype(jnp.float32)
    packed["w1"] = params["w1"].astype(bf16)
    packed["b1"] = params["b1"].astype(jnp.float32)
    packed["w2"] = params["w2"].astype(bf16)
    packed["b2"] = params["b2"].astype(jnp.float32)
    return packed


# ----------------------------------------------------------------------------
# Wrapper
# ----------------------------------------------------------------------------
def transformer_decoder_layer(
    tgt_feature, enc_feature, params, *,
    num_heads, norm_eps=1e-5,
    tgt_is_causal=False,
    tgt_key_padding_mask=None, enc_key_padding_mask=None,
):
    B, T, D = tgt_feature.shape
    _, S, _ = enc_feature.shape
    assert D % num_heads == 0
    H = num_heads
    dh = D // H
    F = params["w1"].shape[1]

    if tgt_key_padding_mask is None:
        tgt_key_padding_mask = jnp.ones((B, T), jnp.float32)
    if enc_key_padding_mask is None:
        enc_key_padding_mask = jnp.ones((B, S), jnp.float32)
    tpad = tgt_key_padding_mask.astype(jnp.float32).reshape(B, 1, T)
    epad = enc_key_padding_mask.astype(jnp.float32).reshape(B, 1, S)

    pk = pack_params(params, num_heads)

    kernel = functools.partial(
        _decoder_layer_kernel,
        num_heads=H, head_dim=dh, norm_eps=norm_eps,
        tgt_is_causal=tgt_is_causal,
    )

    def resident(shape):
        # Whole-array, grid-invariant spec -> weights stay VMEM-resident.
        return pl.BlockSpec(shape, lambda b: (0,) * len(shape))

    return pl.pallas_call(
        kernel,
        out_shape=jax.ShapeDtypeStruct((B, T, D), tgt_feature.dtype),
        grid_spec=pltpu.PrefetchScalarGridSpec(
            num_scalar_prefetch=0,
            grid=(B,),                                        # one batch row / step
            in_specs=[
                pl.BlockSpec((1, T, D), lambda b: (b, 0, 0)),   # tgt
                pl.BlockSpec((1, S, D), lambda b: (b, 0, 0)),   # enc
                pl.BlockSpec((1, 1, T), lambda b: (b, 0, 0)),   # tgt key padding
                pl.BlockSpec((1, 1, S), lambda b: (b, 0, 0)),   # enc key padding
                resident((D, 3 * D)),                           # sa fused QKV
                resident((1, 3 * D)),
                resident((D, D)),                               # sa out proj
                resident((1, D)),
                resident((D, D)),                               # ca Q
                resident((1, D)),
                resident((D, 2 * D)),                           # ca fused KV
                resident((1, 2 * D)),
                resident((D, D)),                               # ca out proj
                resident((1, D)),
                resident((3, 2, D)),                            # norms
                resident((D, F)),                               # ffw
                resident((1, F)),
                resident((F, D)),
                resident((1, D)),
            ],
            out_specs=pl.BlockSpec((1, T, D), lambda b: (b, 0, 0)),
        ),
        compiler_params=pltpu.CompilerParams(
            dimension_semantics=("parallel",),        # v7x: batch sharded on 2 TCs
            vmem_limit_bytes=48 * 1024 * 1024,        # headroom on v7x (64 MiB phys)
        ),
    )(
        tgt_feature, enc_feature, tpad, epad,
        pk["sa_wqkv"], pk["sa_bqkv"], pk["sa_wo"], pk["sa_bo"],
        pk["ca_wq"], pk["ca_bq"], pk["ca_wkv"], pk["ca_bkv"],
        pk["ca_wo"], pk["ca_bo"],
        pk["norm_w"], pk["w1"], pk["b1"], pk["w2"], pk["b2"],
    )


# ----------------------------------------------------------------------------
# Deterministic parameter initialization (synthetic; mirrors __init__ shapes)
# ----------------------------------------------------------------------------
def init_params(key, dim_model, dim_ffw):
    ks = jax.random.split(key, 6)
    std = 0.02
    attn_w = jax.random.normal(ks[0], (2, 4, dim_model, dim_model), jnp.float32) * std
    attn_b = jax.random.normal(ks[1], (2, 4, dim_model), jnp.float32) * std
    norm_w = jnp.stack(
        [jnp.stack([jnp.ones((dim_model,), jnp.float32),
                    jnp.zeros((dim_model,), jnp.float32)])] * 3
    )
    w1 = jax.random.normal(ks[2], (dim_model, dim_ffw), jnp.float32) * std
    b1 = jax.random.normal(ks[3], (1, dim_ffw), jnp.float32) * std
    w2 = jax.random.normal(ks[4], (dim_ffw, dim_model), jnp.float32) * std
    b2 = jax.random.normal(ks[5], (1, dim_model), jnp.float32) * std
    return dict(attn_w=attn_w, attn_b=attn_b, norm_w=norm_w,
                w1=w1, b1=b1, w2=w2, b2=b2)


# ----------------------------------------------------------------------------
if __name__ == "__main__":
    B, T, S = 2, 8, 16          # batch, target length, source length
    D, H, F = 32, 4, 64         # dim_model, num_heads, dim_ffw

    key = jax.random.PRNGKey(0)
    k_tgt, k_enc, k_params = jax.random.split(key, 3)
    tgt = jax.random.normal(k_tgt, (B, T, D), jnp.float32)
    enc = jax.random.normal(k_enc, (B, S, D), jnp.float32)
    params = init_params(k_params, D, F)

    out = transformer_decoder_layer(
        tgt, enc, params,
        num_heads=H, norm_eps=1e-5,
        tgt_is_causal=True,      # causal self-attention, as the decoder uses
    )
    out = jax.block_until_ready(out)

    assert out.shape == (B, T, D)
    assert bool(jnp.all(jnp.isfinite(out)))
    print("KERNEL_OK")
</pallas_src>

<mosaic_0001>
module attributes {stable_mosaic.version = 11 : i64} {
  func.func @_decoder_layer_kernel(%arg0: i32, %arg1: memref<1x8x32xf32, #tpu.memory_space<vmem>>, %arg2: memref<1x16x32xf32, #tpu.memory_space<vmem>>, %arg3: memref<1x1x8xf32, #tpu.memory_space<vmem>>, %arg4: memref<1x1x16xf32, #tpu.memory_space<vmem>>, %arg5: memref<32x96xbf16, #tpu.memory_space<vmem>>, %arg6: memref<1x96xf32, #tpu.memory_space<vmem>>, %arg7: memref<32x32xbf16, #tpu.memory_space<vmem>>, %arg8: memref<1x32xf32, #tpu.memory_space<vmem>>, %arg9: memref<32x32xbf16, #tpu.memory_space<vmem>>, %arg10: memref<1x32xf32, #tpu.memory_space<vmem>>, %arg11: memref<32x64xbf16, #tpu.memory_space<vmem>>, %arg12: memref<1x64xf32, #tpu.memory_space<vmem>>, %arg13: memref<32x32xbf16, #tpu.memory_space<vmem>>, %arg14: memref<1x32xf32, #tpu.memory_space<vmem>>, %arg15: memref<3x2x32xf32, #tpu.memory_space<vmem>>, %arg16: memref<32x64xbf16, #tpu.memory_space<vmem>>, %arg17: memref<1x64xf32, #tpu.memory_space<vmem>>, %arg18: memref<64x32xbf16, #tpu.memory_space<vmem>>, %arg19: memref<1x32xf32, #tpu.memory_space<vmem>>, %arg20: memref<1x8x32xf32, #tpu.memory_space<vmem>>) attributes {dimension_semantics = [#tpu.dimension_semantics<parallel>], iteration_bounds = array<i64: 2>, scalar_prefetch = 0 : i64, scratch_operands = 0 : i64, tpu.core_type = #tpu.core_type<tc>, window_params = [{transform_indices = @transform_0, window_bounds = array<i64: 1, 8, 32>}, {transform_indices = @transform_1, window_bounds = array<i64: 1, 16, 32>}, {transform_indices = @transform_2, window_bounds = array<i64: 1, 1, 8>}, {transform_indices = @transform_3, window_bounds = array<i64: 1, 1, 16>}, {pipeline_mode = #tpu.pipeline_mode<synchronous>, transform_indices = @transform_4, window_bounds = array<i64: 32, 96>}, {pipeline_mode = #tpu.pipeline_mode<synchronous>, transform_indices = @transform_5, window_bounds = array<i64: 1, 96>}, {pipeline_mode = #tpu.pipeline_mode<synchronous>, transform_indices = @transform_6, window_bounds = array<i64: 32, 32>}, {pipeline_mode = #tpu.pipeline_mode<synchronous>, transform_indices = @transform_7, window_bounds = array<i64: 1, 32>}, {pipeline_mode = #tpu.pipeline_mode<synchronous>, transform_indices = @transform_8, window_bounds = array<i64: 32, 32>}, {pipeline_mode = #tpu.pipeline_mode<synchronous>, transform_indices = @transform_9, window_bounds = array<i64: 1, 32>}, {pipeline_mode = #tpu.pipeline_mode<synchronous>, transform_indices = @transform_10, window_bounds = array<i64: 32, 64>}, {pipeline_mode = #tpu.pipeline_mode<synchronous>, transform_indices = @transform_11, window_bounds = array<i64: 1, 64>}, {pipeline_mode = #tpu.pipeline_mode<synchronous>, transform_indices = @transform_12, window_bounds = array<i64: 32, 32>}, {pipeline_mode = #tpu.pipeline_mode<synchronous>, transform_indices = @transform_13, window_bounds = array<i64: 1, 32>}, {pipeline_mode = #tpu.pipeline_mode<synchronous>, transform_indices = @transform_14, window_bounds = array<i64: 3, 2, 32>}, {pipeline_mode = #tpu.pipeline_mode<synchronous>, transform_indices = @transform_15, window_bounds = array<i64: 32, 64>}, {pipeline_mode = #tpu.pipeline_mode<synchronous>, transform_indices = @transform_16, window_bounds = array<i64: 1, 64>}, {pipeline_mode = #tpu.pipeline_mode<synchronous>, transform_indices = @transform_17, window_bounds = array<i64: 64, 32>}, {pipeline_mode = #tpu.pipeline_mode<synchronous>, transform_indices = @transform_18, window_bounds = array<i64: 1, 32>}, {transform_indices = @transform_19, window_bounds = array<i64: 1, 8, 32>}]} {
    %c0 = arith.constant 0 : index
    %c0_0 = arith.constant 0 : index
    %c0_1 = arith.constant 0 : index
    %0 = vector.load %arg1[%c0, %c0_0, %c0_1] : memref<1x8x32xf32, #tpu.memory_space<vmem>>, vector<1x8x32xf32>
    %1 = vector.shape_cast %0 : vector<1x8x32xf32> to vector<8x32xf32>
    %c0_2 = arith.constant 0 : index
    %c0_3 = arith.constant 0 : index
    %c0_4 = arith.constant 0 : index
    %2 = vector.load %arg2[%c0_2, %c0_3, %c0_4] : memref<1x16x32xf32, #tpu.memory_space<vmem>>, vector<1x16x32xf32>
    %3 = vector.shape_cast %2 : vector<1x16x32xf32> to vector<16x32xf32>
    %c0_5 = arith.constant 0 : index
    %c0_6 = arith.constant 0 : index
    %c0_7 = arith.constant 0 : index
    %4 = vector.load %arg3[%c0_5, %c0_6, %c0_7] : memref<1x1x8xf32, #tpu.memory_space<vmem>>, vector<1x1x8xf32>
    %5 = vector.shape_cast %4 : vector<1x1x8xf32> to vector<1x8xf32>
    %cst = arith.constant 0.000000e+00 : f32
    %6 = vector.broadcast %cst : f32 to vector<1x8xf32>
    %7 = arith.cmpf ogt, %5, %6 : vector<1x8xf32>
    %8 = vector.shape_cast %7 : vector<1x8xi1> to vector<1x8xi1>
    %9 = vector.broadcast %8 : vector<1x8xi1> to vector<8x8xi1>
    %10 = tpu.iota {dimensions = array<i32: 0>} : vector<8x8xi32>
    %11 = tpu.iota {dimensions = array<i32: 1>} : vector<8x8xi32>
    %12 = arith.cmpi sle, %11, %10 : vector<8x8xi32>
    %13 = arith.andi %9, %12 : vector<8x8xi1>
    %cst_8 = arith.constant 0.000000e+00 : f32
    %cst_9 = arith.constant -1.000000e+09 : f32
    %14 = vector.broadcast %cst_8 : f32 to vector<8x8xf32>
    %15 = vector.broadcast %cst_9 : f32 to vector<8x8xf32>
    %16 = arith.select %13, %14, %15 : vector<8x8xi1>, vector<8x8xf32>
    %c0_10 = arith.constant 0 : index
    %c0_11 = arith.constant 0 : index
    %c0_12 = arith.constant 0 : index
    %17 = vector.load %arg4[%c0_10, %c0_11, %c0_12] : memref<1x1x16xf32, #tpu.memory_space<vmem>>, vector<1x1x16xf32>
    %18 = vector.shape_cast %17 : vector<1x1x16xf32> to vector<1x16xf32>
    %cst_13 = arith.constant 0.000000e+00 : f32
    %19 = vector.broadcast %cst_13 : f32 to vector<1x16xf32>
    %20 = arith.cmpf ogt, %18, %19 : vector<1x16xf32>
    %21 = vector.shape_cast %20 : vector<1x16xi1> to vector<1x16xi1>
    %22 = vector.broadcast %21 : vector<1x16xi1> to vector<8x16xi1>
    %cst_14 = arith.constant 0.000000e+00 : f32
    %cst_15 = arith.constant -1.000000e+09 : f32
    %23 = vector.broadcast %cst_14 : f32 to vector<8x16xf32>
    %24 = vector.broadcast %cst_15 : f32 to vector<8x16xf32>
    %25 = arith.select %22, %23, %24 : vector<8x16xi1>, vector<8x16xf32>
    %c0_16 = arith.constant 0 : index
    %c0_17 = arith.constant 0 : index
    %c0_18 = arith.constant 0 : index
    %26 = vector.load %arg15[%c0_16, %c0_17, %c0_18] : memref<3x2x32xf32, #tpu.memory_space<vmem>>, vector<1x1x32xf32>
    %27 = vector.shape_cast %26 : vector<1x1x32xf32> to vector<32xf32>
    %c0_19 = arith.constant 0 : index
    %c1 = arith.constant 1 : index
    %c0_20 = arith.constant 0 : index
    %28 = vector.load %arg15[%c0_19, %c1, %c0_20] : memref<3x2x32xf32, #tpu.memory_space<vmem>>, vector<1x1x32xf32>
    %29 = vector.shape_cast %28 : vector<1x1x32xf32> to vector<32xf32>
    %cst_21 = arith.constant dense<0.000000e+00> : vector<8xf32>
    %30 = vector.multi_reduction <add>, %1, %cst_21 [1] : vector<8x32xf32> to vector<8xf32>
    %31 = vector.shape_cast %30 : vector<8xf32> to vector<8x1xf32>
    %cst_22 = arith.constant 3.200000e+01 : f32
    %32 = vector.broadcast %cst_22 : f32 to vector<8x1xf32>
    %33 = arith.divf %31, %32 : vector<8x1xf32>
    %34 = vector.broadcast %33 : vector<8x1xf32> to vector<8x32xf32>
    %35 = arith.subf %1, %34 : vector<8x32xf32>
    %36 = arith.mulf %35, %35 : vector<8x32xf32>
    %cst_23 = arith.constant dense<0.000000e+00> : vector<8xf32>
    %37 = vector.multi_reduction <add>, %36, %cst_23 [1] : vector<8x32xf32> to vector<8xf32>
    %38 = vector.shape_cast %37 : vector<8xf32> to vector<8x1xf32>
    %cst_24 = arith.constant 3.200000e+01 : f32
    %39 = vector.broadcast %cst_24 : f32 to vector<8x1xf32>
    %40 = arith.divf %38, %39 : vector<8x1xf32>
    %41 = vector.broadcast %33 : vector<8x1xf32> to vector<8x32xf32>
    %42 = arith.subf %1, %41 : vector<8x32xf32>
    %cst_25 = arith.constant 9.99999974E-6 : f32
    %43 = vector.broadcast %cst_25 : f32 to vector<8x1xf32>
    %44 = arith.addf %40, %43 : vector<8x1xf32>
    %45 = math.rsqrt %44 : vector<8x1xf32>
    %46 = vector.broadcast %45 : vector<8x1xf32> to vector<8x32xf32>
    %47 = arith.mulf %42, %46 : vector<8x32xf32>
    %48 = vector.shape_cast %27 : vector<32xf32> to vector<1x32xf32>
    %49 = vector.broadcast %48 : vector<1x32xf32> to vector<8x32xf32>
    %50 = arith.mulf %47, %49 : vector<8x32xf32>
    %51 = vector.shape_cast %29 : vector<32xf32> to vector<1x32xf32>
    %52 = vector.broadcast %51 : vector<1x32xf32> to vector<8x32xf32>
    %53 = arith.addf %50, %52 : vector<8x32xf32>
    %54 = arith.truncf %53 : vector<8x32xf32> to vector<8x32xbf16>
    %c0_26 = arith.constant 0 : index
    %c0_27 = arith.constant 0 : index
    %55 = vector.load %arg5[%c0_26, %c0_27] : memref<32x96xbf16, #tpu.memory_space<vmem>>, vector<32x96xbf16>
    %cst_28 = arith.constant dense<0.000000e+00> : vector<8x96xf32>
    %56 = tpu.matmul %54, %55, %cst_28 {dimension_numbers = #tpu.dot_dimension_numbers<[1], [0], [0], [1], [0, 0, 1, 1], [], []>} : vector<8x32xbf16>, vector<32x96xbf16>, vector<8x96xf32> -> vector<8x96xf32>
    %c0_29 = arith.constant 0 : index
    %c0_30 = arith.constant 0 : index
    %57 = vector.load %arg6[%c0_29, %c0_30] : memref<1x96xf32, #tpu.memory_space<vmem>>, vector<1x96xf32>
    %58 = vector.broadcast %57 : vector<1x96xf32> to vector<8x96xf32>
    %59 = arith.addf %56, %58 : vector<8x96xf32>
    %60 = arith.truncf %59 : vector<8x96xf32> to vector<8x96xbf16>
    %61 = vector.extract_strided_slice %60 {offsets = [0, 0], sizes = [8, 32], strides = [1, 1]} : vector<8x96xbf16> to vector<8x32xbf16>
    %62 = vector.extract_strided_slice %61 {offsets = [0, 0], sizes = [8, 8], strides = [1, 1]} : vector<8x32xbf16> to vector<8x8xbf16>
    %63 = vector.extract_strided_slice %61 {offsets = [0, 8], sizes = [8, 8], strides = [1, 1]} : vector<8x32xbf16> to vector<8x8xbf16>
    %64 = vector.extract_strided_slice %61 {offsets = [0, 16], sizes = [8, 8], strides = [1, 1]} : vector<8x32xbf16> to vector<8x8xbf16>
    %65 = vector.extract_strided_slice %61 {offsets = [0, 24], sizes = [8, 8], strides = [1, 1]} : vector<8x32xbf16> to vector<8x8xbf16>
    %66 = vector.shape_cast %62 : vector<8x8xbf16> to vector<1x8x8xbf16>
    %67 = vector.shape_cast %63 : vector<8x8xbf16> to vector<1x8x8xbf16>
    %68 = vector.shape_cast %64 : vector<8x8xbf16> to vector<1x8x8xbf16>
    %69 = vector.shape_cast %65 : vector<8x8xbf16> to vector<1x8x8xbf16>
    %70 = tpu.concatenate %66, %67, %68, %69 in 0 : vector<1x8x8xbf16>, vector<1x8x8xbf16>, vector<1x8x8xbf16>, vector<1x8x8xbf16> -> vector<4x8x8xbf16>
    %71 = vector.extract_strided_slice %60 {offsets = [0, 32], sizes = [8, 32], strides = [1, 1]} : vector<8x96xbf16> to vector<8x32xbf16>
    %72 = vector.extract_strided_slice %71 {offsets = [0, 0], sizes = [8, 8], strides = [1, 1]} : vector<8x32xbf16> to vector<8x8xbf16>
    %73 = vector.extract_strided_slice %71 {offsets = [0, 8], sizes = [8, 8], strides = [1, 1]} : vector<8x32xbf16> to vector<8x8xbf16>
    %74 = vector.extract_strided_slice %71 {offsets = [0, 16], sizes = [8, 8], strides = [1, 1]} : vector<8x32xbf16> to vector<8x8xbf16>
    %75 = vector.extract_strided_slice %71 {offsets = [0, 24], sizes = [8, 8], strides = [1, 1]} : vector<8x32xbf16> to vector<8x8xbf16>
    %76 = vector.shape_cast %72 : vector<8x8xbf16> to vector<1x8x8xbf16>
    %77 = vector.shape_cast %73 : vector<8x8xbf16> to vector<1x8x8xbf16>
    %78 = vector.shape_cast %74 : vector<8x8xbf16> to vector<1x8x8xbf16>
    %79 = vector.shape_cast %75 : vector<8x8xbf16> to vector<1x8x8xbf16>
    %80 = tpu.concatenate %76, %77, %78, %79 in 0 : vector<1x8x8xbf16>, vector<1x8x8xbf16>, vector<1x8x8xbf16>, vector<1x8x8xbf16> -> vector<4x8x8xbf16>
    %81 = vector.extract_strided_slice %60 {offsets = [0, 64], sizes = [8, 32], strides = [1, 1]} : vector<8x96xbf16> to vector<8x32xbf16>
    %82 = vector.extract_strided_slice %81 {offsets = [0, 0], sizes = [8, 8], strides = [1, 1]} : vector<8x32xbf16> to vector<8x8xbf16>
    %83 = vector.extract_strided_slice %81 {offsets = [0, 8], sizes = [8, 8], strides = [1, 1]} : vector<8x32xbf16> to vector<8x8xbf16>
    %84 = vector.extract_strided_slice %81 {offsets = [0, 16], sizes = [8, 8], strides = [1, 1]} : vector<8x32xbf16> to vector<8x8xbf16>
    %85 = vector.extract_strided_slice %81 {offsets = [0, 24], sizes = [8, 8], strides = [1, 1]} : vector<8x32xbf16> to vector<8x8xbf16>
    %86 = vector.shape_cast %82 : vector<8x8xbf16> to vector<1x8x8xbf16>
    %87 = vector.shape_cast %83 : vector<8x8xbf16> to vector<1x8x8xbf16>
    %88 = vector.shape_cast %84 : vector<8x8xbf16> to vector<1x8x8xbf16>
    %89 = vector.shape_cast %85 : vector<8x8xbf16> to vector<1x8x8xbf16>
    %90 = tpu.concatenate %86, %87, %88, %89 in 0 : vector<1x8x8xbf16>, vector<1x8x8xbf16>, vector<1x8x8xbf16>, vector<1x8x8xbf16> -> vector<4x8x8xbf16>
    "tpu.trace_start"() <{level = 10 : i32, message = "hqc,hkc->hqk"}> : () -> ()
    %cst_31 = arith.constant dense<0.000000e+00> : vector<4x8x8xf32>
    %91 = tpu.matmul %70, %80, %cst_31 {dimension_numbers = #tpu.dot_dimension_numbers<[2], [2], [1], [1], [0, 0, 0, 1, 1, 1], [0], [0]>} : vector<4x8x8xbf16>, vector<4x8x8xbf16>, vector<4x8x8xf32> -> vector<4x8x8xf32>
    "tpu.trace_stop"() : () -> ()
    %92 = vector.shape_cast %16 : vector<8x8xf32> to vector<1x8x8xf32>
    %93 = vector.broadcast %92 : vector<1x8x8xf32> to vector<4x8x8xf32>
    %94 = arith.addf %91, %93 : vector<4x8x8xf32>
    %cst_32 = arith.constant dense<0xFF800000> : vector<4x8xf32>
    %95 = vector.multi_reduction <maximumf>, %94, %cst_32 [2] : vector<4x8x8xf32> to vector<4x8xf32>
    %96 = vector.shape_cast %95 : vector<4x8xf32> to vector<4x8x1xf32>
    %97 = vector.broadcast %96 : vector<4x8x1xf32> to vector<4x8x8xf32>
    %98 = arith.subf %94, %97 : vector<4x8x8xf32>
    %99 = math.exp %98 : vector<4x8x8xf32>
    %cst_33 = arith.constant dense<0.000000e+00> : vector<4x8xf32>
    %100 = vector.multi_reduction <add>, %99, %cst_33 [2] : vector<4x8x8xf32> to vector<4x8xf32>
    %101 = vector.shape_cast %100 : vector<4x8xf32> to vector<4x8x1xf32>
    %102 = tpu.reciprocal %101 {approx = true} : vector<4x8x1xf32> -> vector<4x8x1xf32>
    %103 = vector.broadcast %102 : vector<4x8x1xf32> to vector<4x8x8xf32>
    %104 = arith.mulf %99, %103 : vector<4x8x8xf32>
    %105 = arith.truncf %104 : vector<4x8x8xf32> to vector<4x8x8xbf16>
    "tpu.trace_start"() <{level = 10 : i32, message = "hqk,hkc->hqc"}> : () -> ()
    %cst_34 = arith.constant dense<0.000000e+00> : vector<4x8x8xf32>
    %106 = tpu.matmul %105, %90, %cst_34 {dimension_numbers = #tpu.dot_dimension_numbers<[2], [1], [1], [2], [0, 0, 0, 1, 1, 2], [0], [0]>} : vector<4x8x8xbf16>, vector<4x8x8xbf16>, vector<4x8x8xf32> -> vector<4x8x8xf32>
    "tpu.trace_stop"() : () -> ()
    %107 = vector.extract_strided_slice %106 {offsets = [0, 0, 0], sizes = [1, 8, 8], strides = [1, 1, 1]} : vector<4x8x8xf32> to vector<1x8x8xf32>
    %108 = vector.shape_cast %107 : vector<1x8x8xf32> to vector<8x8xf32>
    %109 = vector.extract_strided_slice %106 {offsets = [1, 0, 0], sizes = [1, 8, 8], strides = [1, 1, 1]} : vector<4x8x8xf32> to vector<1x8x8xf32>
    %110 = vector.shape_cast %109 : vector<1x8x8xf32> to vector<8x8xf32>
    %111 = vector.extract_strided_slice %106 {offsets = [2, 0, 0], sizes = [1, 8, 8], strides = [1, 1, 1]} : vector<4x8x8xf32> to vector<1x8x8xf32>
    %112 = vector.shape_cast %111 : vector<1x8x8xf32> to vector<8x8xf32>
    %113 = vector.extract_strided_slice %106 {offsets = [3, 0, 0], sizes = [1, 8, 8], strides = [1, 1, 1]} : vector<4x8x8xf32> to vector<1x8x8xf32>
    %114 = vector.shape_cast %113 : vector<1x8x8xf32> to vector<8x8xf32>
    %115 = tpu.concatenate %108, %110, %112, %114 in 1 : vector<8x8xf32>, vector<8x8xf32>, vector<8x8xf32>, vector<8x8xf32> -> vector<8x32xf32>
    %116 = arith.truncf %115 : vector<8x32xf32> to vector<8x32xbf16>
    %c0_35 = arith.constant 0 : index
    %c0_36 = arith.constant 0 : index
    %117 = vector.load %arg7[%c0_35, %c0_36] : memref<32x32xbf16, #tpu.memory_space<vmem>>, vector<32x32xbf16>
    %cst_37 = arith.constant dense<0.000000e+00> : vector<8x32xf32>
    %118 = tpu.matmul %116, %117, %cst_37 {dimension_numbers = #tpu.dot_dimension_numbers<[1], [0], [0], [1], [0, 0, 1, 1], [], []>} : vector<8x32xbf16>, vector<32x32xbf16>, vector<8x32xf32> -> vector<8x32xf32>
    %c0_38 = arith.constant 0 : index
    %c0_39 = arith.constant 0 : index
    %119 = vector.load %arg8[%c0_38, %c0_39] : memref<1x32xf32, #tpu.memory_space<vmem>>, vector<1x32xf32>
    %120 = vector.broadcast %119 : vector<1x32xf32> to vector<8x32xf32>
    %121 = arith.addf %118, %120 : vector<8x32xf32>
    %122 = arith.addf %121, %1 : vector<8x32xf32>
    %c1_40 = arith.constant 1 : index
    %c0_41 = arith.constant 0 : index
    %c0_42 = arith.constant 0 : index
    %123 = vector.load %arg15[%c1_40, %c0_41, %c0_42] : memref<3x2x32xf32, #tpu.memory_space<vmem>>, vector<1x1x32xf32>
    %124 = vector.shape_cast %123 : vector<1x1x32xf32> to vector<32xf32>
    %c1_43 = arith.constant 1 : index
    %c1_44 = arith.constant 1 : index
    %c0_45 = arith.constant 0 : index
    %125 = vector.load %arg15[%c1_43, %c1_44, %c0_45] : memref<3x2x32xf32, #tpu.memory_space<vmem>>, vector<1x1x32xf32>
    %126 = vector.shape_cast %125 : vector<1x1x32xf32> to vector<32xf32>
    %cst_46 = arith.constant dense<0.000000e+00> : vector<8xf32>
    %127 = vector.multi_reduction <add>, %122, %cst_46 [1] : vector<8x32xf32> to vector<8xf32>
    %128 = vector.shape_cast %127 : vector<8xf32> to vector<8x1xf32>
    %cst_47 = arith.constant 3.200000e+01 : f32
    %129 = vector.broadcast %cst_47 : f32 to vector<8x1xf32>
    %130 = arith.divf %128, %129 : vector<8x1xf32>
    %131 = vector.broadcast %130 : vector<8x1xf32> to vector<8x32xf32>
    %132 = arith.subf %122, %131 : vector<8x32xf32>
    %133 = arith.mulf %132, %132 : vector<8x32xf32>
    %cst_48 = arith.constant dense<0.000000e+00> : vector<8xf32>
    %134 = vector.multi_reduction <add>, %133, %cst_48 [1] : vector<8x32xf32> to vector<8xf32>
    %135 = vector.shape_cast %134 : vector<8xf32> to vector<8x1xf32>
    %cst_49 = arith.constant 3.200000e+01 : f32
    %136 = vector.broadcast %cst_49 : f32 to vector<8x1xf32>
    %137 = arith.divf %135, %136 : vector<8x1xf32>
    %138 = vector.broadcast %130 : vector<8x1xf32> to vector<8x32xf32>
    %139 = arith.subf %122, %138 : vector<8x32xf32>
    %cst_50 = arith.constant 9.99999974E-6 : f32
    %140 = vector.broadcast %cst_50 : f32 to vector<8x1xf32>
    %141 = arith.addf %137, %140 : vector<8x1xf32>
    %142 = math.rsqrt %141 : vector<8x1xf32>
    %143 = vector.broadcast %142 : vector<8x1xf32> to vector<8x32xf32>
    %144 = arith.mulf %139, %143 : vector<8x32xf32>
    %145 = vector.shape_cast %124 : vector<32xf32> to vector<1x32xf32>
    %146 = vector.broadcast %145 : vector<1x32xf32> to vector<8x32xf32>
    %147 = arith.mulf %144, %146 : vector<8x32xf32>
    %148 = vector.shape_cast %126 : vector<32xf32> to vector<1x32xf32>
    %149 = vector.broadcast %148 : vector<1x32xf32> to vector<8x32xf32>
    %150 = arith.addf %147, %149 : vector<8x32xf32>
    %151 = arith.truncf %150 : vector<8x32xf32> to vector<8x32xbf16>
    %c0_51 = arith.constant 0 : index
    %c0_52 = arith.constant 0 : index
    %152 = vector.load %arg9[%c0_51, %c0_52] : memref<32x32xbf16, #tpu.memory_space<vmem>>, vector<32x32xbf16>
    %cst_53 = arith.constant dense<0.000000e+00> : vector<8x32xf32>
    %153 = tpu.matmul %151, %152, %cst_53 {dimension_numbers = #tpu.dot_dimension_numbers<[1], [0], [0], [1], [0, 0, 1, 1], [], []>} : vector<8x32xbf16>, vector<32x32xbf16>, vector<8x32xf32> -> vector<8x32xf32>
    %c0_54 = arith.constant 0 : index
    %c0_55 = arith.constant 0 : index
    %154 = vector.load %arg10[%c0_54, %c0_55] : memref<1x32xf32, #tpu.memory_space<vmem>>, vector<1x32xf32>
    %155 = vector.broadcast %154 : vector<1x32xf32> to vector<8x32xf32>
    %156 = arith.addf %153, %155 : vector<8x32xf32>
    %157 = arith.truncf %156 : vector<8x32xf32> to vector<8x32xbf16>
    %158 = arith.truncf %3 : vector<16x32xf32> to vector<16x32xbf16>
    %c0_56 = arith.constant 0 : index
    %c0_57 = arith.constant 0 : index
    %159 = vector.load %arg11[%c0_56, %c0_57] : memref<32x64xbf16, #tpu.memory_space<vmem>>, vector<32x64xbf16>
    %cst_58 = arith.constant dense<0.000000e+00> : vector<16x64xf32>
    %160 = tpu.matmul %158, %159, %cst_58 {dimension_numbers = #tpu.dot_dimension_numbers<[1], [0], [0], [1], [0, 0, 1, 1], [], []>} : vector<16x32xbf16>, vector<32x64xbf16>, vector<16x64xf32> -> vector<16x64xf32>
    %c0_59 = arith.constant 0 : index
    %c0_60 = arith.constant 0 : index
    %161 = vector.load %arg12[%c0_59, %c0_60] : memref<1x64xf32, #tpu.memory_space<vmem>>, vector<1x64xf32>
    %162 = vector.broadcast %161 : vector<1x64xf32> to vector<16x64xf32>
    %163 = arith.addf %160, %162 : vector<16x64xf32>
    %164 = arith.truncf %163 : vector<16x64xf32> to vector<16x64xbf16>
    %165 = vector.extract_strided_slice %157 {offsets = [0, 0], sizes = [8, 8], strides = [1, 1]} : vector<8x32xbf16> to vector<8x8xbf16>
    %166 = vector.extract_strided_slice %157 {offsets = [0, 8], sizes = [8, 8], strides = [1, 1]} : vector<8x32xbf16> to vector<8x8xbf16>
    %167 = vector.extract_strided_slice %157 {offsets = [0, 16], sizes = [8, 8], strides = [1, 1]} : vector<8x32xbf16> to vector<8x8xbf16>
    %168 = vector.extract_strided_slice %157 {offsets = [0, 24], sizes = [8, 8], strides = [1, 1]} : vector<8x32xbf16> to vector<8x8xbf16>
    %169 = vector.shape_cast %165 : vector<8x8xbf16> to vector<1x8x8xbf16>
    %170 = vector.shape_cast %166 : vector<8x8xbf16> to vector<1x8x8xbf16>
    %171 = vector.shape_cast %167 : vector<8x8xbf16> to vector<1x8x8xbf16>
    %172 = vector.shape_cast %168 : vector<8x8xbf16> to vector<1x8x8xbf16>
    %173 = tpu.concatenate %169, %170, %171, %172 in 0 : vector<1x8x8xbf16>, vector<1x8x8xbf16>, vector<1x8x8xbf16>, vector<1x8x8xbf16> -> vector<4x8x8xbf16>
    %174 = vector.extract_strided_slice %164 {offsets = [0, 0], sizes = [16, 32], strides = [1, 1]} : vector<16x64xbf16> to vector<16x32xbf16>
    %175 = vector.extract_strided_slice %174 {offsets = [0, 0], sizes = [16, 8], strides = [1, 1]} : vector<16x32xbf16> to vector<16x8xbf16>
    %176 = vector.extract_strided_slice %174 {offsets = [0, 8], sizes = [16, 8], strides = [1, 1]} : vector<16x32xbf16> to vector<16x8xbf16>
    %177 = vector.extract_strided_slice %174 {offsets = [0, 16], sizes = [16, 8], strides = [1, 1]} : vector<16x32xbf16> to vector<16x8xbf16>
    %178 = vector.extract_strided_slice %174 {offsets = [0, 24], sizes = [16, 8], strides = [1, 1]} : vector<16x32xbf16> to vector<16x8xbf16>
    %179 = vector.shape_cast %175 : vector<16x8xbf16> to vector<1x16x8xbf16>
    %180 = vector.shape_cast %176 : vector<16x8xbf16> to vector<1x16x8xbf16>
    %181 = vector.shape_cast %177 : vector<16x8xbf16> to vector<1x16x8xbf16>
    %182 = vector.shape_cast %178 : vector<16x8xbf16> to vector<1x16x8xbf16>
    %183 = tpu.concatenate %179, %180, %181, %182 in 0 : vector<1x16x8xbf16>, vector<1x16x8xbf16>, vector<1x16x8xbf16>, vector<1x16x8xbf16> -> vector<4x16x8xbf16>
    %184 = vector.extract_strided_slice %164 {offsets = [0, 32], sizes = [16, 32], strides = [1, 1]} : vector<16x64xbf16> to vector<16x32xbf16>
    %185 = vector.extract_strided_slice %184 {offsets = [0, 0], sizes = [16, 8], strides = [1, 1]} : vector<16x32xbf16> to vector<16x8xbf16>
    %186 = vector.extract_strided_slice %184 {offsets = [0, 8], sizes = [16, 8], strides = [1, 1]} : vector<16x32xbf16> to vector<16x8xbf16>
    %187 = vector.extract_strided_slice %184 {offsets = [0, 16], sizes = [16, 8], strides = [1, 1]} : vector<16x32xbf16> to vector<16x8xbf16>
    %188 = vector.extract_strided_slice %184 {offsets = [0, 24], sizes = [16, 8], strides = [1, 1]} : vector<16x32xbf16> to vector<16x8xbf16>
    %189 = vector.shape_cast %185 : vector<16x8xbf16> to vector<1x16x8xbf16>
    %190 = vector.shape_cast %186 : vector<16x8xbf16> to vector<1x16x8xbf16>
    %191 = vector.shape_cast %187 : vector<16x8xbf16> to vector<1x16x8xbf16>
    %192 = vector.shape_cast %188 : vector<16x8xbf16> to vector<1x16x8xbf16>
    %193 = tpu.concatenate %189, %190, %191, %192 in 0 : vector<1x16x8xbf16>, vector<1x16x8xbf16>, vector<1x16x8xbf16>, vector<1x16x8xbf16> -> vector<4x16x8xbf16>
    "tpu.trace_start"() <{level = 10 : i32, message = "hqc,hkc->hqk"}> : () -> ()
    %cst_61 = arith.constant dense<0.000000e+00> : vector<4x8x16xf32>
    %194 = tpu.matmul %173, %183, %cst_61 {dimension_numbers = #tpu.dot_dimension_numbers<[2], [2], [1], [1], [0, 0, 0, 1, 1, 1], [0], [0]>} : vector<4x8x8xbf16>, vector<4x16x8xbf16>, vector<4x8x16xf32> -> vector<4x8x16xf32>
    "tpu.trace_stop"() : () -> ()
    %195 = vector.shape_cast %25 : vector<8x16xf32> to vector<1x8x16xf32>
    %196 = vector.broadcast %195 : vector<1x8x16xf32> to vector<4x8x16xf32>
    %197 = arith.addf %194, %196 : vector<4x8x16xf32>
    %cst_62 = arith.constant dense<0xFF800000> : vector<4x8xf32>
    %198 = vector.multi_reduction <maximumf>, %197, %cst_62 [2] : vector<4x8x16xf32> to vector<4x8xf32>
    %199 = vector.shape_cast %198 : vector<4x8xf32> to vector<4x8x1xf32>
    %200 = vector.broadcast %199 : vector<4x8x1xf32> to vector<4x8x16xf32>
    %201 = arith.subf %197, %200 : vector<4x8x16xf32>
    %202 = math.exp %201 : vector<4x8x16xf32>
    %cst_63 = arith.constant dense<0.000000e+00> : vector<4x8xf32>
    %203 = vector.multi_reduction <add>, %202, %cst_63 [2] : vector<4x8x16xf32> to vector<4x8xf32>
    %204 = vector.shape_cast %203 : vector<4x8xf32> to vector<4x8x1xf32>
    %205 = tpu.reciprocal %204 {approx = true} : vector<4x8x1xf32> -> vector<4x8x1xf32>
    %206 = vector.broadcast %205 : vector<4x8x1xf32> to vector<4x8x16xf32>
    %207 = arith.mulf %202, %206 : vector<4x8x16xf32>
    %208 = arith.truncf %207 : vector<4x8x16xf32> to vector<4x8x16xbf16>
    "tpu.trace_start"() <{level = 10 : i32, message = "hqk,hkc->hqc"}> : () -> ()
    %cst_64 = arith.constant dense<0.000000e+00> : vector<4x8x8xf32>
    %209 = tpu.matmul %208, %193, %cst_64 {dimension_numbers = #tpu.dot_dimension_numbers<[2], [1], [1], [2], [0, 0, 0, 1, 1, 2], [0], [0]>} : vector<4x8x16xbf16>, vector<4x16x8xbf16>, vector<4x8x8xf32> -> vector<4x8x8xf32>
    "tpu.trace_stop"() : () -> ()
    %210 = vector.extract_strided_slice %209 {offsets = [0, 0, 0], sizes = [1, 8, 8], strides = [1, 1, 1]} : vector<4x8x8xf32> to vector<1x8x8xf32>
    %211 = vector.shape_cast %210 : vector<1x8x8xf32> to vector<8x8xf32>
    %212 = vector.extract_strided_slice %209 {offsets = [1, 0, 0], sizes = [1, 8, 8], strides = [1, 1, 1]} : vector<4x8x8xf32> to vector<1x8x8xf32>
    %213 = vector.shape_cast %212 : vector<1x8x8xf32> to vector<8x8xf32>
    %214 = vector.extract_strided_slice %209 {offsets = [2, 0, 0], sizes = [1, 8, 8], strides = [1, 1, 1]} : vector<4x8x8xf32> to vector<1x8x8xf32>
    %215 = vector.shape_cast %214 : vector<1x8x8xf32> to vector<8x8xf32>
    %216 = vector.extract_strided_slice %209 {offsets = [3, 0, 0], sizes = [1, 8, 8], strides = [1, 1, 1]} : vector<4x8x8xf32> to vector<1x8x8xf32>
    %217 = vector.shape_cast %216 : vector<1x8x8xf32> to vector<8x8xf32>
    %218 = tpu.concatenate %211, %213, %215, %217 in 1 : vector<8x8xf32>, vector<8x8xf32>, vector<8x8xf32>, vector<8x8xf32> -> vector<8x32xf32>
    %219 = arith.truncf %218 : vector<8x32xf32> to vector<8x32xbf16>
    %c0_65 = arith.constant 0 : index
    %c0_66 = arith.constant 0 : index
    %220 = vector.load %arg13[%c0_65, %c0_66] : memref<32x32xbf16, #tpu.memory_space<vmem>>, vector<32x32xbf16>
    %cst_67 = arith.constant dense<0.000000e+00> : vector<8x32xf32>
    %221 = tpu.matmul %219, %220, %cst_67 {dimension_numbers = #tpu.dot_dimension_numbers<[1], [0], [0], [1], [0, 0, 1, 1], [], []>} : vector<8x32xbf16>, vector<32x32xbf16>, vector<8x32xf32> -> vector<8x32xf32>
    %c0_68 = arith.constant 0 : index
    %c0_69 = arith.constant 0 : index
    %222 = vector.load %arg14[%c0_68, %c0_69] : memref<1x32xf32, #tpu.memory_space<vmem>>, vector<1x32xf32>
    %223 = vector.broadcast %222 : vector<1x32xf32> to vector<8x32xf32>
    %224 = arith.addf %221, %223 : vector<8x32xf32>
    %225 = arith.addf %224, %122 : vector<8x32xf32>
    %c2 = arith.constant 2 : index
    %c0_70 = arith.constant 0 : index
    %c0_71 = arith.constant 0 : index
    %226 = vector.load %arg15[%c2, %c0_70, %c0_71] : memref<3x2x32xf32, #tpu.memory_space<vmem>>, vector<1x1x32xf32>
    %227 = vector.shape_cast %226 : vector<1x1x32xf32> to vector<32xf32>
    %c2_72 = arith.constant 2 : index
    %c1_73 = arith.constant 1 : index
    %c0_74 = arith.constant 0 : index
    %228 = vector.load %arg15[%c2_72, %c1_73, %c0_74] : memref<3x2x32xf32, #tpu.memory_space<vmem>>, vector<1x1x32xf32>
    %229 = vector.shape_cast %228 : vector<1x1x32xf32> to vector<32xf32>
    %cst_75 = arith.constant dense<0.000000e+00> : vector<8xf32>
    %230 = vector.multi_reduction <add>, %225, %cst_75 [1] : vector<8x32xf32> to vector<8xf32>
    %231 = vector.shape_cast %230 : vector<8xf32> to vector<8x1xf32>
    %cst_76 = arith.constant 3.200000e+01 : f32
    %232 = vector.broadcast %cst_76 : f32 to vector<8x1xf32>
    %233 = arith.divf %231, %232 : vector<8x1xf32>
    %234 = vector.broadcast %233 : vector<8x1xf32> to vector<8x32xf32>
    %235 = arith.subf %225, %234 : vector<8x32xf32>
    %236 = arith.mulf %235, %235 : vector<8x32xf32>
    %cst_77 = arith.constant dense<0.000000e+00> : vector<8xf32>
    %237 = vector.multi_reduction <add>, %236, %cst_77 [1] : vector<8x32xf32> to vector<8xf32>
    %238 = vector.shape_cast %237 : vector<8xf32> to vector<8x1xf32>
    %cst_78 = arith.constant 3.200000e+01 : f32
    %239 = vector.broadcast %cst_78 : f32 to vector<8x1xf32>
    %240 = arith.divf %238, %239 : vector<8x1xf32>
    %241 = vector.broadcast %233 : vector<8x1xf32> to vector<8x32xf32>
    %242 = arith.subf %225, %241 : vector<8x32xf32>
    %cst_79 = arith.constant 9.99999974E-6 : f32
    %243 = vector.broadcast %cst_79 : f32 to vector<8x1xf32>
    %244 = arith.addf %240, %243 : vector<8x1xf32>
    %245 = math.rsqrt %244 : vector<8x1xf32>
    %246 = vector.broadcast %245 : vector<8x1xf32> to vector<8x32xf32>
    %247 = arith.mulf %242, %246 : vector<8x32xf32>
    %248 = vector.shape_cast %227 : vector<32xf32> to vector<1x32xf32>
    %249 = vector.broadcast %248 : vector<1x32xf32> to vector<8x32xf32>
    %250 = arith.mulf %247, %249 : vector<8x32xf32>
    %251 = vector.shape_cast %229 : vector<32xf32> to vector<1x32xf32>
    %252 = vector.broadcast %251 : vector<1x32xf32> to vector<8x32xf32>
    %253 = arith.addf %250, %252 : vector<8x32xf32>
    %254 = arith.truncf %253 : vector<8x32xf32> to vector<8x32xbf16>
    %c0_80 = arith.constant 0 : index
    %c0_81 = arith.constant 0 : index
    %255 = vector.load %arg16[%c0_80, %c0_81] : memref<32x64xbf16, #tpu.memory_space<vmem>>, vector<32x64xbf16>
    %cst_82 = arith.constant dense<0.000000e+00> : vector<8x64xf32>
    %256 = tpu.matmul %254, %255, %cst_82 {dimension_numbers = #tpu.dot_dimension_numbers<[1], [0], [0], [1], [0, 0, 1, 1], [], []>} : vector<8x32xbf16>, vector<32x64xbf16>, vector<8x64xf32> -> vector<8x64xf32>
    %c0_83 = arith.constant 0 : index
    %c0_84 = arith.constant 0 : index
    %257 = vector.load %arg17[%c0_83, %c0_84] : memref<1x64xf32, #tpu.memory_space<vmem>>, vector<1x64xf32>
    %258 = vector.broadcast %257 : vector<1x64xf32> to vector<8x64xf32>
    %259 = arith.addf %256, %258 : vector<8x64xf32>
    %cst_85 = arith.constant 0.000000e+00 : f32
    %260 = vector.broadcast %cst_85 : f32 to vector<8x64xf32>
    %261 = arith.maximumf %259, %260 : vector<8x64xf32>
    %262 = arith.truncf %261 : vector<8x64xf32> to vector<8x64xbf16>
    %c0_86 = arith.constant 0 : index
    %c0_87 = arith.constant 0 : index
    %263 = vector.load %arg18[%c0_86, %c0_87] : memref<64x32xbf16, #tpu.memory_space<vmem>>, vector<64x32xbf16>
    %cst_88 = arith.constant dense<0.000000e+00> : vector<8x32xf32>
    %264 = tpu.matmul %262, %263, %cst_88 {dimension_numbers = #tpu.dot_dimension_numbers<[1], [0], [0], [1], [0, 0, 1, 1], [], []>} : vector<8x64xbf16>, vector<64x32xbf16>, vector<8x32xf32> -> vector<8x32xf32>
    %c0_89 = arith.constant 0 : index
    %c0_90 = arith.constant 0 : index
    %265 = vector.load %arg19[%c0_89, %c0_90] : memref<1x32xf32, #tpu.memory_space<vmem>>, vector<1x32xf32>
    %266 = vector.broadcast %265 : vector<1x32xf32> to vector<8x32xf32>
    %267 = arith.addf %264, %266 : vector<8x32xf32>
    %268 = arith.addf %267, %225 : vector<8x32xf32>
    %c0_91 = arith.constant 0 : index
    %c0_92 = arith.constant 0 : index
    %c0_93 = arith.constant 0 : index
    %269 = vector.load %arg20[%c0_91, %c0_92, %c0_93] : memref<1x8x32xf32, #tpu.memory_space<vmem>>, vector<1x8x32xf32>
    %270 = vector.shape_cast %269 : vector<1x8x32xf32> to vector<8x32xf32>
    %271 = vector.shape_cast %268 : vector<8x32xf32> to vector<1x8x32xf32>
    tpu.vector_store %arg20[%c0_91, %c0_92, %c0_93], %271 {strides = array<i32>} : memref<1x8x32xf32, #tpu.memory_space<vmem>>, vector<1x8x32xf32>,
    return
  }
  func.func @transform_0(%arg0: i32) -> (i32, i32, i32) {
    %c0_i32 = arith.constant 0 : i32
    %c0_i32_0 = arith.constant 0 : i32
    %c0_i32_1 = arith.constant 0 : i32
    return %arg0, %c0_i32, %c0_i32_0 : i32, i32, i32
  }
  func.func @transform_1(%arg0: i32) -> (i32, i32, i32) {
    %c0_i32 = arith.constant 0 : i32
    %c0_i32_0 = arith.constant 0 : i32
    %c0_i32_1 = arith.constant 0 : i32
    return %arg0, %c0_i32, %c0_i32_0 : i32, i32, i32
  }
  func.func @transform_2(%arg0: i32) -> (i32, i32, i32) {
    %c0_i32 = arith.constant 0 : i32
    %c0_i32_0 = arith.constant 0 : i32
    %c0_i32_1 = arith.constant 0 : i32
    return %arg0, %c0_i32, %c0_i32_0 : i32, i32, i32
  }
  func.func @transform_3(%arg0: i32) -> (i32, i32, i32) {
    %c0_i32 = arith.constant 0 : i32
    %c0_i32_0 = arith.constant 0 : i32
    %c0_i32_1 = arith.constant 0 : i32
    return %arg0, %c0_i32, %c0_i32_0 : i32, i32, i32
  }
  func.func @transform_4(%arg0: i32) -> (i32, i32) {
    %c0_i32 = arith.constant 0 : i32
    %c0_i32_0 = arith.constant 0 : i32
    %c0_i32_1 = arith.constant 0 : i32
    return %c0_i32, %c0_i32_0 : i32, i32
  }
  func.func @transform_5(%arg0: i32) -> (i32, i32) {
    %c0_i32 = arith.constant 0 : i32
    %c0_i32_0 = arith.constant 0 : i32
    %c0_i32_1 = arith.constant 0 : i32
    return %c0_i32, %c0_i32_0 : i32, i32
  }
  func.func @transform_6(%arg0: i32) -> (i32, i32) {
    %c0_i32 = arith.constant 0 : i32
    %c0_i32_0 = arith.constant 0 : i32
    %c0_i32_1 = arith.constant 0 : i32
    return %c0_i32, %c0_i32_0 : i32, i32
  }
  func.func @transform_7(%arg0: i32) -> (i32, i32) {
    %c0_i32 = arith.constant 0 : i32
    %c0_i32_0 = arith.constant 0 : i32
    %c0_i32_1 = arith.constant 0 : i32
    return %c0_i32, %c0_i32_0 : i32, i32
  }
  func.func @transform_8(%arg0: i32) -> (i32, i32) {
    %c0_i32 = arith.constant 0 : i32
    %c0_i32_0 = arith.constant 0 : i32
    %c0_i32_1 = arith.constant 0 : i32
    return %c0_i32, %c0_i32_0 : i32, i32
  }
  func.func @transform_9(%arg0: i32) -> (i32, i32) {
    %c0_i32 = arith.constant 0 : i32
    %c0_i32_0 = arith.constant 0 : i32
    %c0_i32_1 = arith.constant 0 : i32
    return %c0_i32, %c0_i32_0 : i32, i32
  }
  func.func @transform_10(%arg0: i32) -> (i32, i32) {
    %c0_i32 = arith.constant 0 : i32
    %c0_i32_0 = arith.constant 0 : i32
    %c0_i32_1 = arith.constant 0 : i32
    return %c0_i32, %c0_i32_0 : i32, i32
  }
  func.func @transform_11(%arg0: i32) -> (i32, i32) {
    %c0_i32 = arith.constant 0 : i32
    %c0_i32_0 = arith.constant 0 : i32
    %c0_i32_1 = arith.constant 0 : i32
    return %c0_i32, %c0_i32_0 : i32, i32
  }
  func.func @transform_12(%arg0: i32) -> (i32, i32) {
    %c0_i32 = arith.constant 0 : i32
    %c0_i32_0 = arith.constant 0 : i32
    %c0_i32_1 = arith.constant 0 : i32
    return %c0_i32, %c0_i32_0 : i32, i32
  }
  func.func @transform_13(%arg0: i32) -> (i32, i32) {
    %c0_i32 = arith.constant 0 : i32
    %c0_i32_0 = arith.constant 0 : i32
    %c0_i32_1 = arith.constant 0 : i32
    return %c0_i32, %c0_i32_0 : i32, i32
  }
  func.func @transform_14(%arg0: i32) -> (i32, i32, i32) {
    %c0_i32 = arith.constant 0 : i32
    %c0_i32_0 = arith.constant 0 : i32
    %c0_i32_1 = arith.constant 0 : i32
    %c0_i32_2 = arith.constant 0 : i32
    return %c0_i32, %c0_i32_0, %c0_i32_1 : i32, i32, i32
  }
  func.func @transform_15(%arg0: i32) -> (i32, i32) {
    %c0_i32 = arith.constant 0 : i32
    %c0_i32_0 = arith.constant 0 : i32
    %c0_i32_1 = arith.constant 0 : i32
    return %c0_i32, %c0_i32_0 : i32, i32
  }
  func.func @transform_16(%arg0: i32) -> (i32, i32) {
    %c0_i32 = arith.constant 0 : i32
    %c0_i32_0 = arith.constant 0 : i32
    %c0_i32_1 = arith.constant 0 : i32
    return %c0_i32, %c0_i32_0 : i32, i32
  }
  func.func @transform_17(%arg0: i32) -> (i32, i32) {
    %c0_i32 = arith.constant 0 : i32
    %c0_i32_0 = arith.constant 0 : i32
    %c0_i32_1 = arith.constant 0 : i32
    return %c0_i32, %c0_i32_0 : i32, i32
  }
  func.func @transform_18(%arg0: i32) -> (i32, i32) {
    %c0_i32 = arith.constant 0 : i32
    %c0_i32_0 = arith.constant 0 : i32
    %c0_i32_1 = arith.constant 0 : i32
    return %c0_i32, %c0_i32_0 : i32, i32
  }
  func.func @transform_19(%arg0: i32) -> (i32, i32, i32) {
    %c0_i32 = arith.constant 0 : i32
    %c0_i32_0 = arith.constant 0 : i32
    %c0_i32_1 = arith.constant 0 : i32
    return %arg0, %c0_i32, %c0_i32_0 : i32, i32, i32
  }
}

</mosaic_0001>

<llo_original>
// kernel: tpu_custom_call.1
$region0: #{tpu_custom_call.1}
  #allocation0 [shape = 'u32[]', space=smem, size = 0x4, offset = 0x4, fixed_abs, tag = 'smem constant byte address 0x4 - core index']
  #allocation1 [shape = 'u32[144,128]{1,0:T(1,128)}', space=vmem, size = 0x12000, scoped, tag = 'internal scratch']
  %s0 = inlined_call_operand.vmem [shape: f32[2,8,32], index: 0, kind: input, shape index: {}]
  %s1 = inlined_call_operand.vmem [shape: f32[2,16,32], index: 1, kind: input, shape index: {}]
  %s2 = inlined_call_operand.hbm [shape: f32[2,1,8], index: 2, kind: input, shape index: {}]
  %s3 = inlined_call_operand.hbm [shape: f32[2,1,16], index: 3, kind: input, shape index: {}]
  %s4 = inlined_call_operand.hbm [shape: bf16[32,96], index: 4, kind: input, shape index: {}]
  %s5 = inlined_call_operand.vmem [shape: f32[1,96], index: 5, kind: input, shape index: {}]
  %s6 = inlined_call_operand.hbm [shape: bf16[32,32], index: 6, kind: input, shape index: {}]
  %s7 = inlined_call_operand.hbm [shape: f32[1,32], index: 7, kind: input, shape index: {}]
  %s8 = inlined_call_operand.hbm [shape: bf16[32,32], index: 8, kind: input, shape index: {}]
  %s9 = inlined_call_operand.hbm [shape: f32[1,32], index: 9, kind: input, shape index: {}]
  %s10 = inlined_call_operand.vmem [shape: bf16[32,64], index: 10, kind: input, shape index: {}]
  %s11 = inlined_call_operand.hbm [shape: f32[1,64], index: 11, kind: input, shape index: {}]
  %s12 = inlined_call_operand.hbm [shape: bf16[32,32], index: 12, kind: input, shape index: {}]
  %s13 = inlined_call_operand.hbm [shape: f32[1,32], index: 13, kind: input, shape index: {}]
  %s14 = inlined_call_operand.hbm [shape: f32[3,2,32], index: 14, kind: input, shape index: {}]
  %s15 = inlined_call_operand.vmem [shape: bf16[32,64], index: 15, kind: input, shape index: {}]
  %s16 = inlined_call_operand.vmem [shape: f32[1,64], index: 16, kind: input, shape index: {}]
  %s17 = inlined_call_operand.vmem [shape: bf16[64,32], index: 17, kind: input, shape index: {}]
  %s18 = inlined_call_operand.vmem [shape: f32[1,32], index: 18, kind: input, shape index: {}]
  %s19 = inlined_call_operand.hbm [shape: f32[2,8,32], index: 19, kind: output, shape index: {}]
  %s20 = sld [smem:[#allocation0]]
  $region153: #{tpu_custom_call.1} parent=0
    _
  %s22 = ssub.s32 1, %s20
  %s23 = scalar_select 0, %s22, %s20
  $region1: #{tpu_custom_call.1} parent=0
    #allocation2 [shape = 'u8[1024]{0}', space=vmem, size = 0x400, scoped, tag = 'input window, operand 2']
    #allocation3 [shape = 's32[2]{0}', space=sflag, size = 0x8, scoped, tag = 'scoped memory for tpu_custom_call.1']
    #allocation4 [shape = 's32[2]{0}', space=sflag, size = 0x8, scoped, tag = 'scoped memory for tpu_custom_call.1']
    #allocation5 [shape = 'u8[1024]{0}', space=vmem, size = 0x400, scoped, tag = 'input window, operand 3']
    #allocation6 [shape = 's32[2]{0}', space=sflag, size = 0x8, scoped, tag = 'scoped memory for tpu_custom_call.1']
    #allocation7 [shape = 'u8[8192]{0}', space=vmem, size = 0x2000, scoped, tag = 'input window, operand 4, single buffered']
    #allocation8 [shape = 'u8[8192]{0}', space=vmem, size = 0x2000, scoped, tag = 'input window, operand 6, single buffered']
    #allocation9 [shape = 's32[1]{0}', space=sflag, size = 0x4, scoped, tag = 'scoped memory for tpu_custom_call.1']
    #allocation10 [shape = 'u8[512]{0}', space=vmem, size = 0x400, scoped, tag = 'input window, operand 7, single buffered']
    #allocation11 [shape = 'u8[8192]{0}', space=vmem, size = 0x2000, scoped, tag = 'input window, operand 8, single buffered']
    #allocation12 [shape = 's32[1]{0}', space=sflag, size = 0x4, scoped, tag = 'scoped memory for tpu_custom_call.1']
    #allocation13 [shape = 'u8[512]{0}', space=vmem, size = 0x400, scoped, tag = 'input window, operand 9, single buffered']
    #allocation14 [shape = 'u8[512]{0}', space=vmem, size = 0x400, scoped, tag = 'input window, operand 11, single buffered']
    #allocation15 [shape = 's32[1]{0}', space=sflag, size = 0x4, scoped, tag = 'scoped memory for tpu_custom_call.1']
    #allocation16 [shape = 'u8[8192]{0}', space=vmem, size = 0x2000, scoped, tag = 'input window, operand 12, single buffered']
    #allocation17 [shape = 'u8[512]{0}', space=vmem, size = 0x400, scoped, tag = 'input window, operand 13, single buffered']
    #allocation18 [shape = 's32[1]{0}', space=sflag, size = 0x4, scoped, tag = 'scoped memory for tpu_custom_call.1']
    #allocation19 [shape = 'u8[3072]{0}', space=vmem, size = 0xc00, scoped, tag = 'input window, operand 14, single buffered']
    #allocation20 [shape = 'u8[8192]{0}', space=vmem, size = 0x2000, scoped, tag = 'output window, operand 0']
    %24 = vsyncpa [#allocation3], 0
    %s25 = scalar_lea.sflag [#allocation3], 1
    %26 = vsyncpa %s25, 0
    %27 = vsyncpa [#allocation6], 0
    %s28 = scalar_lea.sflag [#allocation6], 1
    %29 = vsyncpa %s28, 0
    %30 = vsyncpa [#allocation9], 0
    %31 = vsyncpa [#allocation12], 0
    %32 = vsyncpa [#allocation15], 0
    %33 = vsyncpa [#allocation18], 0
    %34 = vsyncpa [#allocation4], 0
    %s35 = scalar_lea.sflag [#allocation4], 1
    %36 = vsyncpa %s35, 0
    loop: start=0, step=1, limit=4
    $region2: #{tpu_custom_call.1} parent=1 // loop_pre_header
      _
    $region3: #{tpu_custom_call.1} parent=1 // loop_header
      %s38 = sphi 0, %s42
      %p39 = scmp.ge.s32.totalorder %s38, 4
      %s48 = sphi 0, %s50
      %s51 = sphi 0, %s48
      %s52 = sphi 0, %s51
      %s68 = sphi 0, %s52
      %s74 = sphi 0, %s76
      %s77 = sphi 0, %s74
      %s78 = sphi 0, %s77
      %s94 = sphi 0, %s78
      %s100 = sphi 0, %s102
      %s103 = sphi 0, %s100
      %s104 = sphi 0, %s103
      %s120 = sphi 0, %s104
      %s126 = sphi 0, %s128
      %s129 = sphi 0, %s126
      %s130 = sphi 0, %s129
      %s146 = sphi 0, %s130
      %s150 = sphi 0, %s150
      %s152 = sphi 0, %s150
      %s153 = sphi 0, %s152
      %s167 = sphi 0, %s153
      %s171 = sphi 0, %s171
      %s173 = sphi 0, %s171
      %s174 = sphi 0, %s173
      %s188 = sphi 0, %s174
      %s192 = sphi 0, %s192
      %s194 = sphi 0, %s192
      %s195 = sphi 0, %s194
      %s209 = sphi 0, %s195
      %s213 = sphi 0, %s213
      %s215 = sphi 0, %s213
      %s216 = sphi 0, %s215
      %s230 = sphi 0, %s216
      %s234 = sphi 0, %s234
      %s236 = sphi 0, %s234
      %s237 = sphi 0, %s236
      %s251 = sphi 0, %s237
      %s255 = sphi 0, %s255
      %s257 = sphi 0, %s255
      %s258 = sphi 0, %s257
      %s272 = sphi 0, %s258
      %s276 = sphi 0, %s276
      %s278 = sphi 0, %s276
      %s279 = sphi 0, %s278
      %s293 = sphi 0, %s279
      %s297 = sphi 0, %s297
      %s299 = sphi 0, %s297
      %s300 = sphi 0, %s299
      %s314 = sphi 0, %s300
      %s318 = sphi 0, %s318
      %s320 = sphi 0, %s318
      %s321 = sphi 0, %s320
      %s335 = sphi 0, %s321
      %s339 = sphi 0, %s339
      %s341 = sphi 0, %s339
      %s342 = sphi 0, %s341
      %s356 = sphi 0, %s342
      %s360 = sphi 0, %s360
      %s362 = sphi 0, %s360
      %s363 = sphi 0, %s362
      %s377 = sphi 0, %s363
      %s381 = sphi 0, %s381
      %s383 = sphi 0, %s381
      %s384 = sphi 0, %s383
      %s398 = sphi 0, %s384
      %s402 = sphi 0, %s402
      %s404 = sphi 0, %s402
      %s405 = sphi 0, %s404
      %s419 = sphi 0, %s405
      %s423 = sphi 0, %s423
      %s425 = sphi 0, %s423
      %s426 = sphi 0, %s425
      %s440 = sphi 0, %s426
      %s444 = sphi 0, %s444
      %s446 = sphi 0, %s444
      %s447 = sphi 0, %s446
      %s461 = sphi 0, %s447
      %s467 = sphi 0, %s469
      %s470 = sphi 0, %s467
      %s471 = sphi 0, %s470
      %s487 = sphi 0, %s471
    $region4: #{tpu_custom_call.1} parent=1 // loop_header_branch
      %41 = sbr.rel (%p39) target = $region8
    $region5: #{tpu_custom_call.1} parent=1 // loop_body
      %s43 = ssub.s32 %s38, 1
      %s44 = ssub.s32 %s38, 2
      %s45 = sadd.s32 %s38, 1
      %s46 = ssub.s32 %s38, %s45
      %p47 = scmp.eq.s32.totalorder %s46, 0
      %s49 = sadd.s32 %s48, 1
      %s50 = scalar_select %p47, %s48, %s49
      %p53 = pneg %p47
      %p54 = scmp.eq.s32.totalorder %s38, 1
      %p55 = por %p53, %p54
      %p56 = scmp.ne.s32.totalorder %s48, %s51
      %p57 = scmp.eq.s32.totalorder %s38, 0
      %p58 = por %p56, %p57
      %p59 = scmp.ne.s32.totalorder %s48, %s51
      %p60 = scmp.eq.s32.totalorder %s43, 1
      %p61 = por %p59, %p60
      %p62 = scmp.ne.s32.totalorder %s51, %s52
      %p63 = scmp.eq.s32.totalorder %s43, 0
      %p64 = por %p62, %p63
      %p65 = scmp.ne.s32.totalorder %s51, %s52
      %p66 = scmp.eq.s32.totalorder %s44, 1
      %p67 = por %p65, %p66
      %p69 = scmp.ne.s32.totalorder %s52, %s68
      %p70 = scmp.eq.s32.totalorder %s44, 0
      %p71 = por %p69, %p70
      %s72 = ssub.s32 %s38, %s45
      %p73 = scmp.eq.s32.totalorder %s72, 0
      %s75 = sadd.s32 %s74, 1
      %s76 = scalar_select %p73, %s74, %s75
      %p79 = pneg %p73
      %p80 = scmp.eq.s32.totalorder %s38, 1
      %p81 = por %p79, %p80
      %p82 = scmp.ne.s32.totalorder %s74, %s77
      %p83 = scmp.eq.s32.totalorder %s38, 0
      %p84 = por %p82, %p83
      %p85 = scmp.ne.s32.totalorder %s74, %s77
      %p86 = scmp.eq.s32.totalorder %s43, 1
      %p87 = por %p85, %p86
      %p88 = scmp.ne.s32.totalorder %s77, %s78
      %p89 = scmp.eq.s32.totalorder %s43, 0
      %p90 = por %p88, %p89
      %p91 = scmp.ne.s32.totalorder %s77, %s78
      %p92 = scmp.eq.s32.totalorder %s44, 1
      %p93 = por %p91, %p92
      %p95 = scmp.ne.s32.totalorder %s78, %s94
      %p96 = scmp.eq.s32.totalorder %s44, 0
      %p97 = por %p95, %p96
      %s98 = ssub.s32 %s38, %s45
      %p99 = scmp.eq.s32.totalorder %s98, 0
      %s101 = sadd.s32 %s100, 1
      %s102 = scalar_select %p99, %s100, %s101
      %p105 = pneg %p99
      %p106 = scmp.eq.s32.totalorder %s38, 1
      %p107 = por %p105, %p106
      %p108 = scmp.ne.s32.totalorder %s100, %s103
      %p109 = scmp.eq.s32.totalorder %s38, 0
      %p110 = por %p108, %p109
      %p111 = scmp.ne.s32.totalorder %s100, %s103
      %p112 = scmp.eq.s32.totalorder %s43, 1
      %p113 = por %p111, %p112
      %p114 = scmp.ne.s32.totalorder %s103, %s104
      %p115 = scmp.eq.s32.totalorder %s43, 0
      %p116 = por %p114, %p115
      %p117 = scmp.ne.s32.totalorder %s103, %s104
      %p118 = scmp.eq.s32.totalorder %s44, 1
      %p119 = por %p117, %p118
      %p121 = scmp.ne.s32.totalorder %s104, %s120
      %p122 = scmp.eq.s32.totalorder %s44, 0
      %p123 = por %p121, %p122
      %s124 = ssub.s32 %s38, %s45
      %p125 = scmp.eq.s32.totalorder %s124, 0
      %s127 = sadd.s32 %s126, 1
      %s128 = scalar_select %p125, %s126, %s127
      %p131 = pneg %p125
      %p132 = scmp.eq.s32.totalorder %s38, 1
      %p133 = por %p131, %p132
      %p134 = scmp.ne.s32.totalorder %s126, %s129
      %p135 = scmp.eq.s32.totalorder %s38, 0
      %p136 = por %p134, %p135
      %p137 = scmp.ne.s32.totalorder %s126, %s129
      %p138 = scmp.eq.s32.totalorder %s43, 1
      %p139 = por %p137, %p138
      %p140 = scmp.ne.s32.totalorder %s129, %s130
      %p141 = scmp.eq.s32.totalorder %s43, 0
      %p142 = por %p140, %p141
      %p143 = scmp.ne.s32.totalorder %s129, %s130
      %p144 = scmp.eq.s32.totalorder %s44, 1
      %p145 = por %p143, %p144
      %p147 = scmp.ne.s32.totalorder %s130, %s146
      %p148 = scmp.eq.s32.totalorder %s44, 0
      %p149 = por %p147, %p148
      %s151 = sadd.s32 %s150, 1
      %p154 = scmp.eq.s32.totalorder %s38, 1
      %p155 = scmp.ne.s32.totalorder %s150, %s152
      %p156 = scmp.eq.s32.totalorder %s38, 0
      %p157 = por %p155, %p156
      %p158 = scmp.ne.s32.totalorder %s150, %s152
      %p159 = scmp.eq.s32.totalorder %s43, 1
      %p160 = por %p158, %p159
      %p161 = scmp.ne.s32.totalorder %s152, %s153
      %p162 = scmp.eq.s32.totalorder %s43, 0
      %p163 = por %p161, %p162
      %p164 = scmp.ne.s32.totalorder %s152, %s153
      %p165 = scmp.eq.s32.totalorder %s44, 1
      %p166 = por %p164, %p165
      %p168 = scmp.ne.s32.totalorder %s153, %s167
      %p169 = scmp.eq.s32.totalorder %s44, 0
      %p170 = por %p168, %p169
      %s172 = sadd.s32 %s171, 1
      %p175 = scmp.eq.s32.totalorder %s38, 1
      %p176 = scmp.ne.s32.totalorder %s171, %s173
      %p177 = scmp.eq.s32.totalorder %s38, 0
      %p178 = por %p176, %p177
      %p179 = scmp.ne.s32.totalorder %s171, %s173
      %p180 = scmp.eq.s32.totalorder %s43, 1
      %p181 = por %p179, %p180
      %p182 = scmp.ne.s32.totalorder %s173, %s174
      %p183 = scmp.eq.s32.totalorder %s43, 0
      %p184 = por %p182, %p183
      %p185 = scmp.ne.s32.totalorder %s173, %s174
      %p186 = scmp.eq.s32.totalorder %s44, 1
      %p187 = por %p185, %p186
      %p189 = scmp.ne.s32.totalorder %s174, %s188
      %p190 = scmp.eq.s32.totalorder %s44, 0
      %p191 = por %p189, %p190
      %s193 = sadd.s32 %s192, 1
      %p196 = scmp.eq.s32.totalorder %s38, 1
      %p197 = scmp.ne.s32.totalorder %s192, %s194
      %p198 = scmp.eq.s32.totalorder %s38, 0
      %p199 = por %p197, %p198
      %p200 = scmp.ne.s32.totalorder %s192, %s194
      %p201 = scmp.eq.s32.totalorder %s43, 1
      %p202 = por %p200, %p201
      %p203 = scmp.ne.s32.totalorder %s194, %s195
      %p204 = scmp.eq.s32.totalorder %s43, 0
      %p205 = por %p203, %p204
      %p206 = scmp.ne.s32.totalorder %s194, %s195
      %p207 = scmp.eq.s32.totalorder %s44, 1
      %p208 = por %p206, %p207
      %p210 = scmp.ne.s32.totalorder %s195, %s209
      %p211 = scmp.eq.s32.totalorder %s44, 0
      %p212 = por %p210, %p211
      %s214 = sadd.s32 %s213, 1
      %p217 = scmp.eq.s32.totalorder %s38, 1
      %p218 = scmp.ne.s32.totalorder %s213, %s215
      %p219 = scmp.eq.s32.totalorder %s38, 0
      %p220 = por %p218, %p219
      %p221 = scmp.ne.s32.totalorder %s213, %s215
      %p222 = scmp.eq.s32.totalorder %s43, 1
      %p223 = por %p221, %p222
      %p224 = scmp.ne.s32.totalorder %s215, %s216
      %p225 = scmp.eq.s32.totalorder %s43, 0
      %p226 = por %p224, %p225
      %p227 = scmp.ne.s32.totalorder %s215, %s216
      %p228 = scmp.eq.s32.totalorder %s44, 1
      %p229 = por %p227, %p228
      %p231 = scmp.ne.s32.totalorder %s216, %s230
      %p232 = scmp.eq.s32.totalorder %s44, 0
      %p233 = por %p231, %p232
      %s235 = sadd.s32 %s234, 1
      %p238 = scmp.eq.s32.totalorder %s38, 1
      %p239 = scmp.ne.s32.totalorder %s234, %s236
      %p240 = scmp.eq.s32.totalorder %s38, 0
      %p241 = por %p239, %p240
      %p242 = scmp.ne.s32.totalorder %s234, %s236
      %p243 = scmp.eq.s32.totalorder %s43, 1
      %p244 = por %p242, %p243
      %p245 = scmp.ne.s32.totalorder %s236, %s237
      %p246 = scmp.eq.s32.totalorder %s43, 0
      %p247 = por %p245, %p246
      %p248 = scmp.ne.s32.totalorder %s236, %s237
      %p249 = scmp.eq.s32.totalorder %s44, 1
      %p250 = por %p248, %p249
      %p252 = scmp.ne.s32.totalorder %s237, %s251
      %p253 = scmp.eq.s32.totalorder %s44, 0
      %p254 = por %p252, %p253
      %s256 = sadd.s32 %s255, 1
      %p259 = scmp.eq.s32.totalorder %s38, 1
      %p260 = scmp.ne.s32.totalorder %s255, %s257
      %p261 = scmp.eq.s32.totalorder %s38, 0
      %p262 = por %p260, %p261
      %p263 = scmp.ne.s32.totalorder %s255, %s257
      %p264 = scmp.eq.s32.totalorder %s43, 1
      %p265 = por %p263, %p264
      %p266 = scmp.ne.s32.totalorder %s257, %s258
      %p267 = scmp.eq.s32.totalorder %s43, 0
      %p268 = por %p266, %p267
      %p269 = scmp.ne.s32.totalorder %s257, %s258
      %p270 = scmp.eq.s32.totalorder %s44, 1
      %p271 = por %p269, %p270
      %p273 = scmp.ne.s32.totalorder %s258, %s272
      %p274 = scmp.eq.s32.totalorder %s44, 0
      %p275 = por %p273, %p274
      %s277 = sadd.s32 %s276, 1
      %p280 = scmp.eq.s32.totalorder %s38, 1
      %p281 = scmp.ne.s32.totalorder %s276, %s278
      %p282 = scmp.eq.s32.totalorder %s38, 0
      %p283 = por %p281, %p282
      %p284 = scmp.ne.s32.totalorder %s276, %s278
      %p285 = scmp.eq.s32.totalorder %s43, 1
      %p286 = por %p284, %p285
      %p287 = scmp.ne.s32.totalorder %s278, %s279
      %p288 = scmp.eq.s32.totalorder %s43, 0
      %p289 = por %p287, %p288
      %p290 = scmp.ne.s32.totalorder %s278, %s279
      %p291 = scmp.eq.s32.totalorder %s44, 1
      %p292 = por %p290, %p291
      %p294 = scmp.ne.s32.totalorder %s279, %s293
      %p295 = scmp.eq.s32.totalorder %s44, 0
      %p296 = por %p294, %p295
      %s298 = sadd.s32 %s297, 1
      %p301 = scmp.eq.s32.totalorder %s38, 1
      %p302 = scmp.ne.s32.totalorder %s297, %s299
      %p303 = scmp.eq.s32.totalorder %s38, 0
      %p304 = por %p302, %p303
      %p305 = scmp.ne.s32.totalorder %s297, %s299
      %p306 = scmp.eq.s32.totalorder %s43, 1
      %p307 = por %p305, %p306
      %p308 = scmp.ne.s32.totalorder %s299, %s300
      %p309 = scmp.eq.s32.totalorder %s43, 0
      %p310 = por %p308, %p309
      %p311 = scmp.ne.s32.totalorder %s299, %s300
      %p312 = scmp.eq.s32.totalorder %s44, 1
      %p313 = por %p311, %p312
      %p315 = scmp.ne.s32.totalorder %s300, %s314
      %p316 = scmp.eq.s32.totalorder %s44, 0
      %p317 = por %p315, %p316
      %s319 = sadd.s32 %s318, 1
      %p322 = scmp.eq.s32.totalorder %s38, 1
      %p323 = scmp.ne.s32.totalorder %s318, %s320
      %p324 = scmp.eq.s32.totalorder %s38, 0
      %p325 = por %p323, %p324
      %p326 = scmp.ne.s32.totalorder %s318, %s320
      %p327 = scmp.eq.s32.totalorder %s43, 1
      %p328 = por %p326, %p327
      %p329 = scmp.ne.s32.totalorder %s320, %s321
      %p330 = scmp.eq.s32.totalorder %s43, 0
      %p331 = por %p329, %p330
      %p332 = scmp.ne.s32.totalorder %s320, %s321
      %p333 = scmp.eq.s32.totalorder %s44, 1
      %p334 = por %p332, %p333
      %p336 = scmp.ne.s32.totalorder %s321, %s335
      %p337 = scmp.eq.s32.totalorder %s44, 0
      %p338 = por %p336, %p337
      %s340 = sadd.s32 %s339, 1
      %p343 = scmp.eq.s32.totalorder %s38, 1
      %p344 = scmp.ne.s32.totalorder %s339, %s341
      %p345 = scmp.eq.s32.totalorder %s38, 0
      %p346 = por %p344, %p345
      %p347 = scmp.ne.s32.totalorder %s339, %s341
      %p348 = scmp.eq.s32.totalorder %s43, 1
      %p349 = por %p347, %p348
      %p350 = scmp.ne.s32.totalorder %s341, %s342
      %p351 = scmp.eq.s32.totalorder %s43, 0
      %p352 = por %p350, %p351
      %p353 = scmp.ne.s32.totalorder %s341, %s342
      %p354 = scmp.eq.s32.totalorder %s44, 1
      %p355 = por %p353, %p354
      %p357 = scmp.ne.s32.totalorder %s342, %s356
      %p358 = scmp.eq.s32.totalorder %s44, 0
      %p359 = por %p357, %p358
      %s361 = sadd.s32 %s360, 1
      %p364 = scmp.eq.s32.totalorder %s38, 1
      %p365 = scmp.ne.s32.totalorder %s360, %s362
      %p366 = scmp.eq.s32.totalorder %s38, 0
      %p367 = por %p365, %p366
      %p368 = scmp.ne.s32.totalorder %s360, %s362
      %p369 = scmp.eq.s32.totalorder %s43, 1
      %p370 = por %p368, %p369
      %p371 = scmp.ne.s32.totalorder %s362, %s363
      %p372 = scmp.eq.s32.totalorder %s43, 0
      %p373 = por %p371, %p372
      %p374 = scmp.ne.s32.totalorder %s362, %s363
      %p375 = scmp.eq.s32.totalorder %s44, 1
      %p376 = por %p374, %p375
      %p378 = scmp.ne.s32.totalorder %s363, %s377
      %p379 = scmp.eq.s32.totalorder %s44, 0
      %p380 = por %p378, %p379
      %s382 = sadd.s32 %s381, 1
      %p385 = scmp.eq.s32.totalorder %s38, 1
      %p386 = scmp.ne.s32.totalorder %s381, %s383
      %p387 = scmp.eq.s32.totalorder %s38, 0
      %p388 = por %p386, %p387
      %p389 = scmp.ne.s32.totalorder %s381, %s383
      %p390 = scmp.eq.s32.totalorder %s43, 1
      %p391 = por %p389, %p390
      %p392 = scmp.ne.s32.totalorder %s383, %s384
      %p393 = scmp.eq.s32.totalorder %s43, 0
      %p394 = por %p392, %p393
      %p395 = scmp.ne.s32.totalorder %s383, %s384
      %p396 = scmp.eq.s32.totalorder %s44, 1
      %p397 = por %p395, %p396
      %p399 = scmp.ne.s32.totalorder %s384, %s398
      %p400 = scmp.eq.s32.totalorder %s44, 0
      %p401 = por %p399, %p400
      %s403 = sadd.s32 %s402, 1
      %p406 = scmp.eq.s32.totalorder %s38, 1
      %p407 = scmp.ne.s32.totalorder %s402, %s404
      %p408 = scmp.eq.s32.totalorder %s38, 0
      %p409 = por %p407, %p408
      %p410 = scmp.ne.s32.totalorder %s402, %s404
      %p411 = scmp.eq.s32.totalorder %s43, 1
      %p412 = por %p410, %p411
      %p413 = scmp.ne.s32.totalorder %s404, %s405
      %p414 = scmp.eq.s32.totalorder %s43, 0
      %p415 = por %p413, %p414
      %p416 = scmp.ne.s32.totalorder %s404, %s405
      %p417 = scmp.eq.s32.totalorder %s44, 1
      %p418 = por %p416, %p417
      %p420 = scmp.ne.s32.totalorder %s405, %s419
      %p421 = scmp.eq.s32.totalorder %s44, 0
      %p422 = por %p420, %p421
      %s424 = sadd.s32 %s423, 1
      %p427 = scmp.eq.s32.totalorder %s38, 1
      %p428 = scmp.ne.s32.totalorder %s423, %s425
      %p429 = scmp.eq.s32.totalorder %s38, 0
      %p430 = por %p428, %p429
      %p431 = scmp.ne.s32.totalorder %s423, %s425
      %p432 = scmp.eq.s32.totalorder %s43, 1
      %p433 = por %p431, %p432
      %p434 = scmp.ne.s32.totalorder %s425, %s426
      %p435 = scmp.eq.s32.totalorder %s43, 0
      %p436 = por %p434, %p435
      %p437 = scmp.ne.s32.totalorder %s425, %s426
      %p438 = scmp.eq.s32.totalorder %s44, 1
      %p439 = por %p437, %p438
      %p441 = scmp.ne.s32.totalorder %s426, %s440
      %p442 = scmp.eq.s32.totalorder %s44, 0
      %p443 = por %p441, %p442
      %s445 = sadd.s32 %s444, 1
      %p448 = scmp.eq.s32.totalorder %s38, 1
      %p449 = scmp.ne.s32.totalorder %s444, %s446
      %p450 = scmp.eq.s32.totalorder %s38, 0
      %p451 = por %p449, %p450
      %p452 = scmp.ne.s32.totalorder %s444, %s446
      %p453 = scmp.eq.s32.totalorder %s43, 1
      %p454 = por %p452, %p453
      %p455 = scmp.ne.s32.totalorder %s446, %s447
      %p456 = scmp.eq.s32.totalorder %s43, 0
      %p457 = por %p455, %p456
      %p458 = scmp.ne.s32.totalorder %s446, %s447
      %p459 = scmp.eq.s32.totalorder %s44, 1
      %p460 = por %p458, %p459
      %p462 = scmp.ne.s32.totalorder %s447, %s461
      %p463 = scmp.eq.s32.totalorder %s44, 0
      %p464 = por %p462, %p463
      %s465 = ssub.s32 %s38, %s45
      %p466 = scmp.eq.s32.totalorder %s465, 0
      %s468 = sadd.s32 %s467, 1
      %s469 = scalar_select %p466, %s467, %s468
      %p472 = pneg %p466
      %p473 = scmp.eq.s32.totalorder %s38, 1
      %p474 = por %p472, %p473
      %p475 = scmp.ne.s32.totalorder %s467, %s470
      %p476 = scmp.eq.s32.totalorder %s38, 0
      %p477 = por %p475, %p476
      %p478 = scmp.ne.s32.totalorder %s467, %s470
      %p479 = scmp.eq.s32.totalorder %s43, 1
      %p480 = por %p478, %p479
      %p481 = scmp.ne.s32.totalorder %s470, %s471
      %p482 = scmp.eq.s32.totalorder %s43, 0
      %p483 = por %p481, %p482
      %p484 = scmp.ne.s32.totalorder %s470, %s471
      %p485 = scmp.eq.s32.totalorder %s44, 1
      %p486 = por %p484, %p485
      %p488 = scmp.ne.s32.totalorder %s471, %s487
      %p489 = scmp.eq.s32.totalorder %s44, 0
      %p490 = por %p488, %p489
      %p491 = scmp.le.s32.totalorder 1, %s38
      %p492 = scmp.lt.s32.totalorder %s38, 3
      %p493 = pnand %p491, %p492
      %p494 = pneg %p493
      // Predicated region
      $region9: #{tpu_custom_call.1} parent=5 // pred_check
        _
      $region10: #{tpu_custom_call.1} parent=5 // pred_check_branch
        %496 = sbr.rel (%p493) target = $region12
      $region11: #{tpu_custom_call.1} parent=5 // pred_region
        %s497 = ssub.s32 %s38, 1
        // Predicated region
        $region13: #{tpu_custom_call.1} parent=11 // pred_check
          %p498 = pneg %p163
        $region14: #{tpu_custom_call.1} parent=11 // pred_check_branch
          %500 = sbr.rel (%p498) target = $region16
        $region15: #{tpu_custom_call.1} parent=11 // pred_region
          %s502 = ssub.s32 256, 256
          %503 = vsyncadd [#allocation6], %s502
          %s504 = sshll.u32 [#allocation7], 4
          %s505 = int_to_ptr.vmem [resolvable:$true] %s504
          %510 = dma.hbm_to_vmem [thread:$0]  %s4, 256, %s505, [#allocation6], 64, 64, 4
        $region16: #{tpu_custom_call.1} parent=11 // pred_fallthru
          _
        // Predicated region
        $region17: #{tpu_custom_call.1} parent=11 // pred_check
          %p511 = pneg %p184
        $region18: #{tpu_custom_call.1} parent=11 // pred_check_branch
          %513 = sbr.rel (%p511) target = $region20
        $region19: #{tpu_custom_call.1} parent=11 // pred_region
          _
        $region20: #{tpu_custom_call.1} parent=11 // pred_fallthru
          _
        // Predicated region
        $region21: #{tpu_custom_call.1} parent=11 // pred_check
          %p514 = pneg %p205
        $region22: #{tpu_custom_call.1} parent=11 // pred_check_branch
          %516 = sbr.rel (%p514) target = $region24
        $region23: #{tpu_custom_call.1} parent=11 // pred_region
          %s518 = ssub.s32 256, 256
          %519 = vsyncadd [#allocation9], %s518
          %s520 = sshll.u32 [#allocation8], 4
          %s521 = int_to_ptr.vmem [resolvable:$true] %s520
          %526 = dma.hbm_to_vmem [thread:$0]  %s6, 256, %s521, [#allocation9], 64, 64, 4
        $region24: #{tpu_custom_call.1} parent=11 // pred_fallthru
          _
        // Predicated region
        $region25: #{tpu_custom_call.1} parent=11 // pred_check
          %p527 = pneg %p226
        $region26: #{tpu_custom_call.1} parent=11 // pred_check_branch
          %529 = sbr.rel (%p527) target = $region28
        $region27: #{tpu_custom_call.1} parent=11 // pred_region
          %s531 = ssub.s32 16, 16
          %532 = vsyncadd [#allocation9], %s531
          %s534 = sshll.u32 [#allocation10], 4
          %s535 = int_to_ptr.vmem [resolvable:$true] %s534
          %537 = dma.hbm_to_vmem [thread:$0]  %s7, 16, %s535, [#allocation9]
        $region28: #{tpu_custom_call.1} parent=11 // pred_fallthru
          _
        // Predicated region
        $region29: #{tpu_custom_call.1} parent=11 // pred_check
          %p538 = pneg %p247
        $region30: #{tpu_custom_call.1} parent=11 // pred_check_branch
          %540 = sbr.rel (%p538) target = $region32
        $region31: #{tpu_custom_call.1} parent=11 // pred_region
          %s542 = ssub.s32 256, 256
          %543 = vsyncadd [#allocation12], %s542
          %s544 = sshll.u32 [#allocation11], 4
          %s545 = int_to_ptr.vmem [resolvable:$true] %s544
          %550 = dma.hbm_to_vmem [thread:$0]  %s8, 256, %s545, [#allocation12], 64, 64, 4
        $region32: #{tpu_custom_call.1} parent=11 // pred_fallthru
          _
        // Predicated region
        $region33: #{tpu_custom_call.1} parent=11 // pred_check
          %p551 = pneg %p268
        $region34: #{tpu_custom_call.1} parent=11 // pred_check_branch
          %553 = sbr.rel (%p551) target = $region36
        $region35: #{tpu_custom_call.1} parent=11 // pred_region
          %s555 = ssub.s32 16, 16
          %556 = vsyncadd [#allocation12], %s555
          %s558 = sshll.u32 [#allocation13], 4
          %s559 = int_to_ptr.vmem [resolvable:$true] %s558
          %561 = dma.hbm_to_vmem [thread:$0]  %s9, 16, %s559, [#allocation12]
        $region36: #{tpu_custom_call.1} parent=11 // pred_fallthru
          _
        // Predicated region
        $region37: #{tpu_custom_call.1} parent=11 // pred_check
          %p562 = pneg %p289
        $region38: #{tpu_custom_call.1} parent=11 // pred_check_branch
          %564 = sbr.rel (%p562) target = $region40
        $region39: #{tpu_custom_call.1} parent=11 // pred_region
          _
        $region40: #{tpu_custom_call.1} parent=11 // pred_fallthru
          _
        // Predicated region
        $region41: #{tpu_custom_call.1} parent=11 // pred_check
          %p565 = pneg %p310
        $region42: #{tpu_custom_call.1} parent=11 // pred_check_branch
          %567 = sbr.rel (%p565) target = $region44
        $region43: #{tpu_custom_call.1} parent=11 // pred_region
          %s569 = ssub.s32 16, 16
          %570 = vsyncadd [#allocation15], %s569
          %s572 = sshll.u32 [#allocation14], 4
          %s573 = int_to_ptr.vmem [resolvable:$true] %s572
          %575 = dma.hbm_to_vmem [thread:$0]  %s11, 16, %s573, [#allocation15]
        $region44: #{tpu_custom_call.1} parent=11 // pred_fallthru
          _
        // Predicated region
        $region45: #{tpu_custom_call.1} parent=11 // pred_check
          %p576 = pneg %p331
        $region46: #{tpu_custom_call.1} parent=11 // pred_check_branch
          %578 = sbr.rel (%p576) target = $region48
        $region47: #{tpu_custom_call.1} parent=11 // pred_region
          %s580 = ssub.s32 256, 256
          %581 = vsyncadd [#allocation15], %s580
          %s582 = sshll.u32 [#allocation16], 4
          %s583 = int_to_ptr.vmem [resolvable:$true] %s582
          %588 = dma.hbm_to_vmem [thread:$0]  %s12, 256, %s583, [#allocation15], 64, 64, 4
        $region48: #{tpu_custom_call.1} parent=11 // pred_fallthru
          _
        // Predicated region
        $region49: #{tpu_custom_call.1} parent=11 // pred_check
          %p589 = pneg %p352
        $region50: #{tpu_custom_call.1} parent=11 // pred_check_branch
          %591 = sbr.rel (%p589) target = $region52
        $region51: #{tpu_custom_call.1} parent=11 // pred_region
          %s593 = ssub.s32 16, 16
          %594 = vsyncadd [#allocation18], %s593
          %s596 = sshll.u32 [#allocation17], 4
          %s597 = int_to_ptr.vmem [resolvable:$true] %s596
          %599 = dma.hbm_to_vmem [thread:$0]  %s13, 16, %s597, [#allocation18]
        $region52: #{tpu_custom_call.1} parent=11 // pred_fallthru
          _
        // Predicated region
        $region53: #{tpu_custom_call.1} parent=11 // pred_check
          %p600 = pneg %p373
        $region54: #{tpu_custom_call.1} parent=11 // pred_check_branch
          %602 = sbr.rel (%p600) target = $region56
        $region55: #{tpu_custom_call.1} parent=11 // pred_region
          %s604 = ssub.s32 96, 96
          %605 = vsyncadd [#allocation18], %s604
          %s606 = sshll.u32 [#allocation19], 4
          %s607 = int_to_ptr.vmem [resolvable:$true] %s606
          %612 = dma.hbm_to_vmem [thread:$0]  %s14, 96, %s607, [#allocation18], 32, 32, 2
        $region56: #{tpu_custom_call.1} parent=11 // pred_fallthru
          _
        // Predicated region
        $region57: #{tpu_custom_call.1} parent=11 // pred_check
          %p613 = pneg %p394
        $region58: #{tpu_custom_call.1} parent=11 // pred_check_branch
          %615 = sbr.rel (%p613) target = $region60
        $region59: #{tpu_custom_call.1} parent=11 // pred_region
          _
        $region60: #{tpu_custom_call.1} parent=11 // pred_fallthru
          _
        // Predicated region
        $region61: #{tpu_custom_call.1} parent=11 // pred_check
          %p616 = pneg %p415
        $region62: #{tpu_custom_call.1} parent=11 // pred_check_branch
          %618 = sbr.rel (%p616) target = $region64
        $region63: #{tpu_custom_call.1} parent=11 // pred_region
          _
        $region64: #{tpu_custom_call.1} parent=11 // pred_fallthru
          _
        // Predicated region
        $region65: #{tpu_custom_call.1} parent=11 // pred_check
          %p619 = pneg %p436
        $region66: #{tpu_custom_call.1} parent=11 // pred_check_branch
          %621 = sbr.rel (%p619) target = $region68
        $region67: #{tpu_custom_call.1} parent=11 // pred_region
          _
        $region68: #{tpu_custom_call.1} parent=11 // pred_fallthru
          _
        // Predicated region
        $region69: #{tpu_custom_call.1} parent=11 // pred_check
          %p622 = pneg %p457
        $region70: #{tpu_custom_call.1} parent=11 // pred_check_branch
          %624 = sbr.rel (%p622) target = $region72
        $region71: #{tpu_custom_call.1} parent=11 // pred_region
          _
        $region72: #{tpu_custom_call.1} parent=11 // pred_fallthru
          _
      $region12: #{tpu_custom_call.1} parent=5 // pred_fallthru
        _
      %p625 = scmp.lt.s32.totalorder %s38, 2
      // Predicated region
      $region73: #{tpu_custom_call.1} parent=5 // pred_check
        %p626 = pneg %p625
      $region74: #{tpu_custom_call.1} parent=5 // pred_check_branch
        %628 = sbr.rel (%p626) target = $region76
      $region75: #{tpu_custom_call.1} parent=5 // pred_region
        // Predicated region
        $region77: #{tpu_custom_call.1} parent=75 // pred_check
          %p629 = pneg %p58
        $region78: #{tpu_custom_call.1} parent=75 // pred_check_branch
          %631 = sbr.rel (%p629) target = $region80
        $region79: #{tpu_custom_call.1} parent=75 // pred_region
          %p632 = scmp.lt.s32.totalorder %s38, 1
          %s633 = scalar_select %p632, %s38, 1
          %s634 = smul.addr %s633, 8
          %s635 = scalar_lea.vmem %s0, %s634
        $region80: #{tpu_custom_call.1} parent=75 // pred_fallthru
          _
        // Predicated region
        $region81: #{tpu_custom_call.1} parent=75 // pred_check
          %p636 = pneg %p84
        $region82: #{tpu_custom_call.1} parent=75 // pred_check_branch
          %638 = sbr.rel (%p636) target = $region84
        $region83: #{tpu_custom_call.1} parent=75 // pred_region
          %p639 = scmp.lt.s32.totalorder %s38, 1
          %s640 = scalar_select %p639, %s38, 1
          %s641 = smul.addr %s640, 2
          %s642 = smul.addr %s641, 8
          %s643 = scalar_lea.vmem %s1, %s642
        $region84: #{tpu_custom_call.1} parent=75 // pred_fallthru
          _
        // Predicated region
        $region85: #{tpu_custom_call.1} parent=75 // pred_check
          %p644 = pneg %p110
        $region86: #{tpu_custom_call.1} parent=75 // pred_check_branch
          %646 = sbr.rel (%p644) target = $region88
        $region87: #{tpu_custom_call.1} parent=75 // pred_region
          %s647 = sand.u32 %s100, 1
          %s648 = scalar_lea.sflag [#allocation3], %s647
          %s649 = sand.u32 %s100, 1
          %s650 = scalar_lea.vmem [#allocation2], %s649
          %s652 = ssub.s32 16, 16
          %653 = vsyncadd %s648, %s652
          %s654 = smul.addr %s38, 16
          %s655 = scalar_lea.hbm %s2, %s654
          %s657 = sshll.u32 %s650, 4
          %s658 = int_to_ptr.vmem [resolvable:$true] %s657
          %660 = dma.hbm_to_vmem [thread:$0]  %s655, 16, %s658, %s648
        $region88: #{tpu_custom_call.1} parent=75 // pred_fallthru
          _
        // Predicated region
        $region89: #{tpu_custom_call.1} parent=75 // pred_check
          %p661 = pneg %p136
        $region90: #{tpu_custom_call.1} parent=75 // pred_check_branch
          %663 = sbr.rel (%p661) target = $region92
        $region91: #{tpu_custom_call.1} parent=75 // pred_region
          %s664 = sand.u32 %s38, 1
          %s665 = scalar_lea.sflag [#allocation6], %s664
          %s666 = sand.u32 %s126, 1
          %s667 = scalar_lea.vmem [#allocation5], %s666
          %s669 = ssub.s32 16, 16
          %670 = vsyncadd %s665, %s669
          %s671 = smul.addr %s38, 16
          %s672 = scalar_lea.hbm %s3, %s671
          %s674 = sshll.u32 %s667, 4
          %s675 = int_to_ptr.vmem [resolvable:$true] %s674
          %677 = dma.hbm_to_vmem [thread:$0]  %s672, 16, %s675, %s665
        $region92: #{tpu_custom_call.1} parent=75 // pred_fallthru
          _
      $region76: #{tpu_custom_call.1} parent=5 // pred_fallthru
        _
      %p678 = scmp.le.s32.totalorder 1, %s38
      %p679 = scmp.lt.s32.totalorder %s38, 3
      %p680 = pnand %p678, %p679
      %p681 = pneg %p680
      // Predicated region
      $region93: #{tpu_custom_call.1} parent=5 // pred_check
        _
      $region94: #{tpu_custom_call.1} parent=5 // pred_check_branch
        %683 = sbr.rel (%p680) target = $region96
      $region95: #{tpu_custom_call.1} parent=5 // pred_region
        %s684 = ssub.s32 %s38, 1
        %s685 = sand.u32 %s103, 1
        %s686 = scalar_lea.sflag [#allocation3], %s685
        %s687 = sand.u32 %s103, 1
        %s688 = scalar_lea.vmem [#allocation2], %s687
        // Predicated region
        $region97: #{tpu_custom_call.1} parent=95 // pred_check
          %p689 = pneg %p116
        $region98: #{tpu_custom_call.1} parent=95 // pred_check_branch
          %691 = sbr.rel (%p689) target = $region100
        $region99: #{tpu_custom_call.1} parent=95 // pred_region
          %692 = dma.done %s686, 16
        $region100: #{tpu_custom_call.1} parent=95 // pred_fallthru
          _
        %s693 = sand.u32 %s43, 1
        %s694 = scalar_lea.sflag [#allocation6], %s693
        %s695 = sand.u32 %s129, 1
        %s696 = scalar_lea.vmem [#allocation5], %s695
        // Predicated region
        $region101: #{tpu_custom_call.1} parent=95 // pred_check
          %p697 = pneg %p142
        $region102: #{tpu_custom_call.1} parent=95 // pred_check_branch
          %699 = sbr.rel (%p697) target = $region104
        $region103: #{tpu_custom_call.1} parent=95 // pred_region
          %700 = dma.done %s694, 16
        $region104: #{tpu_custom_call.1} parent=95 // pred_fallthru
          _
        // Predicated region
        $region105: #{tpu_custom_call.1} parent=95 // pred_check
          %p701 = pneg %p163
        $region106: #{tpu_custom_call.1} parent=95 // pred_check_branch
          %703 = sbr.rel (%p701) target = $region108
        $region107: #{tpu_custom_call.1} parent=95 // pred_region
          %704 = dma.done [#allocation6], 256
        $region108: #{tpu_custom_call.1} parent=95 // pred_fallthru
          _
        // Predicated region
        $region109: #{tpu_custom_call.1} parent=95 // pred_check
          %p705 = pneg %p205
        $region110: #{tpu_custom_call.1} parent=95 // pred_check_branch
          %707 = sbr.rel (%p705) target = $region112
        $region111: #{tpu_custom_call.1} parent=95 // pred_region
          %708 = dma.done [#allocation9], 256
        $region112: #{tpu_custom_call.1} parent=95 // pred_fallthru
          _
        // Predicated region
        $region113: #{tpu_custom_call.1} parent=95 // pred_check
          %p709 = pneg %p226
        $region114: #{tpu_custom_call.1} parent=95 // pred_check_branch
          %711 = sbr.rel (%p709) target = $region116
        $region115: #{tpu_custom_call.1} parent=95 // pred_region
          %712 = dma.done [#allocation9], 16
        $region116: #{tpu_custom_call.1} parent=95 // pred_fallthru
          _
        // Predicated region
        $region117: #{tpu_custom_call.1} parent=95 // pred_check
          %p713 = pneg %p247
        $region118: #{tpu_custom_call.1} parent=95 // pred_check_branch
          %715 = sbr.rel (%p713) target = $region120
        $region119: #{tpu_custom_call.1} parent=95 // pred_region
          %716 = dma.done [#allocation12], 256
        $region120: #{tpu_custom_call.1} parent=95 // pred_fallthru
          _
        // Predicated region
        $region121: #{tpu_custom_call.1} parent=95 // pred_check
          %p717 = pneg %p268
        $region122: #{tpu_custom_call.1} parent=95 // pred_check_branch
          %719 = sbr.rel (%p717) target = $region124
        $region123: #{tpu_custom_call.1} parent=95 // pred_region
          %720 = dma.done [#allocation12], 16
        $region124: #{tpu_custom_call.1} parent=95 // pred_fallthru
          _
        // Predicated region
        $region125: #{tpu_custom_call.1} parent=95 // pred_check
          %p721 = pneg %p310
        $region126: #{tpu_custom_call.1} parent=95 // pred_check_branch
          %723 = sbr.rel (%p721) target = $region128
        $region127: #{tpu_custom_call.1} parent=95 // pred_region
          %724 = dma.done [#allocation15], 16
        $region128: #{tpu_custom_call.1} parent=95 // pred_fallthru
          _
        // Predicated region
        $region129: #{tpu_custom_call.1} parent=95 // pred_check
          %p725 = pneg %p331
        $region130: #{tpu_custom_call.1} parent=95 // pred_check_branch
          %727 = sbr.rel (%p725) target = $region132
        $region131: #{tpu_custom_call.1} parent=95 // pred_region
          %728 = dma.done [#allocation15], 256
        $region132: #{tpu_custom_call.1} parent=95 // pred_fallthru
          _
        // Predicated region
        $region133: #{tpu_custom_call.1} parent=95 // pred_check
          %p729 = pneg %p352
        $region134: #{tpu_custom_call.1} parent=95 // pred_check_branch
          %731 = sbr.rel (%p729) target = $region136
        $region135: #{tpu_custom_call.1} parent=95 // pred_region
          %732 = dma.done [#allocation18], 16
        $region136: #{tpu_custom_call.1} parent=95 // pred_fallthru
          _
        // Predicated region
        $region137: #{tpu_custom_call.1} parent=95 // pred_check
          %p733 = pneg %p373
        $region138: #{tpu_custom_call.1} parent=95 // pred_check_branch
          %735 = sbr.rel (%p733) target = $region140
        $region139: #{tpu_custom_call.1} parent=95 // pred_region
          %736 = dma.done [#allocation18], 96
        $region140: #{tpu_custom_call.1} parent=95 // pred_fallthru
          _
        %p737 = scmp.lt.s32.totalorder %s43, 1
        %s738 = scalar_select %p737, %s43, 1
        %s739 = smul.addr %s738, 8
        %s740 = scalar_lea.vmem %s0, %s739
        %p741 = pneg %p64
        %p742 = pneg %p61
        %p743 = scmp.lt.s32.totalorder %s43, 1
        %s744 = scalar_select %p743, %s43, 1
        %s745 = smul.addr %s744, 2
        %s746 = smul.addr %s745, 8
        %s747 = scalar_lea.vmem %s1, %s746
        %p748 = pneg %p90
        %p749 = pneg %p87
        %s750 = sand.u32 %s103, 1
        %s751 = scalar_lea.sflag [#allocation3], %s750
        %s752 = sand.u32 %s103, 1
        %s753 = scalar_lea.vmem [#allocation2], %s752
        %p754 = pneg %p116
        %p755 = pneg %p113
        %s756 = sand.u32 %s43, 1
        %s757 = scalar_lea.sflag [#allocation6], %s756
        %s758 = sand.u32 %s129, 1
        %s759 = scalar_lea.vmem [#allocation5], %s758
        %p760 = pneg %p142
        %p761 = pneg %p139
        %p762 = pneg %p163
        %p763 = pneg %p160
        %p764 = pneg %p184
        %p765 = pneg %p181
        %p766 = pneg %p205
        %p767 = pneg %p202
        %p768 = pneg %p226
        %p769 = pneg %p223
        %p770 = pneg %p247
        %p771 = pneg %p244
        %p772 = pneg %p268
        %p773 = pneg %p265
        %p774 = pneg %p289
        %p775 = pneg %p286
        %p776 = pneg %p310
        %p777 = pneg %p307
        %p778 = pneg %p331
        %p779 = pneg %p328
        %p780 = pneg %p352
        %p781 = pneg %p349
        %p782 = pneg %p373
        %p783 = pneg %p370
        %p784 = pneg %p394
        %p785 = pneg %p391
        %p786 = pneg %p415
        %p787 = pneg %p412
        %p788 = pneg %p436
        %p789 = pneg %p433
        %p790 = pneg %p457
        %p791 = pneg %p454
        %p792 = pneg %p483
        %p793 = pneg %p480
        %s794 = sand.u32 %s470, 1
        %s795 = scalar_lea.sflag [#allocation4], %s794
        %s796 = sand.u32 %s470, 1
        %s797 = smul.addr %s796, 8
        %s798 = scalar_lea.vmem [#allocation20], %s797
        %p799 = scmp.lt.s32.totalorder %s43, 1
        %s800 = scalar_select %p799, %s43, 1
        %s801 = smul.addr %s800, 8
        %s802 = scalar_lea.vmem %s0, %s801
        %p803 = scmp.lt.s32.totalorder %s43, 1
        %s804 = scalar_select %p803, %s43, 1
        %s805 = smul.addr %s804, 2
        %s806 = smul.addr %s805, 8
        %s807 = scalar_lea.vmem %s1, %s806
        %v809 = vld [vmem:[%s802] sm:$0xff]
        %v810 = vld [vmem:[%s807] sm:$0xff]
        %v811 = vld [vmem:[%s807 + $0x8] sm:$0xff]
        %v812 = vld [vmem:[%s688] sm:$0x1]
        %vm813 = vcmp.gt.f32.partialorder %v812, 0.0
        %v814 = vsel %vm813, 1, 0
        %v815 = vlaneseq
        %v816 = vshrl.u32 %v815, 7
        %v817 = vsub.s32 0, %v816
        %v818 = vrot.slane %v814, %v817
        %vm819 = vcmp.eq.s32.totalorder %v818, 1
        %v820 = vlaneseq
        %v821 = vshrl.u32 %v820, 7
        %v822 = vlaneseq
        %v823 = vand.u32 %v822, 127
        %vm824 = vcmp.le.s32.totalorder %v823, %v821
        %vm825 = vmand %vm819, %vm824
        %v826 = vsel %vm825, 0.0, -1e+09
        %v827 = vld [vmem:[%s696] sm:$0x1]
        %vm828 = vcmp.gt.f32.partialorder %v827, 0.0
        %v829 = vsel %vm828, 1, 0
        %v830 = vlaneseq
        %v831 = vshrl.u32 %v830, 7
        %v832 = vsub.s32 0, %v831
        %v833 = vrot.slane %v829, %v832
        %vm834 = vcmp.eq.s32.totalorder %v833, 1
        %v835 = vsel %vm834, 0.0, -1e+09
        %v836 = vld [vmem:[#allocation19] sm:$0x1]
        %v837 = vld [vmem:[#allocation19 + $0x1] sm:$0x1]
        %vm838 = vcmask 261120
        %v839 = vsel %vm838, %v809, 0.0
        %840 = vadd.xlane.f32.xlu0 %v839
        %v841 = vpop.xlane.xlu0 %840
        %v842 = vrcp.pop 32.0
        %v843 = vmul.f32 %v841, %v842
        %v844 = vsub.f32 %v809, %v843
        %v845 = vmul.f32 %v844, %v844
        %v846 = vsel %vm838, %v845, 0.0
        %847 = vadd.xlane.f32.xlu0 %v846
        %v848 = vpop.xlane.xlu0 %847
        %v849 = vmul.f32 %v848, %v842
        %v850 = vadd.f32 %v849, 1e-05
        %v851 = vrsqrt.pop %v850
        %v852 = vmul.f32 %v844, %v851
        %v853 = vlaneseq
        %v854 = vshrl.u32 %v853, 7
        %v855 = vsub.s32 0, %v854
        %v856 = vrot.slane %v836, %v855
        %v857 = vmul.f32 %v852, %v856
        %v858 = vlaneseq
        %v859 = vshrl.u32 %v858, 7
        %v860 = vsub.s32 0, %v859
        %v861 = vrot.slane %v837, %v860
        %v862 = vadd.f32 %v857, %v861
        %v863 = vpack.c.bf16 %v862, %v862
        %v864 = vld [vmem:[#allocation7] sm:$0xf]
        %v865 = vld [vmem:[#allocation7 + $0x4] sm:$0xf]
        %v866 = vld [vmem:[#allocation7 + $0x8] sm:$0xf]
        %v867 = vld [vmem:[#allocation7 + $0xc] sm:$0xf]
        %v868 = vld [vmem:[%s5] sm:$0x1]
        %v870 = vlaneseq
        %v871 = vshrl.u32 %v870, 7
        %v872 = vsub.s32 0, %v871
        %v873 = vrot.slane %v868, %v872
        %v879 = vunpack.c.l.b16 %v864
        %v880 = vunpack.c.l.b16 %v865
        %v881 = vunpack.c.l.b16 %v866
        %v882 = vunpack.c.l.b16 %v867
        %v883 = vpack.c.b16 %v880, %v879
        %v884 = vpack.c.b16 %v882, %v881
        %v888 = vsel %vm838, %v863, 0
        %890 = vmatprep.subr.bf16.mxu0 0
        %891 = vmatpush1.bf16.msra.mxu0 %v883
        %892 = vmatprep.subr.bf16.mxu0 0
        %893 = vmatpush1.bf16.msra.mxu0 %v884
        %894 = vmatprep.subr.bf16.mxu0 0
        %895 = vmatpush1.bf16.msra.mxu0 0
        %896 = vmatprep.subr.bf16.mxu0 0
        %897 = vmatpush1.bf16.msra.mxu0 0
        %898 = vmatprep.subr.bf16.mxu0 0
        %899 = vmatpush1.bf16.msra.mxu0 0
        %900 = vmatprep.subr.bf16.mxu0 0
        %901 = vmatpush1.bf16.msra.mxu0 0
        %902 = vmatprep.subr.bf16.mxu0 0
        %903 = vmatpush1.bf16.msra.mxu0 0
        %904 = vmatprep.subr.bf16.mxu0 0
        %905 = vmatpush1.bf16.msra.mxu0 0
        %906 = vmatprep.subr.bf16.mxu0 0
        %907 = vmatpush1.bf16.msra.mxu0 0
        %908 = vmatprep.subr.bf16.mxu0 0
        %909 = vmatpush1.bf16.msra.mxu0 0
        %910 = vmatprep.subr.bf16.mxu0 0
        %911 = vmatpush1.bf16.msra.mxu0 0
        %912 = vmatprep.subr.bf16.mxu0 0
        %913 = vmatpush1.bf16.msra.mxu0 0
        %914 = vmatprep.subr.bf16.mxu0 0
        %915 = vmatpush1.bf16.msra.mxu0 0
        %916 = vmatprep.subr.bf16.mxu0 0
        %917 = vmatpush1.bf16.msra.mxu0 0
        %918 = vmatprep.subr.bf16.mxu0 0
        %919 = vmatpush1.bf16.msra.mxu0 0
        %920 = vmatprep.subr.bf16.mxu0 0
        %921 = vmatpush1.bf16.msra.mxu0 0
        %922 = vmatprep.mubr.bf16.mxu0 0
        %923 = vmatmul.mubr.bf16.gmra.mrb[0].mxu0 %v888
        %v924 = vpop.f32.mrb[0].mxu0
        %v925 = vadd.f32 %v873, %v924
        %v926 = vpop.f32.mrb[0].mxu0
        %v927 = vpop.f32.mrb[0].mxu0
        %v928 = vpop.f32.mrb[0].mxu0
        %929 = vdwg.mxu0
        %v930 = vpack.c.bf16 %v925, %v925
        %932 = vrot.lane.b32.xlu0 %v930, 120
        %v933 = vpop.permute.xlu0 %932
        %934 = vrot.lane.b32.xlu0 %v930, 112
        %v935 = vpop.permute.xlu0 %934
        %936 = vrot.lane.b32.xlu0 %v930, 104
        %v937 = vpop.permute.xlu0 %936
        %938 = vrot.lane.b32.xlu0 %v930, 96
        %v939 = vpop.permute.xlu0 %938
        %vm940 = vcmask 64512
        %v942 = vsel %vm940, %v930, 0
        %v945 = vsel %vm940, %v939, 0
        %947 = vmatprep.subr.bf16.mxu0 0
        %948 = vmatpush1.bf16.xpose.msra.mxu0 %v945
        %949 = vmatprep.subr.bf16.mxu0 0
        %950 = vmatpush1.bf16.xpose.msra.mxu0 0
        %951 = vmatprep.subr.bf16.mxu0 0
        %952 = vmatpush1.bf16.xpose.msra.mxu0 0
        %953 = vmatprep.subr.bf16.mxu0 0
        %954 = vmatpush1.bf16.xpose.msra.mxu0 0
        %955 = vmatprep.subr.bf16.mxu0 0
        %956 = vmatpush1.bf16.xpose.msra.mxu0 0
        %957 = vmatprep.subr.bf16.mxu0 0
        %958 = vmatpush1.bf16.xpose.msra.mxu0 0
        %959 = vmatprep.subr.bf16.mxu0 0
        %960 = vmatpush1.bf16.xpose.msra.mxu0 0
        %961 = vmatprep.subr.bf16.mxu0 0
        %962 = vmatpush1.bf16.xpose.msra.mxu0 0
        %963 = vmatprep.subr.bf16.mxu0 0
        %964 = vmatpush1.bf16.xpose.msra.mxu0 0
        %965 = vmatprep.subr.bf16.mxu0 0
        %966 = vmatpush1.bf16.xpose.msra.mxu0 0
        %967 = vmatprep.subr.bf16.mxu0 0
        %968 = vmatpush1.bf16.xpose.msra.mxu0 0
        %969 = vmatprep.subr.bf16.mxu0 0
        %970 = vmatpush1.bf16.xpose.msra.mxu0 0
        %971 = vmatprep.subr.bf16.mxu0 0
        %972 = vmatpush1.bf16.xpose.msra.mxu0 0
        %973 = vmatprep.subr.bf16.mxu0 0
        %974 = vmatpush1.bf16.xpose.msra.mxu0 0
        %975 = vmatprep.subr.bf16.mxu0 0
        %976 = vmatpush1.bf16.xpose.msra.mxu0 0
        %977 = vmatprep.subr.bf16.mxu0 0
        %978 = vmatpush1.bf16.xpose.msra.mxu0 0
        %979 = vmatprep.mubr.bf16.mxu0 0
        %980 = vmatmul.mubr.bf16.gmra.mrb[0].mxu0 %v942
        %v981 = vpop.f32.mrb[0].mxu0
        %v982 = vadd.f32 %v826, %v981
        %v983 = vpop.f32.mrb[0].mxu0
        %v984 = vpop.f32.mrb[0].mxu0
        %v985 = vpop.f32.mrb[0].mxu0
        %986 = vdwg.mxu0
        %987 = vrot.lane.b32.xlu0 %v933, 96
        %v988 = vpop.permute.xlu0 %987
        %v990 = vsel %vm940, %v933, 0
        %v993 = vsel %vm940, %v988, 0
        %995 = vmatprep.subr.bf16.mxu0 0
        %996 = vmatpush1.bf16.xpose.msra.mxu0 %v993
        %997 = vmatprep.subr.bf16.mxu0 0
        %998 = vmatpush1.bf16.xpose.msra.mxu0 0
        %999 = vmatprep.subr.bf16.mxu0 0
        %1000 = vmatpush1.bf16.xpose.msra.mxu0 0
        %1001 = vmatprep.subr.bf16.mxu0 0
        %1002 = vmatpush1.bf16.xpose.msra.mxu0 0
        %1003 = vmatprep.subr.bf16.mxu0 0
        %1004 = vmatpush1.bf16.xpose.msra.mxu0 0
        %1005 = vmatprep.subr.bf16.mxu0 0
        %1006 = vmatpush1.bf16.xpose.msra.mxu0 0
        %1007 = vmatprep.subr.bf16.mxu0 0
        %1008 = vmatpush1.bf16.xpose.msra.mxu0 0
        %1009 = vmatprep.subr.bf16.mxu0 0
        %1010 = vmatpush1.bf16.xpose.msra.mxu0 0
        %1011 = vmatprep.subr.bf16.mxu0 0
        %1012 = vmatpush1.bf16.xpose.msra.mxu0 0
        %1013 = vmatprep.subr.bf16.mxu0 0
        %1014 = vmatpush1.bf16.xpose.msra.mxu0 0
        %1015 = vmatprep.subr.bf16.mxu0 0
        %1016 = vmatpush1.bf16.xpose.msra.mxu0 0
        %1017 = vmatprep.subr.bf16.mxu0 0
        %1018 = vmatpush1.bf16.xpose.msra.mxu0 0
        %1019 = vmatprep.subr.bf16.mxu0 0
        %1020 = vmatpush1.bf16.xpose.msra.mxu0 0
        %1021 = vmatprep.subr.bf16.mxu0 0
        %1022 = vmatpush1.bf16.xpose.msra.mxu0 0
        %1023 = vmatprep.subr.bf16.mxu0 0
        %1024 = vmatpush1.bf16.xpose.msra.mxu0 0
        %1025 = vmatprep.subr.bf16.mxu0 0
        %1026 = vmatpush1.bf16.xpose.msra.mxu0 0
        %1027 = vmatprep.mubr.bf16.mxu0 0
        %1028 = vmatmul.mubr.bf16.gmra.mrb[0].mxu0 %v990
        %v1029 = vpop.f32.mrb[0].mxu0
        %v1030 = vadd.f32 %v826, %v1029
        %v1031 = vpop.f32.mrb[0].mxu0
        %v1032 = vpop.f32.mrb[0].mxu0
        %v1033 = vpop.f32.mrb[0].mxu0
        %1034 = vdwg.mxu0
        %1035 = vrot.lane.b32.xlu0 %v935, 96
        %v1036 = vpop.permute.xlu0 %1035
        %v1038 = vsel %vm940, %v935, 0
        %v1041 = vsel %vm940, %v1036, 0
        %1043 = vmatprep.subr.bf16.mxu0 0
        %1044 = vmatpush1.bf16.xpose.msra.mxu0 %v1041
        %1045 = vmatprep.subr.bf16.mxu0 0
        %1046 = vmatpush1.bf16.xpose.msra.mxu0 0
        %1047 = vmatprep.subr.bf16.mxu0 0
        %1048 = vmatpush1.bf16.xpose.msra.mxu0 0
        %1049 = vmatprep.subr.bf16.mxu0 0
        %1050 = vmatpush1.bf16.xpose.msra.mxu0 0
        %1051 = vmatprep.subr.bf16.mxu0 0
        %1052 = vmatpush1.bf16.xpose.msra.mxu0 0
        %1053 = vmatprep.subr.bf16.mxu0 0
        %1054 = vmatpush1.bf16.xpose.msra.mxu0 0
        %1055 = vmatprep.subr.bf16.mxu0 0
        %1056 = vmatpush1.bf16.xpose.msra.mxu0 0
        %1057 = vmatprep.subr.bf16.mxu0 0
        %1058 = vmatpush1.bf16.xpose.msra.mxu0 0
        %1059 = vmatprep.subr.bf16.mxu0 0
        %1060 = vmatpush1.bf16.xpose.msra.mxu0 0
        %1061 = vmatprep.subr.bf16.mxu0 0
        %1062 = vmatpush1.bf16.xpose.msra.mxu0 0
        %1063 = vmatprep.subr.bf16.mxu0 0
        %1064 = vmatpush1.bf16.xpose.msra.mxu0 0
        %1065 = vmatprep.subr.bf16.mxu0 0
        %1066 = vmatpush1.bf16.xpose.msra.mxu0 0
        %1067 = vmatprep.subr.bf16.mxu0 0
        %1068 = vmatpush1.bf16.xpose.msra.mxu0 0
        %1069 = vmatprep.subr.bf16.mxu0 0
        %1070 = vmatpush1.bf16.xpose.msra.mxu0 0
        %1071 = vmatprep.subr.bf16.mxu0 0
        %1072 = vmatpush1.bf16.xpose.msra.mxu0 0
        %1073 = vmatprep.subr.bf16.mxu0 0
        %1074 = vmatpush1.bf16.xpose.msra.mxu0 0
        %1075 = vmatprep.mubr.bf16.mxu0 0
        %1076 = vmatmul.mubr.bf16.gmra.mrb[0].mxu0 %v1038
        %v1077 = vpop.f32.mrb[0].mxu0
        %v1078 = vadd.f32 %v826, %v1077
        %v1079 = vpop.f32.mrb[0].mxu0
        %v1080 = vpop.f32.mrb[0].mxu0
        %v1081 = vpop.f32.mrb[0].mxu0
        %1082 = vdwg.mxu0
        %1083 = vrot.lane.b32.xlu0 %v937, 96
        %v1084 = vpop.permute.xlu0 %1083
        %v1086 = vsel %vm940, %v937, 0
        %v1089 = vsel %vm940, %v1084, 0
        %1091 = vmatprep.subr.bf16.mxu0 0
        %1092 = vmatpush1.bf16.xpose.msra.mxu0 %v1089
        %1093 = vmatprep.subr.bf16.mxu0 0
        %1094 = vmatpush1.bf16.xpose.msra.mxu0 0
        %1095 = vmatprep.subr.bf16.mxu0 0
        %1096 = vmatpush1.bf16.xpose.msra.mxu0 0
        %1097 = vmatprep.subr.bf16.mxu0 0
        %1098 = vmatpush1.bf16.xpose.msra.mxu0 0
        %1099 = vmatprep.subr.bf16.mxu0 0
        %1100 = vmatpush1.bf16.xpose.msra.mxu0 0
        %1101 = vmatprep.subr.bf16.mxu0 0
        %1102 = vmatpush1.bf16.xpose.msra.mxu0 0
        %1103 = vmatprep.subr.bf16.mxu0 0
        %1104 = vmatpush1.bf16.xpose.msra.mxu0 0
        %1105 = vmatprep.subr.bf16.mxu0 0
        %1106 = vmatpush1.bf16.xpose.msra.mxu0 0
        %1107 = vmatprep.subr.bf16.mxu0 0
        %1108 = vmatpush1.bf16.xpose.msra.mxu0 0
        %1109 = vmatprep.subr.bf16.mxu0 0
        %1110 = vmatpush1.bf16.xpose.msra.mxu0 0
        %1111 = vmatprep.subr.bf16.mxu0 0
        %1112 = vmatpush1.bf16.xpose.msra.mxu0 0
        %1113 = vmatprep.subr.bf16.mxu0 0
        %1114 = vmatpush1.bf16.xpose.msra.mxu0 0
        %1115 = vmatprep.subr.bf16.mxu0 0
        %1116 = vmatpush1.bf16.xpose.msra.mxu0 0
        %1117 = vmatprep.subr.bf16.mxu0 0
        %1118 = vmatpush1.bf16.xpose.msra.mxu0 0
        %1119 = vmatprep.subr.bf16.mxu0 0
        %1120 = vmatpush1.bf16.xpose.msra.mxu0 0
        %1121 = vmatprep.subr.bf16.mxu0 0
        %1122 = vmatpush1.bf16.xpose.msra.mxu0 0
        %1123 = vmatprep.mubr.bf16.mxu0 0
        %1124 = vmatmul.mubr.bf16.gmra.mrb[0].mxu0 %v1086
        %v1125 = vpop.f32.mrb[0].mxu0
        %v1126 = vadd.f32 %v826, %v1125
        %v1127 = vpop.f32.mrb[0].mxu0
        %v1128 = vpop.f32.mrb[0].mxu0
        %v1129 = vpop.f32.mrb[0].mxu0
        %1130 = vdwg.mxu0
        %v1131 = vsel %vm940, %v982, -inf
        %1132 = vmax.xlane.f32.xlu0 %v1131
        %v1133 = vpop.xlane.xlu0 %1132
        %v1134 = vsel %vm940, %v1030, -inf
        %1135 = vmax.xlane.f32.xlu0 %v1134
        %v1136 = vpop.xlane.xlu0 %1135
        %v1137 = vsel %vm940, %v1078, -inf
        %1138 = vmax.xlane.f32.xlu0 %v1137
        %v1139 = vpop.xlane.xlu0 %1138
        %v1140 = vsel %vm940, %v1126, -inf
        %1141 = vmax.xlane.f32.xlu0 %v1140
        %v1142 = vpop.xlane.xlu0 %1141
        %v1143 = vsub.f32 %v982, %v1133
        %v1144 = vsub.f32 %v1030, %v1136
        %v1145 = vsub.f32 %v1078, %v1139
        %v1146 = vsub.f32 %v1126, %v1142
        %v1147 = vmul.f32 %v1143, 1.442695
        %v1148 = vpow.pop %v1147
        %v1149 = vmul.f32 %v1144, 1.442695
        %v1150 = vpow.pop %v1149
        %v1151 = vmul.f32 %v1145, 1.442695
        %v1152 = vpow.pop %v1151
        %v1153 = vmul.f32 %v1146, 1.442695
        %v1154 = vpow.pop %v1153
        %v1155 = vsel %vm940, %v1148, 0.0
        %1156 = vadd.xlane.f32.xlu0 %v1155
        %v1157 = vpop.xlane.xlu0 %1156
        %v1158 = vsel %vm940, %v1150, 0.0
        %1159 = vadd.xlane.f32.xlu0 %v1158
        %v1160 = vpop.xlane.xlu0 %1159
        %v1161 = vsel %vm940, %v1152, 0.0
        %1162 = vadd.xlane.f32.xlu0 %v1161
        %v1163 = vpop.xlane.xlu0 %1162
        %v1164 = vsel %vm940, %v1154, 0.0
        %1165 = vadd.xlane.f32.xlu0 %v1164
        %v1166 = vpop.xlane.xlu0 %1165
        %v1167 = vrcp.pop %v1157
        %v1168 = vrcp.pop %v1160
        %v1169 = vrcp.pop %v1163
        %v1170 = vrcp.pop %v1166
        %v1171 = vmul.f32 %v1148, %v1167
        %v1172 = vmul.f32 %v1150, %v1168
        %v1173 = vmul.f32 %v1152, %v1169
        %v1174 = vmul.f32 %v1154, %v1170
        %v1175 = vpack.c.bf16 %v1171, %v1171
        %v1176 = vpack.c.bf16 %v1172, %v1172
        %v1177 = vpack.c.bf16 %v1173, %v1173
        %v1178 = vpack.c.bf16 %v1174, %v1174
        %1179 = vrot.lane.b32.xlu0 %v930, 64
        %v1180 = vpop.permute.xlu0 %1179
        %v1182 = vsel %vm940, %v1175, 0
        %vm1184 = vcmask 1043456
        %v1186 = vsel %vm1184, %v1180, 0
        %1188 = vmatprep.subr.bf16.mxu0 0
        %1189 = vmatpush1.bf16.msra.mxu0 %v1186
        %1190 = vmatprep.subr.bf16.mxu0 0
        %1191 = vmatpush1.bf16.msra.mxu0 0
        %1192 = vmatprep.subr.bf16.mxu0 0
        %1193 = vmatpush1.bf16.msra.mxu0 0
        %1194 = vmatprep.subr.bf16.mxu0 0
        %1195 = vmatpush1.bf16.msra.mxu0 0
        %1196 = vmatprep.subr.bf16.mxu0 0
        %1197 = vmatpush1.bf16.msra.mxu0 0
        %1198 = vmatprep.subr.bf16.mxu0 0
        %1199 = vmatpush1.bf16.msra.mxu0 0
        %1200 = vmatprep.subr.bf16.mxu0 0
        %1201 = vmatpush1.bf16.msra.mxu0 0
        %1202 = vmatprep.subr.bf16.mxu0 0
        %1203 = vmatpush1.bf16.msra.mxu0 0
        %1204 = vmatprep.subr.bf16.mxu0 0
        %1205 = vmatpush1.bf16.msra.mxu0 0
        %1206 = vmatprep.subr.bf16.mxu0 0
        %1207 = vmatpush1.bf16.msra.mxu0 0
        %1208 = vmatprep.subr.bf16.mxu0 0
        %1209 = vmatpush1.bf16.msra.mxu0 0
        %1210 = vmatprep.subr.bf16.mxu0 0
        %1211 = vmatpush1.bf16.msra.mxu0 0
        %1212 = vmatprep.subr.bf16.mxu0 0
        %1213 = vmatpush1.bf16.msra.mxu0 0
        %1214 = vmatprep.subr.bf16.mxu0 0
        %1215 = vmatpush1.bf16.msra.mxu0 0
        %1216 = vmatprep.subr.bf16.mxu0 0
        %1217 = vmatpush1.bf16.msra.mxu0 0
        %1218 = vmatprep.subr.bf16.mxu0 0
        %1219 = vmatpush1.bf16.msra.mxu0 0
        %1220 = vmatprep.mubr.bf16.mxu0 0
        %1221 = vmatmul.mubr.bf16.gmra.mrb[0].mxu0 %v1182
        %v1222 = vpop.f32.mrb[0].mxu0
        %v1223 = vadd.f32 0.0, %v1222
        %v1224 = vpop.f32.mrb[0].mxu0
        %v1225 = vpop.f32.mrb[0].mxu0
        %v1226 = vpop.f32.mrb[0].mxu0
        %1227 = vdwg.mxu0
        %1228 = vrot.lane.b32.xlu0 %v933, 64
        %v1229 = vpop.permute.xlu0 %1228
        %v1231 = vsel %vm940, %v1176, 0
        %v1234 = vsel %vm1184, %v1229, 0
        %1236 = vmatprep.subr.bf16.mxu0 0
        %1237 = vmatpush1.bf16.msra.mxu0 %v1234
        %1238 = vmatprep.subr.bf16.mxu0 0
        %1239 = vmatpush1.bf16.msra.mxu0 0
        %1240 = vmatprep.subr.bf16.mxu0 0
        %1241 = vmatpush1.bf16.msra.mxu0 0
        %1242 = vmatprep.subr.bf16.mxu0 0
        %1243 = vmatpush1.bf16.msra.mxu0 0
        %1244 = vmatprep.subr.bf16.mxu0 0
        %1245 = vmatpush1.bf16.msra.mxu0 0
        %1246 = vmatprep.subr.bf16.mxu0 0
        %1247 = vmatpush1.bf16.msra.mxu0 0
        %1248 = vmatprep.subr.bf16.mxu0 0
        %1249 = vmatpush1.bf16.msra.mxu0 0
        %1250 = vmatprep.subr.bf16.mxu0 0
        %1251 = vmatpush1.bf16.msra.mxu0 0
        %1252 = vmatprep.subr.bf16.mxu0 0
        %1253 = vmatpush1.bf16.msra.mxu0 0
        %1254 = vmatprep.subr.bf16.mxu0 0
        %1255 = vmatpush1.bf16.msra.mxu0 0
        %1256 = vmatprep.subr.bf16.mxu0 0
        %1257 = vmatpush1.bf16.msra.mxu0 0
        %1258 = vmatprep.subr.bf16.mxu0 0
        %1259 = vmatpush1.bf16.msra.mxu0 0
        %1260 = vmatprep.subr.bf16.mxu0 0
        %1261 = vmatpush1.bf16.msra.mxu0 0
        %1262 = vmatprep.subr.bf16.mxu0 0
        %1263 = vmatpush1.bf16.msra.mxu0 0
        %1264 = vmatprep.subr.bf16.mxu0 0
        %1265 = vmatpush1.bf16.msra.mxu0 0
        %1266 = vmatprep.subr.bf16.mxu0 0
        %1267 = vmatpush1.bf16.msra.mxu0 0
        %1268 = vmatprep.mubr.bf16.mxu0 0
        %1269 = vmatmul.mubr.bf16.gmra.mrb[0].mxu0 %v1231
        %v1270 = vpop.f32.mrb[0].mxu0
        %v1271 = vadd.f32 0.0, %v1270
        %v1272 = vpop.f32.mrb[0].mxu0
        %v1273 = vpop.f32.mrb[0].mxu0
        %v1274 = vpop.f32.mrb[0].mxu0
        %1275 = vdwg.mxu0
        %1276 = vrot.lane.b32.xlu0 %v935, 64
        %v1277 = vpop.permute.xlu0 %1276
        %v1279 = vsel %vm940, %v1177, 0
        %v1282 = vsel %vm1184, %v1277, 0
        %1284 = vmatprep.subr.bf16.mxu0 0
        %1285 = vmatpush1.bf16.msra.mxu0 %v1282
        %1286 = vmatprep.subr.bf16.mxu0 0
        %1287 = vmatpush1.bf16.msra.mxu0 0
        %1288 = vmatprep.subr.bf16.mxu0 0
        %1289 = vmatpush1.bf16.msra.mxu0 0
        %1290 = vmatprep.subr.bf16.mxu0 0
        %1291 = vmatpush1.bf16.msra.mxu0 0
        %1292 = vmatprep.subr.bf16.mxu0 0
        %1293 = vmatpush1.bf16.msra.mxu0 0
        %1294 = vmatprep.subr.bf16.mxu0 0
        %1295 = vmatpush1.bf16.msra.mxu0 0
        %1296 = vmatprep.subr.bf16.mxu0 0
        %1297 = vmatpush1.bf16.msra.mxu0 0
        %1298 = vmatprep.subr.bf16.mxu0 0
        %1299 = vmatpush1.bf16.msra.mxu0 0
        %1300 = vmatprep.subr.bf16.mxu0 0
        %1301 = vmatpush1.bf16.msra.mxu0 0
        %1302 = vmatprep.subr.bf16.mxu0 0
        %1303 = vmatpush1.bf16.msra.mxu0 0
        %1304 = vmatprep.subr.bf16.mxu0 0
        %1305 = vmatpush1.bf16.msra.mxu0 0
        %1306 = vmatprep.subr.bf16.mxu0 0
        %1307 = vmatpush1.bf16.msra.mxu0 0
        %1308 = vmatprep.subr.bf16.mxu0 0
        %1309 = vmatpush1.bf16.msra.mxu0 0
        %1310 = vmatprep.subr.bf16.mxu0 0
        %1311 = vmatpush1.bf16.msra.mxu0 0
        %1312 = vmatprep.subr.bf16.mxu0 0
        %1313 = vmatpush1.bf16.msra.mxu0 0
        %1314 = vmatprep.subr.bf16.mxu0 0
        %1315 = vmatpush1.bf16.msra.mxu0 0
        %1316 = vmatprep.mubr.bf16.mxu0 0
        %1317 = vmatmul.mubr.bf16.gmra.mrb[0].mxu0 %v1279
        %v1318 = vpop.f32.mrb[0].mxu0
        %v1319 = vadd.f32 0.0, %v1318
        %v1320 = vpop.f32.mrb[0].mxu0
        %v1321 = vpop.f32.mrb[0].mxu0
        %v1322 = vpop.f32.mrb[0].mxu0
        %1323 = vdwg.mxu0
        %1324 = vrot.lane.b32.xlu0 %v937, 64
        %v1325 = vpop.permute.xlu0 %1324
        %v1327 = vsel %vm940, %v1178, 0
        %v1330 = vsel %vm1184, %v1325, 0
        %1332 = vmatprep.subr.bf16.mxu0 0
        %1333 = vmatpush1.bf16.msra.mxu0 %v1330
        %1334 = vmatprep.subr.bf16.mxu0 0
        %1335 = vmatpush1.bf16.msra.mxu0 0
        %1336 = vmatprep.subr.bf16.mxu0 0
        %1337 = vmatpush1.bf16.msra.mxu0 0
        %1338 = vmatprep.subr.bf16.mxu0 0
        %1339 = vmatpush1.bf16.msra.mxu0 0
        %1340 = vmatprep.subr.bf16.mxu0 0
        %1341 = vmatpush1.bf16.msra.mxu0 0
        %1342 = vmatprep.subr.bf16.mxu0 0
        %1343 = vmatpush1.bf16.msra.mxu0 0
        %1344 = vmatprep.subr.bf16.mxu0 0
        %1345 = vmatpush1.bf16.msra.mxu0 0
        %1346 = vmatprep.subr.bf16.mxu0 0
        %1347 = vmatpush1.bf16.msra.mxu0 0
        %1348 = vmatprep.subr.bf16.mxu0 0
        %1349 = vmatpush1.bf16.msra.mxu0 0
        %1350 = vmatprep.subr.bf16.mxu0 0
        %1351 = vmatpush1.bf16.msra.mxu0 0
        %1352 = vmatprep.subr.bf16.mxu0 0
        %1353 = vmatpush1.bf16.msra.mxu0 0
        %1354 = vmatprep.subr.bf16.mxu0 0
        %1355 = vmatpush1.bf16.msra.mxu0 0
        %1356 = vmatprep.subr.bf16.mxu0 0
        %1357 = vmatpush1.bf16.msra.mxu0 0
        %1358 = vmatprep.subr.bf16.mxu0 0
        %1359 = vmatpush1.bf16.msra.mxu0 0
        %1360 = vmatprep.subr.bf16.mxu0 0
        %1361 = vmatpush1.bf16.msra.mxu0 0
        %1362 = vmatprep.subr.bf16.mxu0 0
        %1363 = vmatpush1.bf16.msra.mxu0 0
        %1364 = vmatprep.mubr.bf16.mxu0 0
        %1365 = vmatmul.mubr.bf16.gmra.mrb[0].mxu0 %v1327
        %v1366 = vpop.f32.mrb[0].mxu0
        %v1367 = vadd.f32 0.0, %v1366
        %v1368 = vpop.f32.mrb[0].mxu0
        %v1369 = vpop.f32.mrb[0].mxu0
        %v1370 = vpop.f32.mrb[0].mxu0
        %1371 = vdwg.mxu0
        %1373 = vrot.lane.b32.xlu0 %v1271, 8
        %v1374 = vpop.permute.xlu0 %1373
        %1377 = vrot.lane.b32.xlu0 %v1319, 16
        %v1378 = vpop.permute.xlu0 %1377
        %1381 = vrot.lane.b32.xlu0 %v1367, 24
        %v1382 = vpop.permute.xlu0 %1381
        %v1384 = vsel %vm940, %v1223, %v1374
        %vm1385 = vcmask 130048
        %v1386 = vsel %vm1385, %v1384, %v1378
        %vm1387 = vcmask 195584
        %v1388 = vsel %vm1387, %v1386, %v1382
        %v1389 = vpack.c.bf16 %v1388, %v1388
        %v1390 = vld [vmem:[#allocation8] sm:$0xf]
        %v1391 = vld [vmem:[#allocation8 + $0x4] sm:$0xf]
        %v1392 = vld [vmem:[#allocation8 + $0x8] sm:$0xf]
        %v1393 = vld [vmem:[#allocation8 + $0xc] sm:$0xf]
        %v1394 = vld [vmem:[#allocation10] sm:$0x1]
        %v1396 = vlaneseq
        %v1397 = vshrl.u32 %v1396, 7
        %v1398 = vsub.s32 0, %v1397
        %v1399 = vrot.slane %v1394, %v1398
        %v1405 = vunpack.c.l.b16 %v1390
        %v1406 = vunpack.c.l.b16 %v1391
        %v1407 = vunpack.c.l.b16 %v1392
        %v1408 = vunpack.c.l.b16 %v1393
        %v1409 = vpack.c.b16 %v1406, %v1405
        %v1410 = vpack.c.b16 %v1408, %v1407
        %v1414 = vsel %vm838, %v1389, 0
        %1416 = vmatprep.subr.bf16.mxu0 0
        %1417 = vmatpush1.bf16.msra.mxu0 %v1409
        %1418 = vmatprep.subr.bf16.mxu0 0
        %1419 = vmatpush1.bf16.msra.mxu0 %v1410
        %1420 = vmatprep.subr.bf16.mxu0 0
        %1421 = vmatpush1.bf16.msra.mxu0 0
        %1422 = vmatprep.subr.bf16.mxu0 0
        %1423 = vmatpush1.bf16.msra.mxu0 0
        %1424 = vmatprep.subr.bf16.mxu0 0
        %1425 = vmatpush1.bf16.msra.mxu0 0
        %1426 = vmatprep.subr.bf16.mxu0 0
        %1427 = vmatpush1.bf16.msra.mxu0 0
        %1428 = vmatprep.subr.bf16.mxu0 0
        %1429 = vmatpush1.bf16.msra.mxu0 0
        %1430 = vmatprep.subr.bf16.mxu0 0
        %1431 = vmatpush1.bf16.msra.mxu0 0
        %1432 = vmatprep.subr.bf16.mxu0 0
        %1433 = vmatpush1.bf16.msra.mxu0 0
        %1434 = vmatprep.subr.bf16.mxu0 0
        %1435 = vmatpush1.bf16.msra.mxu0 0
        %1436 = vmatprep.subr.bf16.mxu0 0
        %1437 = vmatpush1.bf16.msra.mxu0 0
        %1438 = vmatprep.subr.bf16.mxu0 0
        %1439 = vmatpush1.bf16.msra.mxu0 0
        %1440 = vmatprep.subr.bf16.mxu0 0
        %1441 = vmatpush1.bf16.msra.mxu0 0
        %1442 = vmatprep.subr.bf16.mxu0 0
        %1443 = vmatpush1.bf16.msra.mxu0 0
        %1444 = vmatprep.subr.bf16.mxu0 0
        %1445 = vmatpush1.bf16.msra.mxu0 0
        %1446 = vmatprep.subr.bf16.mxu0 0
        %1447 = vmatpush1.bf16.msra.mxu0 0
        %1448 = vmatprep.mubr.bf16.mxu0 0
        %1449 = vmatmul.mubr.bf16.gmra.mrb[0].mxu0 %v1414
        %v1450 = vpop.f32.mrb[0].mxu0
        %v1451 = vadd.f32 %v1399, %v1450
        %v1452 = vpop.f32.mrb[0].mxu0
        %v1453 = vpop.f32.mrb[0].mxu0
        %v1454 = vpop.f32.mrb[0].mxu0
        %1455 = vdwg.mxu0
        %v1456 = vadd.f32 %v1451, %v809
        %s1457 = scalar_lea.vmem [#allocation19], 2
        %v1458 = vld [vmem:[%s1457] sm:$0x1]
        %v1459 = vld [vmem:[%s1457 + $0x1] sm:$0x1]
        %v1460 = vsel %vm838, %v1456, 0.0
        %1461 = vadd.xlane.f32.xlu0 %v1460
        %v1462 = vpop.xlane.xlu0 %1461
        %v1463 = vmul.f32 %v1462, %v842
        %v1464 = vsub.f32 %v1456, %v1463
        %v1465 = vmul.f32 %v1464, %v1464
        %v1466 = vsel %vm838, %v1465, 0.0
        %1467 = vadd.xlane.f32.xlu0 %v1466
        %v1468 = vpop.xlane.xlu0 %1467
        %v1469 = vmul.f32 %v1468, %v842
        %v1470 = vadd.f32 %v1469, 1e-05
        %v1471 = vrsqrt.pop %v1470
        %v1472 = vmul.f32 %v1464, %v1471
        %v1473 = vlaneseq
        %v1474 = vshrl.u32 %v1473, 7
        %v1475 = vsub.s32 0, %v1474
        %v1476 = vrot.slane %v1458, %v1475
        %v1477 = vmul.f32 %v1472, %v1476
        %v1478 = vlaneseq
        %v1479 = vshrl.u32 %v1478, 7
        %v1480 = vsub.s32 0, %v1479
        %v1481 = vrot.slane %v1459, %v1480
        %v1482 = vadd.f32 %v1477, %v1481
        %v1483 = vpack.c.bf16 %v1482, %v1482
        %v1484 = vld [vmem:[#allocation11] sm:$0xf]
        %v1485 = vld [vmem:[#allocation11 + $0x4] sm:$0xf]
        %v1486 = vld [vmem:[#allocation11 + $0x8] sm:$0xf]
        %v1487 = vld [vmem:[#allocation11 + $0xc] sm:$0xf]
        %v1488 = vld [vmem:[#allocation13] sm:$0x1]
        %v1490 = vlaneseq
        %v1491 = vshrl.u32 %v1490, 7
        %v1492 = vsub.s32 0, %v1491
        %v1493 = vrot.slane %v1488, %v1492
        %v1499 = vunpack.c.l.b16 %v1484
        %v1500 = vunpack.c.l.b16 %v1485
        %v1501 = vunpack.c.l.b16 %v1486
        %v1502 = vunpack.c.l.b16 %v1487
        %v1503 = vpack.c.b16 %v1500, %v1499
        %v1504 = vpack.c.b16 %v1502, %v1501
        %v1508 = vsel %vm838, %v1483, 0
        %1510 = vmatprep.subr.bf16.mxu0 0
        %1511 = vmatpush1.bf16.msra.mxu0 %v1503
        %1512 = vmatprep.subr.bf16.mxu0 0
        %1513 = vmatpush1.bf16.msra.mxu0 %v1504
        %1514 = vmatprep.subr.bf16.mxu0 0
        %1515 = vmatpush1.bf16.msra.mxu0 0
        %1516 = vmatprep.subr.bf16.mxu0 0
        %1517 = vmatpush1.bf16.msra.mxu0 0
        %1518 = vmatprep.subr.bf16.mxu0 0
        %1519 = vmatpush1.bf16.msra.mxu0 0
        %1520 = vmatprep.subr.bf16.mxu0 0
        %1521 = vmatpush1.bf16.msra.mxu0 0
        %1522 = vmatprep.subr.bf16.mxu0 0
        %1523 = vmatpush1.bf16.msra.mxu0 0
        %1524 = vmatprep.subr.bf16.mxu0 0
        %1525 = vmatpush1.bf16.msra.mxu0 0
        %1526 = vmatprep.subr.bf16.mxu0 0
        %1527 = vmatpush1.bf16.msra.mxu0 0
        %1528 = vmatprep.subr.bf16.mxu0 0
        %1529 = vmatpush1.bf16.msra.mxu0 0
        %1530 = vmatprep.subr.bf16.mxu0 0
        %1531 = vmatpush1.bf16.msra.mxu0 0
        %1532 = vmatprep.subr.bf16.mxu0 0
        %1533 = vmatpush1.bf16.msra.mxu0 0
        %1534 = vmatprep.subr.bf16.mxu0 0
        %1535 = vmatpush1.bf16.msra.mxu0 0
        %1536 = vmatprep.subr.bf16.mxu0 0
        %1537 = vmatpush1.bf16.msra.mxu0 0
        %1538 = vmatprep.subr.bf16.mxu0 0
        %1539 = vmatpush1.bf16.msra.mxu0 0
        %1540 = vmatprep.subr.bf16.mxu0 0
        %1541 = vmatpush1.bf16.msra.mxu0 0
        %1542 = vmatprep.mubr.bf16.mxu0 0
        %1543 = vmatmul.mubr.bf16.gmra.mrb[0].mxu0 %v1508
        %v1544 = vpop.f32.mrb[0].mxu0
        %v1545 = vadd.f32 %v1493, %v1544
        %v1546 = vpop.f32.mrb[0].mxu0
        %v1547 = vpop.f32.mrb[0].mxu0
        %v1548 = vpop.f32.mrb[0].mxu0
        %1549 = vdwg.mxu0
        %v1550 = vpack.c.bf16 %v1545, %v1545
        %v1551 = vpack.c.bf16 %v811, %v810
        %v1552 = vld [vmem:[%s10] sm:$0xf]
        %v1553 = vld [vmem:[%s10 + $0x4] sm:$0xf]
        %v1554 = vld [vmem:[%s10 + $0x8] sm:$0xf]
        %v1555 = vld [vmem:[%s10 + $0xc] sm:$0xf]
        %v1556 = vld [vmem:[#allocation14] sm:$0x1]
        %v1558 = vlaneseq
        %v1559 = vshrl.u32 %v1558, 7
        %v1560 = vsub.s32 0, %v1559
        %v1561 = vrot.slane %v1556, %v1560
        %v1567 = vunpack.c.l.b16 %v1552
        %v1568 = vunpack.c.l.b16 %v1553
        %v1569 = vunpack.c.l.b16 %v1554
        %v1570 = vunpack.c.l.b16 %v1555
        %v1571 = vpack.c.b16 %v1568, %v1567
        %v1572 = vpack.c.b16 %v1570, %v1569
        %v1576 = vsel %vm838, %v1551, 0
        %1578 = vmatprep.subr.bf16.mxu0 0
        %1579 = vmatpush1.bf16.msra.mxu0 %v1571
        %1580 = vmatprep.subr.bf16.mxu0 0
        %1581 = vmatpush1.bf16.msra.mxu0 %v1572
        %1582 = vmatprep.subr.bf16.mxu0 0
        %1583 = vmatpush1.bf16.msra.mxu0 0
        %1584 = vmatprep.subr.bf16.mxu0 0
        %1585 = vmatpush1.bf16.msra.mxu0 0
        %1586 = vmatprep.subr.bf16.mxu0 0
        %1587 = vmatpush1.bf16.msra.mxu0 0
        %1588 = vmatprep.subr.bf16.mxu0 0
        %1589 = vmatpush1.bf16.msra.mxu0 0
        %1590 = vmatprep.subr.bf16.mxu0 0
        %1591 = vmatpush1.bf16.msra.mxu0 0
        %1592 = vmatprep.subr.bf16.mxu0 0
        %1593 = vmatpush1.bf16.msra.mxu0 0
        %1594 = vmatprep.subr.bf16.mxu0 0
        %1595 = vmatpush1.bf16.msra.mxu0 0
        %1596 = vmatprep.subr.bf16.mxu0 0
        %1597 = vmatpush1.bf16.msra.mxu0 0
        %1598 = vmatprep.subr.bf16.mxu0 0
        %1599 = vmatpush1.bf16.msra.mxu0 0
        %1600 = vmatprep.subr.bf16.mxu0 0
        %1601 = vmatpush1.bf16.msra.mxu0 0
        %1602 = vmatprep.subr.bf16.mxu0 0
        %1603 = vmatpush1.bf16.msra.mxu0 0
        %1604 = vmatprep.subr.bf16.mxu0 0
        %1605 = vmatpush1.bf16.msra.mxu0 0
        %1606 = vmatprep.subr.bf16.mxu0 0
        %1607 = vmatpush1.bf16.msra.mxu0 0
        %1608 = vmatprep.subr.bf16.mxu0 0
        %1609 = vmatpush1.bf16.msra.mxu0 0
        %1610 = vmatprep.mubr.bf16.mxu0 0
        %1611 = vmatmul.mubr.bf16.gmra.mrb[0].mxu0 %v1576
        %v1612 = vpop.f32.mrb[0].mxu0
        %v1613 = vadd.f32 %v1561, %v1612
        %v1614 = vpop.f32.mrb[0].mxu0
        %v1615 = vpop.f32.mrb[0].mxu0
        %v1616 = vadd.f32 %v1561, %v1615
        %v1617 = vpop.f32.mrb[0].mxu0
        %1618 = vdwg.mxu0
        %v1619 = vpack.c.bf16 %v1616, %v1613
        %1621 = vrot.lane.b32.xlu0 %v1550, 120
        %v1622 = vpop.permute.xlu0 %1621
        %1623 = vrot.lane.b32.xlu0 %v1550, 112
        %v1624 = vpop.permute.xlu0 %1623
        %1625 = vrot.lane.b32.xlu0 %v1550, 104
        %v1626 = vpop.permute.xlu0 %1625
        %1628 = vrot.lane.b32.xlu0 %v1619, 120
        %v1629 = vpop.permute.xlu0 %1628
        %1630 = vrot.lane.b32.xlu0 %v1619, 112
        %v1631 = vpop.permute.xlu0 %1630
        %1632 = vrot.lane.b32.xlu0 %v1619, 104
        %v1633 = vpop.permute.xlu0 %1632
        %v1635 = vsel %vm940, %v1550, 0
        %v1638 = vsel %vm940, %v1619, 0
        %1640 = vmatprep.subr.bf16.mxu0 0
        %1641 = vmatpush1.bf16.xpose.msra.mxu0 %v1638
        %1642 = vmatprep.subr.bf16.mxu0 0
        %1643 = vmatpush1.bf16.xpose.msra.mxu0 0
        %1644 = vmatprep.subr.bf16.mxu0 0
        %1645 = vmatpush1.bf16.xpose.msra.mxu0 0
        %1646 = vmatprep.subr.bf16.mxu0 0
        %1647 = vmatpush1.bf16.xpose.msra.mxu0 0
        %1648 = vmatprep.subr.bf16.mxu0 0
        %1649 = vmatpush1.bf16.xpose.msra.mxu0 0
        %1650 = vmatprep.subr.bf16.mxu0 0
        %1651 = vmatpush1.bf16.xpose.msra.mxu0 0
        %1652 = vmatprep.subr.bf16.mxu0 0
        %1653 = vmatpush1.bf16.xpose.msra.mxu0 0
        %1654 = vmatprep.subr.bf16.mxu0 0
        %1655 = vmatpush1.bf16.xpose.msra.mxu0 0
        %1656 = vmatprep.subr.bf16.mxu0 0
        %1657 = vmatpush1.bf16.xpose.msra.mxu0 0
        %1658 = vmatprep.subr.bf16.mxu0 0
        %1659 = vmatpush1.bf16.xpose.msra.mxu0 0
        %1660 = vmatprep.subr.bf16.mxu0 0
        %1661 = vmatpush1.bf16.xpose.msra.mxu0 0
        %1662 = vmatprep.subr.bf16.mxu0 0
        %1663 = vmatpush1.bf16.xpose.msra.mxu0 0
        %1664 = vmatprep.subr.bf16.mxu0 0
        %1665 = vmatpush1.bf16.xpose.msra.mxu0 0
        %1666 = vmatprep.subr.bf16.mxu0 0
        %1667 = vmatpush1.bf16.xpose.msra.mxu0 0
        %1668 = vmatprep.subr.bf16.mxu0 0
        %1669 = vmatpush1.bf16.xpose.msra.mxu0 0
        %1670 = vmatprep.subr.bf16.mxu0 0
        %1671 = vmatpush1.bf16.xpose.msra.mxu0 0
        %1672 = vmatprep.mubr.bf16.mxu0 0
        %1673 = vmatmul.mubr.bf16.gmra.mrb[0].mxu0 %v1635
        %v1674 = vpop.f32.mrb[0].mxu0
        %v1675 = vadd.f32 %v835, %v1674
        %v1676 = vpop.f32.mrb[0].mxu0
        %v1677 = vpop.f32.mrb[0].mxu0
        %v1678 = vpop.f32.mrb[0].mxu0
        %1679 = vdwg.mxu0
        %v1681 = vsel %vm940, %v1622, 0
        %v1684 = vsel %vm940, %v1629, 0
        %1686 = vmatprep.subr.bf16.mxu0 0
        %1687 = vmatpush1.bf16.xpose.msra.mxu0 %v1684
        %1688 = vmatprep.subr.bf16.mxu0 0
        %1689 = vmatpush1.bf16.xpose.msra.mxu0 0
        %1690 = vmatprep.subr.bf16.mxu0 0
        %1691 = vmatpush1.bf16.xpose.msra.mxu0 0
        %1692 = vmatprep.subr.bf16.mxu0 0
        %1693 = vmatpush1.bf16.xpose.msra.mxu0 0
        %1694 = vmatprep.subr.bf16.mxu0 0
        %1695 = vmatpush1.bf16.xpose.msra.mxu0 0
        %1696 = vmatprep.subr.bf16.mxu0 0
        %1697 = vmatpush1.bf16.xpose.msra.mxu0 0
        %1698 = vmatprep.subr.bf16.mxu0 0
        %1699 = vmatpush1.bf16.xpose.msra.mxu0 0
        %1700 = vmatprep.subr.bf16.mxu0 0
        %1701 = vmatpush1.bf16.xpose.msra.mxu0 0
        %1702 = vmatprep.subr.bf16.mxu0 0
        %1703 = vmatpush1.bf16.xpose.msra.mxu0 0
        %1704 = vmatprep.subr.bf16.mxu0 0
        %1705 = vmatpush1.bf16.xpose.msra.mxu0 0
        %1706 = vmatprep.subr.bf16.mxu0 0
        %1707 = vmatpush1.bf16.xpose.msra.mxu0 0
        %1708 = vmatprep.subr.bf16.mxu0 0
        %1709 = vmatpush1.bf16.xpose.msra.mxu0 0
        %1710 = vmatprep.subr.bf16.mxu0 0
        %1711 = vmatpush1.bf16.xpose.msra.mxu0 0
        %1712 = vmatprep.subr.bf16.mxu0 0
        %1713 = vmatpush1.bf16.xpose.msra.mxu0 0
        %1714 = vmatprep.subr.bf16.mxu0 0
        %1715 = vmatpush1.bf16.xpose.msra.mxu0 0
        %1716 = vmatprep.subr.bf16.mxu0 0
        %1717 = vmatpush1.bf16.xpose.msra.mxu0 0
        %1718 = vmatprep.mubr.bf16.mxu0 0
        %1719 = vmatmul.mubr.bf16.gmra.mrb[0].mxu0 %v1681
        %v1720 = vpop.f32.mrb[0].mxu0
        %v1721 = vadd.f32 %v835, %v1720
        %v1722 = vpop.f32.mrb[0].mxu0
        %v1723 = vpop.f32.mrb[0].mxu0
        %v1724 = vpop.f32.mrb[0].mxu0
        %1725 = vdwg.mxu0
        %v1727 = vsel %vm940, %v1624, 0
        %v1730 = vsel %vm940, %v1631, 0
        %1732 = vmatprep.subr.bf16.mxu0 0
        %1733 = vmatpush1.bf16.xpose.msra.mxu0 %v1730
        %1734 = vmatprep.subr.bf16.mxu0 0
        %1735 = vmatpush1.bf16.xpose.msra.mxu0 0
        %1736 = vmatprep.subr.bf16.mxu0 0
        %1737 = vmatpush1.bf16.xpose.msra.mxu0 0
        %1738 = vmatprep.subr.bf16.mxu0 0
        %1739 = vmatpush1.bf16.xpose.msra.mxu0 0
        %1740 = vmatprep.subr.bf16.mxu0 0
        %1741 = vmatpush1.bf16.xpose.msra.mxu0 0
        %1742 = vmatprep.subr.bf16.mxu0 0
        %1743 = vmatpush1.bf16.xpose.msra.mxu0 0
        %1744 = vmatprep.subr.bf16.mxu0 0
        %1745 = vmatpush1.bf16.xpose.msra.mxu0 0
        %1746 = vmatprep.subr.bf16.mxu0 0
        %1747 = vmatpush1.bf16.xpose.msra.mxu0 0
        %1748 = vmatprep.subr.bf16.mxu0 0
        %1749 = vmatpush1.bf16.xpose.msra.mxu0 0
        %1750 = vmatprep.subr.bf16.mxu0 0
        %1751 = vmatpush1.bf16.xpose.msra.mxu0 0
        %1752 = vmatprep.subr.bf16.mxu0 0
        %1753 = vmatpush1.bf16.xpose.msra.mxu0 0
        %1754 = vmatprep.subr.bf16.mxu0 0
        %1755 = vmatpush1.bf16.xpose.msra.mxu0 0
        %1756 = vmatprep.subr.bf16.mxu0 0
        %1757 = vmatpush1.bf16.xpose.msra.mxu0 0
        %1758 = vmatprep.subr.bf16.mxu0 0
        %1759 = vmatpush1.bf16.xpose.msra.mxu0 0
        %1760 = vmatprep.subr.bf16.mxu0 0
        %1761 = vmatpush1.bf16.xpose.msra.mxu0 0
        %1762 = vmatprep.subr.bf16.mxu0 0
        %1763 = vmatpush1.bf16.xpose.msra.mxu0 0
        %1764 = vmatprep.mubr.bf16.mxu0 0
        %1765 = vmatmul.mubr.bf16.gmra.mrb[0].mxu0 %v1727
        %v1766 = vpop.f32.mrb[0].mxu0
        %v1767 = vadd.f32 %v835, %v1766
        %v1768 = vpop.f32.mrb[0].mxu0
        %v1769 = vpop.f32.mrb[0].mxu0
        %v1770 = vpop.f32.mrb[0].mxu0
        %1771 = vdwg.mxu0
        %v1773 = vsel %vm940, %v1626, 0
        %v1776 = vsel %vm940, %v1633, 0
        %1778 = vmatprep.subr.bf16.mxu0 0
        %1779 = vmatpush1.bf16.xpose.msra.mxu0 %v1776
        %1780 = vmatprep.subr.bf16.mxu0 0
        %1781 = vmatpush1.bf16.xpose.msra.mxu0 0
        %1782 = vmatprep.subr.bf16.mxu0 0
        %1783 = vmatpush1.bf16.xpose.msra.mxu0 0
        %1784 = vmatprep.subr.bf16.mxu0 0
        %1785 = vmatpush1.bf16.xpose.msra.mxu0 0
        %1786 = vmatprep.subr.bf16.mxu0 0
        %1787 = vmatpush1.bf16.xpose.msra.mxu0 0
        %1788 = vmatprep.subr.bf16.mxu0 0
        %1789 = vmatpush1.bf16.xpose.msra.mxu0 0
        %1790 = vmatprep.subr.bf16.mxu0 0
        %1791 = vmatpush1.bf16.xpose.msra.mxu0 0
        %1792 = vmatprep.subr.bf16.mxu0 0
        %1793 = vmatpush1.bf16.xpose.msra.mxu0 0
        %1794 = vmatprep.subr.bf16.mxu0 0
        %1795 = vmatpush1.bf16.xpose.msra.mxu0 0
        %1796 = vmatprep.subr.bf16.mxu0 0
        %1797 = vmatpush1.bf16.xpose.msra.mxu0 0
        %1798 = vmatprep.subr.bf16.mxu0 0
        %1799 = vmatpush1.bf16.xpose.msra.mxu0 0
        %1800 = vmatprep.subr.bf16.mxu0 0
        %1801 = vmatpush1.bf16.xpose.msra.mxu0 0
        %1802 = vmatprep.subr.bf16.mxu0 0
        %1803 = vmatpush1.bf16.xpose.msra.mxu0 0
        %1804 = vmatprep.subr.bf16.mxu0 0
        %1805 = vmatpush1.bf16.xpose.msra.mxu0 0
        %1806 = vmatprep.subr.bf16.mxu0 0
        %1807 = vmatpush1.bf16.xpose.msra.mxu0 0
        %1808 = vmatprep.subr.bf16.mxu0 0
        %1809 = vmatpush1.bf16.xpose.msra.mxu0 0
        %1810 = vmatprep.mubr.bf16.mxu0 0
        %1811 = vmatmul.mubr.bf16.gmra.mrb[0].mxu0 %v1773
        %v1812 = vpop.f32.mrb[0].mxu0
        %v1813 = vadd.f32 %v835, %v1812
        %v1814 = vpop.f32.mrb[0].mxu0
        %v1815 = vpop.f32.mrb[0].mxu0
        %v1816 = vpop.f32.mrb[0].mxu0
        %1817 = vdwg.mxu0
        %v1818 = vsel %vm1385, %v1675, -inf
        %1819 = vmax.xlane.f32.xlu0 %v1818
        %v1820 = vpop.xlane.xlu0 %1819
        %v1821 = vsel %vm1385, %v1721, -inf
        %1822 = vmax.xlane.f32.xlu0 %v1821
        %v1823 = vpop.xlane.xlu0 %1822
        %v1824 = vsel %vm1385, %v1767, -inf
        %1825 = vmax.xlane.f32.xlu0 %v1824
        %v1826 = vpop.xlane.xlu0 %1825
        %v1827 = vsel %vm1385, %v1813, -inf
        %1828 = vmax.xlane.f32.xlu0 %v1827
        %v1829 = vpop.xlane.xlu0 %1828
        %v1830 = vsub.f32 %v1675, %v1820
        %v1831 = vsub.f32 %v1721, %v1823
        %v1832 = vsub.f32 %v1767, %v1826
        %v1833 = vsub.f32 %v1813, %v1829
        %v1834 = vmul.f32 %v1830, 1.442695
        %v1835 = vpow.pop %v1834
        %v1836 = vmul.f32 %v1831, 1.442695
        %v1837 = vpow.pop %v1836
        %v1838 = vmul.f32 %v1832, 1.442695
        %v1839 = vpow.pop %v1838
        %v1840 = vmul.f32 %v1833, 1.442695
        %v1841 = vpow.pop %v1840
        %v1842 = vsel %vm1385, %v1835, 0.0
        %1843 = vadd.xlane.f32.xlu0 %v1842
        %v1844 = vpop.xlane.xlu0 %1843
        %v1845 = vsel %vm1385, %v1837, 0.0
        %1846 = vadd.xlane.f32.xlu0 %v1845
        %v1847 = vpop.xlane.xlu0 %1846
        %v1848 = vsel %vm1385, %v1839, 0.0
        %1849 = vadd.xlane.f32.xlu0 %v1848
        %v1850 = vpop.xlane.xlu0 %1849
        %v1851 = vsel %vm1385, %v1841, 0.0
        %1852 = vadd.xlane.f32.xlu0 %v1851
        %v1853 = vpop.xlane.xlu0 %1852
        %v1854 = vrcp.pop %v1844
        %v1855 = vrcp.pop %v1847
        %v1856 = vrcp.pop %v1850
        %v1857 = vrcp.pop %v1853
        %v1858 = vmul.f32 %v1835, %v1854
        %v1859 = vmul.f32 %v1837, %v1855
        %v1860 = vmul.f32 %v1839, %v1856
        %v1861 = vmul.f32 %v1841, %v1857
        %v1862 = vpack.c.bf16 %v1858, %v1858
        %v1863 = vpack.c.bf16 %v1859, %v1859
        %v1864 = vpack.c.bf16 %v1860, %v1860
        %v1865 = vpack.c.bf16 %v1861, %v1861
        %1866 = vrot.lane.b32.xlu0 %v1619, 96
        %v1867 = vpop.permute.xlu0 %1866
        %v1870 = vsel %vm1385, %v1862, 0
        %1872 = vmatprep.subr.bf16.mxu0 0
        %1873 = vmatpush1.bf16.msra.mxu0 %v1867
        %1874 = vmatprep.subr.bf16.mxu0 0
        %1875 = vmatpush1.bf16.msra.mxu0 0
        %1876 = vmatprep.subr.bf16.mxu0 0
        %1877 = vmatpush1.bf16.msra.mxu0 0
        %1878 = vmatprep.subr.bf16.mxu0 0
        %1879 = vmatpush1.bf16.msra.mxu0 0
        %1880 = vmatprep.subr.bf16.mxu0 0
        %1881 = vmatpush1.bf16.msra.mxu0 0
        %1882 = vmatprep.subr.bf16.mxu0 0
        %1883 = vmatpush1.bf16.msra.mxu0 0
        %1884 = vmatprep.subr.bf16.mxu0 0
        %1885 = vmatpush1.bf16.msra.mxu0 0
        %1886 = vmatprep.subr.bf16.mxu0 0
        %1887 = vmatpush1.bf16.msra.mxu0 0
        %1888 = vmatprep.subr.bf16.mxu0 0
        %1889 = vmatpush1.bf16.msra.mxu0 0
        %1890 = vmatprep.subr.bf16.mxu0 0
        %1891 = vmatpush1.bf16.msra.mxu0 0
        %1892 = vmatprep.subr.bf16.mxu0 0
        %1893 = vmatpush1.bf16.msra.mxu0 0
        %1894 = vmatprep.subr.bf16.mxu0 0
        %1895 = vmatpush1.bf16.msra.mxu0 0
        %1896 = vmatprep.subr.bf16.mxu0 0
        %1897 = vmatpush1.bf16.msra.mxu0 0
        %1898 = vmatprep.subr.bf16.mxu0 0
        %1899 = vmatpush1.bf16.msra.mxu0 0
        %1900 = vmatprep.subr.bf16.mxu0 0
        %1901 = vmatpush1.bf16.msra.mxu0 0
        %1902 = vmatprep.subr.bf16.mxu0 0
        %1903 = vmatpush1.bf16.msra.mxu0 0
        %1904 = vmatprep.mubr.bf16.mxu0 0
        %1905 = vmatmul.mubr.bf16.gmra.mrb[0].mxu0 %v1870
        %v1906 = vpop.f32.mrb[0].mxu0
        %v1907 = vadd.f32 0.0, %v1906
        %v1908 = vpop.f32.mrb[0].mxu0
        %v1909 = vpop.f32.mrb[0].mxu0
        %v1910 = vpop.f32.mrb[0].mxu0
        %1911 = vdwg.mxu0
        %1912 = vrot.lane.b32.xlu0 %v1629, 96
        %v1913 = vpop.permute.xlu0 %1912
        %v1916 = vsel %vm1385, %v1863, 0
        %1918 = vmatprep.subr.bf16.mxu0 0
        %1919 = vmatpush1.bf16.msra.mxu0 %v1913
        %1920 = vmatprep.subr.bf16.mxu0 0
        %1921 = vmatpush1.bf16.msra.mxu0 0
        %1922 = vmatprep.subr.bf16.mxu0 0
        %1923 = vmatpush1.bf16.msra.mxu0 0
        %1924 = vmatprep.subr.bf16.mxu0 0
        %1925 = vmatpush1.bf16.msra.mxu0 0
        %1926 = vmatprep.subr.bf16.mxu0 0
        %1927 = vmatpush1.bf16.msra.mxu0 0
        %1928 = vmatprep.subr.bf16.mxu0 0
        %1929 = vmatpush1.bf16.msra.mxu0 0
        %1930 = vmatprep.subr.bf16.mxu0 0
        %1931 = vmatpush1.bf16.msra.mxu0 0
        %1932 = vmatprep.subr.bf16.mxu0 0
        %1933 = vmatpush1.bf16.msra.mxu0 0
        %1934 = vmatprep.subr.bf16.mxu0 0
        %1935 = vmatpush1.bf16.msra.mxu0 0
        %1936 = vmatprep.subr.bf16.mxu0 0
        %1937 = vmatpush1.bf16.msra.mxu0 0
        %1938 = vmatprep.subr.bf16.mxu0 0
        %1939 = vmatpush1.bf16.msra.mxu0 0
        %1940 = vmatprep.subr.bf16.mxu0 0
        %1941 = vmatpush1.bf16.msra.mxu0 0
        %1942 = vmatprep.subr.bf16.mxu0 0
        %1943 = vmatpush1.bf16.msra.mxu0 0
        %1944 = vmatprep.subr.bf16.mxu0 0
        %1945 = vmatpush1.bf16.msra.mxu0 0
        %1946 = vmatprep.subr.bf16.mxu0 0
        %1947 = vmatpush1.bf16.msra.mxu0 0
        %1948 = vmatprep.subr.bf16.mxu0 0
        %1949 = vmatpush1.bf16.msra.mxu0 0
        %1950 = vmatprep.mubr.bf16.mxu0 0
        %1951 = vmatmul.mubr.bf16.gmra.mrb[0].mxu0 %v1916
        %v1952 = vpop.f32.mrb[0].mxu0
        %v1953 = vadd.f32 0.0, %v1952
        %v1954 = vpop.f32.mrb[0].mxu0
        %v1955 = vpop.f32.mrb[0].mxu0
        %v1956 = vpop.f32.mrb[0].mxu0
        %1957 = vdwg.mxu0
        %1958 = vrot.lane.b32.xlu0 %v1631, 96
        %v1959 = vpop.permute.xlu0 %1958
        %v1962 = vsel %vm1385, %v1864, 0
        %1964 = vmatprep.subr.bf16.mxu0 0
        %1965 = vmatpush1.bf16.msra.mxu0 %v1959
        %1966 = vmatprep.subr.bf16.mxu0 0
        %1967 = vmatpush1.bf16.msra.mxu0 0
        %1968 = vmatprep.subr.bf16.mxu0 0
        %1969 = vmatpush1.bf16.msra.mxu0 0
        %1970 = vmatprep.subr.bf16.mxu0 0
        %1971 = vmatpush1.bf16.msra.mxu0 0
        %1972 = vmatprep.subr.bf16.mxu0 0
        %1973 = vmatpush1.bf16.msra.mxu0 0
        %1974 = vmatprep.subr.bf16.mxu0 0
        %1975 = vmatpush1.bf16.msra.mxu0 0
        %1976 = vmatprep.subr.bf16.mxu0 0
        %1977 = vmatpush1.bf16.msra.mxu0 0
        %1978 = vmatprep.subr.bf16.mxu0 0
        %1979 = vmatpush1.bf16.msra.mxu0 0
        %1980 = vmatprep.subr.bf16.mxu0 0
        %1981 = vmatpush1.bf16.msra.mxu0 0
        %1982 = vmatprep.subr.bf16.mxu0 0
        %1983 = vmatpush1.bf16.msra.mxu0 0
        %1984 = vmatprep.subr.bf16.mxu0 0
        %1985 = vmatpush1.bf16.msra.mxu0 0
        %1986 = vmatprep.subr.bf16.mxu0 0
        %1987 = vmatpush1.bf16.msra.mxu0 0
        %1988 = vmatprep.subr.bf16.mxu0 0
        %1989 = vmatpush1.bf16.msra.mxu0 0
        %1990 = vmatprep.subr.bf16.mxu0 0
        %1991 = vmatpush1.bf16.msra.mxu0 0
        %1992 = vmatprep.subr.bf16.mxu0 0
        %1993 = vmatpush1.bf16.msra.mxu0 0
        %1994 = vmatprep.subr.bf16.mxu0 0
        %1995 = vmatpush1.bf16.msra.mxu0 0
        %1996 = vmatprep.mubr.bf16.mxu0 0
        %1997 = vmatmul.mubr.bf16.gmra.mrb[0].mxu0 %v1962
        %v1998 = vpop.f32.mrb[0].mxu0
        %v1999 = vadd.f32 0.0, %v1998
        %v2000 = vpop.f32.mrb[0].mxu0
        %v2001 = vpop.f32.mrb[0].mxu0
        %v2002 = vpop.f32.mrb[0].mxu0
        %2003 = vdwg.mxu0
        %2004 = vrot.lane.b32.xlu0 %v1633, 96
        %v2005 = vpop.permute.xlu0 %2004
        %v2008 = vsel %vm1385, %v1865, 0
        %2010 = vmatprep.subr.bf16.mxu0 0
        %2011 = vmatpush1.bf16.msra.mxu0 %v2005
        %2012 = vmatprep.subr.bf16.mxu0 0
        %2013 = vmatpush1.bf16.msra.mxu0 0
        %2014 = vmatprep.subr.bf16.mxu0 0
        %2015 = vmatpush1.bf16.msra.mxu0 0
        %2016 = vmatprep.subr.bf16.mxu0 0
        %2017 = vmatpush1.bf16.msra.mxu0 0
        %2018 = vmatprep.subr.bf16.mxu0 0
        %2019 = vmatpush1.bf16.msra.mxu0 0
        %2020 = vmatprep.subr.bf16.mxu0 0
        %2021 = vmatpush1.bf16.msra.mxu0 0
        %2022 = vmatprep.subr.bf16.mxu0 0
        %2023 = vmatpush1.bf16.msra.mxu0 0
        %2024 = vmatprep.subr.bf16.mxu0 0
        %2025 = vmatpush1.bf16.msra.mxu0 0
        %2026 = vmatprep.subr.bf16.mxu0 0
        %2027 = vmatpush1.bf16.msra.mxu0 0
        %2028 = vmatprep.subr.bf16.mxu0 0
        %2029 = vmatpush1.bf16.msra.mxu0 0
        %2030 = vmatprep.subr.bf16.mxu0 0
        %2031 = vmatpush1.bf16.msra.mxu0 0
        %2032 = vmatprep.subr.bf16.mxu0 0
        %2033 = vmatpush1.bf16.msra.mxu0 0
        %2034 = vmatprep.subr.bf16.mxu0 0
        %2035 = vmatpush1.bf16.msra.mxu0 0
        %2036 = vmatprep.subr.bf16.mxu0 0
        %2037 = vmatpush1.bf16.msra.mxu0 0
        %2038 = vmatprep.subr.bf16.mxu0 0
        %2039 = vmatpush1.bf16.msra.mxu0 0
        %2040 = vmatprep.subr.bf16.mxu0 0
        %2041 = vmatpush1.bf16.msra.mxu0 0
        %2042 = vmatprep.mubr.bf16.mxu0 0
        %2043 = vmatmul.mubr.bf16.gmra.mrb[0].mxu0 %v2008
        %v2044 = vpop.f32.mrb[0].mxu0
        %v2045 = vadd.f32 0.0, %v2044
        %v2046 = vpop.f32.mrb[0].mxu0
        %v2047 = vpop.f32.mrb[0].mxu0
        %v2048 = vpop.f32.mrb[0].mxu0
        %2049 = vdwg.mxu0
        %2051 = vrot.lane.b32.xlu0 %v1953, 8
        %v2052 = vpop.permute.xlu0 %2051
        %2055 = vrot.lane.b32.xlu0 %v1999, 16
        %v2056 = vpop.permute.xlu0 %2055
        %2059 = vrot.lane.b32.xlu0 %v2045, 24
        %v2060 = vpop.permute.xlu0 %2059
        %v2062 = vsel %vm940, %v1907, %v2052
        %v2063 = vsel %vm1385, %v2062, %v2056
        %v2064 = vsel %vm1387, %v2063, %v2060
        %v2065 = vpack.c.bf16 %v2064, %v2064
        %v2066 = vld [vmem:[#allocation16] sm:$0xf]
        %v2067 = vld [vmem:[#allocation16 + $0x4] sm:$0xf]
        %v2068 = vld [vmem:[#allocation16 + $0x8] sm:$0xf]
        %v2069 = vld [vmem:[#allocation16 + $0xc] sm:$0xf]
        %v2070 = vld [vmem:[#allocation17] sm:$0x1]
        %v2072 = vlaneseq
        %v2073 = vshrl.u32 %v2072, 7
        %v2074 = vsub.s32 0, %v2073
        %v2075 = vrot.slane %v2070, %v2074
        %v2081 = vunpack.c.l.b16 %v2066
        %v2082 = vunpack.c.l.b16 %v2067
        %v2083 = vunpack.c.l.b16 %v2068
        %v2084 = vunpack.c.l.b16 %v2069
        %v2085 = vpack.c.b16 %v2082, %v2081
        %v2086 = vpack.c.b16 %v2084, %v2083
        %v2090 = vsel %vm838, %v2065, 0
        %2092 = vmatprep.subr.bf16.mxu0 0
        %2093 = vmatpush1.bf16.msra.mxu0 %v2085
        %2094 = vmatprep.subr.bf16.mxu0 0
        %2095 = vmatpush1.bf16.msra.mxu0 %v2086
        %2096 = vmatprep.subr.bf16.mxu0 0
        %2097 = vmatpush1.bf16.msra.mxu0 0
        %2098 = vmatprep.subr.bf16.mxu0 0
        %2099 = vmatpush1.bf16.msra.mxu0 0
        %2100 = vmatprep.subr.bf16.mxu0 0
        %2101 = vmatpush1.bf16.msra.mxu0 0
        %2102 = vmatprep.subr.bf16.mxu0 0
        %2103 = vmatpush1.bf16.msra.mxu0 0
        %2104 = vmatprep.subr.bf16.mxu0 0
        %2105 = vmatpush1.bf16.msra.mxu0 0
        %2106 = vmatprep.subr.bf16.mxu0 0
        %2107 = vmatpush1.bf16.msra.mxu0 0
        %2108 = vmatprep.subr.bf16.mxu0 0
        %2109 = vmatpush1.bf16.msra.mxu0 0
        %2110 = vmatprep.subr.bf16.mxu0 0
        %2111 = vmatpush1.bf16.msra.mxu0 0
        %2112 = vmatprep.subr.bf16.mxu0 0
        %2113 = vmatpush1.bf16.msra.mxu0 0
        %2114 = vmatprep.subr.bf16.mxu0 0
        %2115 = vmatpush1.bf16.msra.mxu0 0
        %2116 = vmatprep.subr.bf16.mxu0 0
        %2117 = vmatpush1.bf16.msra.mxu0 0
        %2118 = vmatprep.subr.bf16.mxu0 0
        %2119 = vmatpush1.bf16.msra.mxu0 0
        %2120 = vmatprep.subr.bf16.mxu0 0
        %2121 = vmatpush1.bf16.msra.mxu0 0
        %2122 = vmatprep.subr.bf16.mxu0 0
        %2123 = vmatpush1.bf16.msra.mxu0 0
        %2124 = vmatprep.mubr.bf16.mxu0 0
        %2125 = vmatmul.mubr.bf16.gmra.mrb[0].mxu0 %v2090
        %v2126 = vpop.f32.mrb[0].mxu0
        %v2127 = vadd.f32 %v2075, %v2126
        %v2128 = vpop.f32.mrb[0].mxu0
        %v2129 = vpop.f32.mrb[0].mxu0
        %v2130 = vpop.f32.mrb[0].mxu0
        %2131 = vdwg.mxu0
        %v2132 = vadd.f32 %v2127, %v1456
        %s2133 = scalar_lea.vmem [#allocation19], 4
        %v2134 = vld [vmem:[%s2133] sm:$0x1]
        %v2135 = vld [vmem:[%s2133 + $0x1] sm:$0x1]
        %v2136 = vsel %vm838, %v2132, 0.0
        %2137 = vadd.xlane.f32.xlu0 %v2136
        %v2138 = vpop.xlane.xlu0 %2137
        %v2139 = vmul.f32 %v2138, %v842
        %v2140 = vsub.f32 %v2132, %v2139
        %v2141 = vmul.f32 %v2140, %v2140
        %v2142 = vsel %vm838, %v2141, 0.0
        %2143 = vadd.xlane.f32.xlu0 %v2142
        %v2144 = vpop.xlane.xlu0 %2143
        %v2145 = vmul.f32 %v2144, %v842
        %v2146 = vadd.f32 %v2145, 1e-05
        %v2147 = vrsqrt.pop %v2146
        %v2148 = vmul.f32 %v2140, %v2147
        %v2149 = vlaneseq
        %v2150 = vshrl.u32 %v2149, 7
        %v2151 = vsub.s32 0, %v2150
        %v2152 = vrot.slane %v2134, %v2151
        %v2153 = vmul.f32 %v2148, %v2152
        %v2154 = vlaneseq
        %v2155 = vshrl.u32 %v2154, 7
        %v2156 = vsub.s32 0, %v2155
        %v2157 = vrot.slane %v2135, %v2156
        %v2158 = vadd.f32 %v2153, %v2157
        %v2159 = vpack.c.bf16 %v2158, %v2158
        %v2160 = vld [vmem:[%s15] sm:$0xf]
        %v2161 = vld [vmem:[%s15 + $0x4] sm:$0xf]
        %v2162 = vld [vmem:[%s15 + $0x8] sm:$0xf]
        %v2163 = vld [vmem:[%s15 + $0xc] sm:$0xf]
        %v2164 = vld [vmem:[%s16] sm:$0x1]
        %v2166 = vlaneseq
        %v2167 = vshrl.u32 %v2166, 7
        %v2168 = vsub.s32 0, %v2167
        %v2169 = vrot.slane %v2164, %v2168
        %v2175 = vunpack.c.l.b16 %v2160
        %v2176 = vunpack.c.l.b16 %v2161
        %v2177 = vunpack.c.l.b16 %v2162
        %v2178 = vunpack.c.l.b16 %v2163
        %v2179 = vpack.c.b16 %v2176, %v2175
        %v2180 = vpack.c.b16 %v2178, %v2177
        %v2184 = vsel %vm838, %v2159, 0
        %2186 = vmatprep.subr.bf16.mxu0 0
        %2187 = vmatpush1.bf16.msra.mxu0 %v2179
        %2188 = vmatprep.subr.bf16.mxu0 0
        %2189 = vmatpush1.bf16.msra.mxu0 %v2180
        %2190 = vmatprep.subr.bf16.mxu0 0
        %2191 = vmatpush1.bf16.msra.mxu0 0
        %2192 = vmatprep.subr.bf16.mxu0 0
        %2193 = vmatpush1.bf16.msra.mxu0 0
        %2194 = vmatprep.subr.bf16.mxu0 0
        %2195 = vmatpush1.bf16.msra.mxu0 0
        %2196 = vmatprep.subr.bf16.mxu0 0
        %2197 = vmatpush1.bf16.msra.mxu0 0
        %2198 = vmatprep.subr.bf16.mxu0 0
        %2199 = vmatpush1.bf16.msra.mxu0 0
        %2200 = vmatprep.subr.bf16.mxu0 0
        %2201 = vmatpush1.bf16.msra.mxu0 0
        %2202 = vmatprep.subr.bf16.mxu0 0
        %2203 = vmatpush1.bf16.msra.mxu0 0
        %2204 = vmatprep.subr.bf16.mxu0 0
        %2205 = vmatpush1.bf16.msra.mxu0 0
        %2206 = vmatprep.subr.bf16.mxu0 0
        %2207 = vmatpush1.bf16.msra.mxu0 0
        %2208 = vmatprep.subr.bf16.mxu0 0
        %2209 = vmatpush1.bf16.msra.mxu0 0
        %2210 = vmatprep.subr.bf16.mxu0 0
        %2211 = vmatpush1.bf16.msra.mxu0 0
        %2212 = vmatprep.subr.bf16.mxu0 0
        %2213 = vmatpush1.bf16.msra.mxu0 0
        %2214 = vmatprep.subr.bf16.mxu0 0
        %2215 = vmatpush1.bf16.msra.mxu0 0
        %2216 = vmatprep.subr.bf16.mxu0 0
        %2217 = vmatpush1.bf16.msra.mxu0 0
        %2218 = vmatprep.mubr.bf16.mxu0 0
        %2219 = vmatmul.mubr.bf16.gmra.mrb[0].mxu0 %v2184
        %v2220 = vpop.f32.mrb[0].mxu0
        %v2221 = vadd.f32 %v2169, %v2220
        %v2222 = vpop.f32.mrb[0].mxu0
        %v2223 = vpop.f32.mrb[0].mxu0
        %v2224 = vpop.f32.mrb[0].mxu0
        %2225 = vdwg.mxu0
        %v2226 = vmax.f32 %v2221, 0.0
        %v2227 = vpack.c.bf16 %v2226, %v2226
        %v2228 = vld [vmem:[%s17] sm:$0xf]
        %v2229 = vld [vmem:[%s17 + $0x4] sm:$0xf]
        %v2230 = vld [vmem:[%s17 + $0x8] sm:$0xf]
        %v2231 = vld [vmem:[%s17 + $0xc] sm:$0xf]
        %v2232 = vld [vmem:[%s17 + $0x10] sm:$0xf]
        %v2233 = vld [vmem:[%s17 + $0x14] sm:$0xf]
        %v2234 = vld [vmem:[%s17 + $0x18] sm:$0xf]
        %v2235 = vld [vmem:[%s17 + $0x1c] sm:$0xf]
        %v2236 = vld [vmem:[%s18] sm:$0x1]
        %v2238 = vlaneseq
        %v2239 = vshrl.u32 %v2238, 7
        %v2240 = vsub.s32 0, %v2239
        %v2241 = vrot.slane %v2236, %v2240
        %v2251 = vunpack.c.l.b16 %v2228
        %v2252 = vunpack.c.l.b16 %v2229
        %v2253 = vunpack.c.l.b16 %v2230
        %v2254 = vunpack.c.l.b16 %v2231
        %v2255 = vunpack.c.l.b16 %v2232
        %v2256 = vunpack.c.l.b16 %v2233
        %v2257 = vunpack.c.l.b16 %v2234
        %v2258 = vunpack.c.l.b16 %v2235
        %v2259 = vpack.c.b16 %v2252, %v2251
        %v2260 = vpack.c.b16 %v2254, %v2253
        %v2261 = vpack.c.b16 %v2256, %v2255
        %v2262 = vpack.c.b16 %v2258, %v2257
        %vm2267 = vcmask 523264
        %v2269 = vsel %vm2267, %v2227, 0
        %2271 = vmatprep.subr.bf16.mxu0 0
        %2272 = vmatpush1.bf16.msra.mxu0 %v2259
        %2273 = vmatprep.subr.bf16.mxu0 0
        %2274 = vmatpush1.bf16.msra.mxu0 %v2260
        %2275 = vmatprep.subr.bf16.mxu0 0
        %2276 = vmatpush1.bf16.msra.mxu0 %v2261
        %2277 = vmatprep.subr.bf16.mxu0 0
        %2278 = vmatpush1.bf16.msra.mxu0 %v2262
        %2279 = vmatprep.subr.bf16.mxu0 0
        %2280 = vmatpush1.bf16.msra.mxu0 0
        %2281 = vmatprep.subr.bf16.mxu0 0
        %2282 = vmatpush1.bf16.msra.mxu0 0
        %2283 = vmatprep.subr.bf16.mxu0 0
        %2284 = vmatpush1.bf16.msra.mxu0 0
        %2285 = vmatprep.subr.bf16.mxu0 0
        %2286 = vmatpush1.bf16.msra.mxu0 0
        %2287 = vmatprep.subr.bf16.mxu0 0
        %2288 = vmatpush1.bf16.msra.mxu0 0
        %2289 = vmatprep.subr.bf16.mxu0 0
        %2290 = vmatpush1.bf16.msra.mxu0 0
        %2291 = vmatprep.subr.bf16.mxu0 0
        %2292 = vmatpush1.bf16.msra.mxu0 0
        %2293 = vmatprep.subr.bf16.mxu0 0
        %2294 = vmatpush1.bf16.msra.mxu0 0
        %2295 = vmatprep.subr.bf16.mxu0 0
        %2296 = vmatpush1.bf16.msra.mxu0 0
        %2297 = vmatprep.subr.bf16.mxu0 0
        %2298 = vmatpush1.bf16.msra.mxu0 0
        %2299 = vmatprep.subr.bf16.mxu0 0
        %2300 = vmatpush1.bf16.msra.mxu0 0
        %2301 = vmatprep.subr.bf16.mxu0 0
        %2302 = vmatpush1.bf16.msra.mxu0 0
        %2303 = vmatprep.mubr.bf16.mxu0 0
        %2304 = vmatmul.mubr.bf16.gmra.mrb[0].mxu0 %v2269
        %v2305 = vpop.f32.mrb[0].mxu0
        %v2306 = vadd.f32 %v2241, %v2305
        %v2307 = vpop.f32.mrb[0].mxu0
        %v2308 = vpop.f32.mrb[0].mxu0
        %v2309 = vpop.f32.mrb[0].mxu0
        %2310 = vdwg.mxu0
        %v2311 = vadd.f32 %v2306, %v2132
        %2312 = vst.msk [vmem:[%s798] sm:$0xff] %vm838, %v2311
        %s2313 = sand.u32 %s470, 1
        %s2314 = scalar_lea.sflag [#allocation4], %s2313
        %s2315 = sand.u32 %s470, 1
        %s2316 = smul.addr %s2315, 8
        %s2317 = scalar_lea.vmem [#allocation20], %s2316
        // Predicated region
        $region141: #{tpu_custom_call.1} parent=95 // pred_check
          %p2318 = pneg %p480
        $region142: #{tpu_custom_call.1} parent=95 // pred_check_branch
          %2320 = sbr.rel (%p2318) target = $region144
        $region143: #{tpu_custom_call.1} parent=95 // pred_region
          %s2322 = ssub.s32 128, 128
          %2323 = vsyncadd %s2314, %s2322
          %s2324 = smul.addr %s43, 128
          %s2325 = scalar_lea.hbm %s19, %s2324
          %s2327 = sshll.u32 %s2317, 4
          %s2328 = int_to_ptr.vmem [resolvable:$true] %s2327
          %2330 = dma.vmem_to_hbm [thread:$0]  %s2328, 128, %s2325, %s2314
        $region144: #{tpu_custom_call.1} parent=95 // pred_fallthru
          _
      $region96: #{tpu_custom_call.1} parent=5 // pred_fallthru
        _
      %p2331 = scmp.le.s32.totalorder 2, %s38
      // Predicated region
      $region145: #{tpu_custom_call.1} parent=5 // pred_check
        %p2332 = pneg %p2331
      $region146: #{tpu_custom_call.1} parent=5 // pred_check_branch
        %2334 = sbr.rel (%p2332) target = $region148
      $region147: #{tpu_custom_call.1} parent=5 // pred_region
        %s2335 = ssub.s32 %s38, 2
        // Predicated region
        $region149: #{tpu_custom_call.1} parent=147 // pred_check
          %p2336 = pneg %p486
        $region150: #{tpu_custom_call.1} parent=147 // pred_check_branch
          %2338 = sbr.rel (%p2336) target = $region152
        $region151: #{tpu_custom_call.1} parent=147 // pred_region
          %s2339 = sand.u32 %s471, 1
          %s2340 = scalar_lea.sflag [#allocation4], %s2339
          %s2341 = sand.u32 %s471, 1
          %s2342 = smul.addr %s2341, 8
          %s2343 = scalar_lea.vmem [#allocation20], %s2342
          %2344 = dma.done %s2340, 128
        $region152: #{tpu_custom_call.1} parent=147 // pred_fallthru
          _
      $region148: #{tpu_custom_call.1} parent=5 // pred_fallthru
        _
    $region6: #{tpu_custom_call.1} parent=1 // loop_footer
      %s42 = sadd.s32 1, %s38
    $region7: #{tpu_custom_call.1} parent=1 // loop_footer_branch
      %37 = sbr.rel target = $region3
    $region8: #{tpu_custom_call.1} parent=1 // loop_exit
      _
    %2345 = vsyncpa [#allocation3], 1
    %s2346 = scalar_lea.sflag [#allocation3], 1
    %2347 = vsyncpa %s2346, 1
    %2348 = vsyncpa [#allocation6], 1
    %s2349 = scalar_lea.sflag [#allocation6], 1
    %2350 = vsyncpa %s2349, 1
    %2351 = vsyncpa [#allocation9], 1
    %2352 = vsyncpa [#allocation12], 1
    %2353 = vsyncpa [#allocation15], 1
    %2354 = vsyncpa [#allocation18], 1
    %2355 = vsyncpa [#allocation4], 1
    %s2356 = scalar_lea.sflag [#allocation4], 1
    %2357 = vsyncpa %s2356, 1

</llo_original>
